<compile_context>
chip_gen: v5e
topology: v5e:2x2
jax: 0.10.0
libtpu: 0.0.40
codegen_flags: <defaults>
</compile_context>

<pallas_src>
import functools

import jax
import jax.numpy as jnp
from jax.experimental import pallas as pl
from jax.experimental.pallas import tpu as pltpu

LANES = 128
MIN_PALLAS_ELEMS = 1 << 16   # below this, XLA's fused sin is as fast or faster
MIN_GRID_STEPS = 4           # 2 TensorCores (v7x) x >=2 steps each for pipelining


def _sine_kernel(x_ref, o_ref, *, w0: float):
    # Elementwise VPU path.  Compute in f32 (no-op for f32 inputs; for bf16 it
    # avoids the large-w0 argument error), then store back in the I/O dtype.
    x = x_ref[...].astype(jnp.float32)
    o_ref[...] = jnp.sin(x * w0).astype(o_ref.dtype)


def _sublane_pack(dtype) -> int:
    # Native sublane packing: f32 -> 8, bf16/f16 -> 16, int8/fp8 -> 32.
    itemsize = jnp.dtype(dtype).itemsize
    return max(8, 32 // max(itemsize, 1))


@functools.lru_cache(maxsize=None)
def _block_config():
    """(max_block_bytes, vmem_limit_bytes) tuned per TPU generation.

    v6e/v7x: 8 MiB blocks (2 arrays x 2 buffers = 32 MiB scoped VMEM, inside
    128 / 64 MiB physical) shrink the ~0.35us/step grid tax to a few percent.
    v5e / older / unknown: 2 MiB blocks under the 16 MiB default scoped VMEM.
    """
    txt = ""
    try:
        txt += " " + str(jax.devices()[0].device_kind).lower()
    except Exception:
        pass
    try:
        info = pltpu.get_tpu_info()
        for attr in ("chip_version", "chip_name", "name", "version"):
            v = getattr(info, attr, None)
            if v is not None:
                txt += " " + str(v).lower()
    except Exception:
        pass
    is_old = any(t in txt for t in ("v2", "v3", "v4", "v5"))
    is_new = (not is_old) and any(
        t in txt for t in ("v6", "v7", "tpu7", "trillium", "ironwood"))
    if is_new:
        return 8 << 20, 40 << 20     # 8 MiB block, 40 MiB scoped VMEM
    return 2 << 20, None             # 2 MiB block, default scoped VMEM


def sine(x: jax.Array, w0: float = 1.0) -> jax.Array:
    """Apply y = sin(w0 * x) elementwise (matches torch.sin(w0 * x))."""
    orig_shape = x.shape
    dtype = x.dtype
    n = x.size
    if n == 0:
        return x

    # Small-size fallback: the pallas launch cost (plus possible pad/slice
    # passes) dominates tiny tensors; XLA's fused elementwise sin wins.
    if n < MIN_PALLAS_ELEMS:
        return jnp.sin(x.astype(jnp.float32) * w0).astype(dtype)

    pack = _sublane_pack(dtype)
    itemsize = jnp.dtype(dtype).itemsize

    # Pad only if the element count isn't lane-aligned; a ragged *row* count is
    # handled for free by the cdiv grid's masked last block.
    needs_pad = (n % LANES) != 0
    flat = jnp.ravel(x)
    if needs_pad:
        n_pad = pl.cdiv(n, LANES) * LANES
        flat = jnp.pad(flat, (0, n_pad - n))
    else:
        n_pad = n

    rows = n_pad // LANES
    x2d = flat.reshape(rows, LANES)

    # Balanced, pack-aligned blocks; even step count so v7x's two TensorCores
    # get equal work and each runs >= 2 steps (keeps the DMA pipeline full).
    max_block_bytes, vmem_limit = _block_config()
    max_tile_rows = max(pack, (max_block_bytes // (LANES * itemsize)) // pack * pack)
    steps = max(MIN_GRID_STEPS, 2 * pl.cdiv(pl.cdiv(rows, max_tile_rows), 2))
    tile_rows = pl.cdiv(pl.cdiv(rows, steps), pack) * pack
    grid = (pl.cdiv(rows, tile_rows),)

    cp_kwargs = dict(dimension_semantics=("parallel",))
    if vmem_limit is not None:
        cp_kwargs["vmem_limit_bytes"] = vmem_limit

    out2d = pl.pallas_call(
        functools.partial(_sine_kernel, w0=float(w0)),
        out_shape=jax.ShapeDtypeStruct((rows, LANES), dtype),
        grid=grid,
        in_specs=[pl.BlockSpec((tile_rows, LANES), lambda i: (i, 0))],
        out_specs=pl.BlockSpec((tile_rows, LANES), lambda i: (i, 0)),
        compiler_params=pltpu.CompilerParams(**cp_kwargs),
        cost_estimate=pl.CostEstimate(
            flops=n_pad, transcendentals=n_pad,
            bytes_accessed=2 * n_pad * itemsize),
    )(x2d)

    if needs_pad:
        return out2d.reshape(-1)[:n].reshape(orig_shape)
    return out2d.reshape(orig_shape)


class Sine:
    """JAX/Pallas equivalent of the PyTorch Sine module: act(x; w0) = sin(w0 * x)."""

    def __init__(self, w0: float = 1.0):
        self.w0 = float(w0)

    def __call__(self, x) -> jax.Array:
        self._check_input(x)
        return sine(x, self.w0)

    @staticmethod
    def _check_input(x):
        if not isinstance(x, (jax.Array, jnp.ndarray)):
            raise TypeError("input to forward() must be a jax.Array")


if __name__ == "__main__":
    w0 = 30.0  # common SIREN scaling; semantics identical for any w0
    model = Sine(w0=w0)

    # 1) Small PINN-style input (2,4,16,16): takes the small-size fallback path.
    x_small = jax.random.normal(jax.random.PRNGKey(0), (2, 4, 16, 16), dtype=jnp.float32)
    y_small = jax.block_until_ready(model(x_small))
    assert y_small.shape == x_small.shape and y_small.dtype == x_small.dtype
    assert jnp.allclose(y_small, jnp.sin(w0 * x_small), atol=1e-5, rtol=1e-5)

    # 2) Larger input exercising the Pallas kernel (lane-aligned, no-pad path).
    x_big = jax.random.normal(jax.random.PRNGKey(1), (2, 4, 128, 128), dtype=jnp.float32)
    y_big = jax.block_until_ready(model(x_big))
    assert y_big.shape == x_big.shape and y_big.dtype == x_big.dtype
    assert jnp.allclose(y_big, jnp.sin(w0 * x_big), atol=1e-4, rtol=1e-4)

    # 3) Lane-aligned but not tile-aligned row count (masked ragged last block).
    x_rag = jax.random.normal(jax.random.PRNGKey(2), (1001, 128), dtype=jnp.float32)
    y_rag = jax.block_until_ready(model(x_rag))
    assert jnp.allclose(y_rag, jnp.sin(w0 * x_rag), atol=1e-4, rtol=1e-4)

    # 4) Padded path: large and not a multiple of 128.
    x_pad = jax.random.normal(jax.random.PRNGKey(3), (70001,), dtype=jnp.float32)
    y_pad = jax.block_until_ready(model(x_pad))
    assert y_pad.shape == x_pad.shape
    assert jnp.allclose(y_pad, jnp.sin(w0 * x_pad), atol=1e-4, rtol=1e-4)

    # 5) bf16 path: f32 compute inside the kernel, bf16 in/out.
    xb = jax.random.normal(jax.random.PRNGKey(4), (2, 4, 128, 128)).astype(jnp.bfloat16)
    yb = jax.block_until_ready(model(xb))
    assert yb.dtype == jnp.bfloat16 and yb.shape == xb.shape
    ref_b = jnp.sin(w0 * xb.astype(jnp.float32))
    assert jnp.allclose(yb.astype(jnp.float32), ref_b, atol=2e-2, rtol=2e-2)

    # 6) Docstring example: sin(1 * [3.14, 1.57]) ~ [0, 1].
    w = jnp.array([3.14, 1.57], dtype=jnp.float32)
    ex = jax.block_until_ready(Sine(w0=1.0)(w))
    assert ex.shape == w.shape and ex.dtype == w.dtype
    assert jnp.allclose(ex, jnp.array([0.0, 1.0]), atol=1e-2)

    print("KERNEL_OK")
</pallas_src>

<mosaic_0001>
module attributes {stable_mosaic.version = 11 : i64} {
  func.func @_sine_kernel(%arg0: i32, %arg1: memref<256x128xf32, #tpu.memory_space<vmem>>, %arg2: memref<256x128xf32, #tpu.memory_space<vmem>>) attributes {dimension_semantics = [#tpu.dimension_semantics<parallel>], iteration_bounds = array<i64: 4>, scalar_prefetch = 0 : i64, scratch_operands = 0 : i64, tpu.core_type = #tpu.core_type<tc>, window_params = [{transform_indices = @transform_0, window_bounds = array<i64: 256, 128>}, {transform_indices = @transform_1, window_bounds = array<i64: 256, 128>}]} {
    %c0 = arith.constant 0 : index
    %c0_0 = arith.constant 0 : index
    %0 = vector.load %arg1[%c0, %c0_0] : memref<256x128xf32, #tpu.memory_space<vmem>>, vector<256x128xf32>
    %cst = arith.constant 3.000000e+01 : f32
    %1 = vector.broadcast %cst : f32 to vector<256x128xf32>
    %2 = arith.mulf %0, %1 : vector<256x128xf32>
    %3 = math.sin %2 : vector<256x128xf32>
    %c0_1 = arith.constant 0 : index
    %c0_2 = arith.constant 0 : index
    %4 = vector.load %arg2[%c0_1, %c0_2] : memref<256x128xf32, #tpu.memory_space<vmem>>, vector<256x128xf32>
    tpu.vector_store %arg2[%c0_1, %c0_2], %3 {strides = array<i32>} : memref<256x128xf32, #tpu.memory_space<vmem>>, vector<256x128xf32>,
    return
  }
  func.func @transform_0(%arg0: i32) -> (i32, i32) {
    %c0_i32 = arith.constant 0 : i32
    %c0_i32_0 = arith.constant 0 : i32
    return %arg0, %c0_i32 : i32, i32
  }
  func.func @transform_1(%arg0: i32) -> (i32, i32) {
    %c0_i32 = arith.constant 0 : i32
    %c0_i32_0 = arith.constant 0 : i32
    return %arg0, %c0_i32 : i32, i32
  }
}

</mosaic_0001>

<llo_original>
// kernel: tpu_custom_call.1
$region0: #{tpu_custom_call.1}
  #allocation0 [shape = 'u32[]', space=smem, size = 0x4, offset = 0x4, fixed_abs, tag = 'smem constant byte address 0x4 - core index']
  #allocation1 [shape = 'u32[72,128]{1,0:T(1,128)}', space=vmem, size = 0x9000, scoped, tag = 'internal scratch']
  %s0 = inlined_call_operand.hbm [shape: f32[1024,128], index: 0, kind: input, shape index: {}]
  %s1 = inlined_call_operand.hbm [shape: f32[1024,128], index: 1, kind: output, shape index: {}]
  %s2 = sld [smem:[#allocation0]]
  $region41: #{tpu_custom_call.1} parent=0
    _
  %s4 = ssub.s32 1, %s2
  %s5 = scalar_select 0, %s4, %s2
  $region1: #{tpu_custom_call.1} parent=0
    #allocation2 [shape = 'u8[262144]{0}', space=vmem, size = 0x40000, scoped, tag = 'input window, operand 0']
    #allocation3 [shape = 's32[2]{0}', space=sflag, size = 0x8, scoped, tag = 'scoped memory for tpu_custom_call.1']
    #allocation4 [shape = 's32[2]{0}', space=sflag, size = 0x8, scoped, tag = 'scoped memory for tpu_custom_call.1']
    #allocation5 [shape = 'u8[262144]{0}', space=vmem, size = 0x40000, scoped, tag = 'output window, operand 0']
    %6 = vsyncpa [#allocation3], 0
    %s7 = scalar_lea.sflag [#allocation3], 1
    %8 = vsyncpa %s7, 0
    %9 = vsyncpa [#allocation4], 0
    %s10 = scalar_lea.sflag [#allocation4], 1
    %11 = vsyncpa %s10, 0
    loop: start=0, step=1, limit=6
    $region2: #{tpu_custom_call.1} parent=1 // loop_pre_header
      _
    $region3: #{tpu_custom_call.1} parent=1 // loop_header
      %s13 = sphi 0, %s17
      %p14 = scmp.ge.s32.totalorder %s13, 6
      %s23 = sphi 0, %s25
      %s26 = sphi 0, %s23
      %s27 = sphi 0, %s26
      %s43 = sphi 0, %s27
      %s49 = sphi 0, %s51
      %s52 = sphi 0, %s49
      %s53 = sphi 0, %s52
      %s69 = sphi 0, %s53
    $region4: #{tpu_custom_call.1} parent=1 // loop_header_branch
      %16 = sbr.rel (%p14) target = $region8
    $region5: #{tpu_custom_call.1} parent=1 // loop_body
      %s18 = ssub.s32 %s13, 1
      %s19 = ssub.s32 %s13, 2
      %s20 = sadd.s32 %s13, 1
      %s21 = ssub.s32 %s13, %s20
      %p22 = scmp.eq.s32.totalorder %s21, 0
      %s24 = sadd.s32 %s23, 1
      %s25 = scalar_select %p22, %s23, %s24
      %p28 = pneg %p22
      %p29 = scmp.eq.s32.totalorder %s13, 3
      %p30 = por %p28, %p29
      %p31 = scmp.ne.s32.totalorder %s23, %s26
      %p32 = scmp.eq.s32.totalorder %s13, 0
      %p33 = por %p31, %p32
      %p34 = scmp.ne.s32.totalorder %s23, %s26
      %p35 = scmp.eq.s32.totalorder %s18, 3
      %p36 = por %p34, %p35
      %p37 = scmp.ne.s32.totalorder %s26, %s27
      %p38 = scmp.eq.s32.totalorder %s18, 0
      %p39 = por %p37, %p38
      %p40 = scmp.ne.s32.totalorder %s26, %s27
      %p41 = scmp.eq.s32.totalorder %s19, 3
      %p42 = por %p40, %p41
      %p44 = scmp.ne.s32.totalorder %s27, %s43
      %p45 = scmp.eq.s32.totalorder %s19, 0
      %p46 = por %p44, %p45
      %s47 = ssub.s32 %s13, %s20
      %p48 = scmp.eq.s32.totalorder %s47, 0
      %s50 = sadd.s32 %s49, 1
      %s51 = scalar_select %p48, %s49, %s50
      %p54 = pneg %p48
      %p55 = scmp.eq.s32.totalorder %s13, 3
      %p56 = por %p54, %p55
      %p57 = scmp.ne.s32.totalorder %s49, %s52
      %p58 = scmp.eq.s32.totalorder %s13, 0
      %p59 = por %p57, %p58
      %p60 = scmp.ne.s32.totalorder %s49, %s52
      %p61 = scmp.eq.s32.totalorder %s18, 3
      %p62 = por %p60, %p61
      %p63 = scmp.ne.s32.totalorder %s52, %s53
      %p64 = scmp.eq.s32.totalorder %s18, 0
      %p65 = por %p63, %p64
      %p66 = scmp.ne.s32.totalorder %s52, %s53
      %p67 = scmp.eq.s32.totalorder %s19, 3
      %p68 = por %p66, %p67
      %p70 = scmp.ne.s32.totalorder %s53, %s69
      %p71 = scmp.eq.s32.totalorder %s19, 0
      %p72 = por %p70, %p71
      %p73 = scmp.le.s32.totalorder 1, %s13
      %p74 = scmp.lt.s32.totalorder %s13, 5
      %p75 = pnand %p73, %p74
      %p76 = pneg %p75
      // Predicated region
      $region9: #{tpu_custom_call.1} parent=5 // pred_check
        _
      $region10: #{tpu_custom_call.1} parent=5 // pred_check_branch
        %78 = sbr.rel (%p75) target = $region12
      $region11: #{tpu_custom_call.1} parent=5 // pred_region
        %s79 = ssub.s32 %s13, 1
      $region12: #{tpu_custom_call.1} parent=5 // pred_fallthru
        _
      %p80 = scmp.lt.s32.totalorder %s13, 4
      // Predicated region
      $region13: #{tpu_custom_call.1} parent=5 // pred_check
        %p81 = pneg %p80
      $region14: #{tpu_custom_call.1} parent=5 // pred_check_branch
        %83 = sbr.rel (%p81) target = $region16
      $region15: #{tpu_custom_call.1} parent=5 // pred_region
        // Predicated region
        $region17: #{tpu_custom_call.1} parent=15 // pred_check
          %p84 = pneg %p33
        $region18: #{tpu_custom_call.1} parent=15 // pred_check_branch
          %86 = sbr.rel (%p84) target = $region20
        $region19: #{tpu_custom_call.1} parent=15 // pred_region
          %s87 = sand.u32 %s23, 1
          %s88 = scalar_lea.sflag [#allocation3], %s87
          %s89 = sand.u32 %s23, 1
          %s90 = smul.addr %s89, 256
          %s91 = scalar_lea.vmem [#allocation2], %s90
          %s92 = smul.u32 32, %s13
          %94 = vsyncadd %s88, 0
          %s95 = smul.addr %s92, 8
          %s96 = scalar_lea.hbm %s0, %s95
          %s97 = sshll.u32 %s96, 4
          %s98 = int_to_ptr.hbm [resolvable:$true] %s97
          %s99 = sshll.u32 %s91, 4
          %s100 = int_to_ptr.vmem [resolvable:$true] %s99
          %105 = dma.hbm_to_vmem [thread:$0]  %s98, 4096, %s100, %s88, 128, 128, 8
        $region20: #{tpu_custom_call.1} parent=15 // pred_fallthru
          _
      $region16: #{tpu_custom_call.1} parent=5 // pred_fallthru
        _
      %p106 = scmp.le.s32.totalorder 1, %s13
      %p107 = scmp.lt.s32.totalorder %s13, 5
      %p108 = pnand %p106, %p107
      %p109 = pneg %p108
      // Predicated region
      $region21: #{tpu_custom_call.1} parent=5 // pred_check
        _
      $region22: #{tpu_custom_call.1} parent=5 // pred_check_branch
        %111 = sbr.rel (%p108) target = $region24
      $region23: #{tpu_custom_call.1} parent=5 // pred_region
        %s112 = ssub.s32 %s13, 1
        %s113 = sand.u32 %s26, 1
        %s114 = scalar_lea.sflag [#allocation3], %s113
        %s115 = sand.u32 %s26, 1
        %s116 = smul.addr %s115, 256
        %s117 = scalar_lea.vmem [#allocation2], %s116
        // Predicated region
        $region25: #{tpu_custom_call.1} parent=23 // pred_check
          %p118 = pneg %p39
        $region26: #{tpu_custom_call.1} parent=23 // pred_check_branch
          %120 = sbr.rel (%p118) target = $region28
        $region27: #{tpu_custom_call.1} parent=23 // pred_region
          %122 = dma.done %s114, 4096
        $region28: #{tpu_custom_call.1} parent=23 // pred_fallthru
          _
        %s123 = sand.u32 %s26, 1
        %s124 = scalar_lea.sflag [#allocation3], %s123
        %s125 = sand.u32 %s26, 1
        %s126 = smul.addr %s125, 256
        %s127 = scalar_lea.vmem [#allocation2], %s126
        %p128 = pneg %p39
        %p129 = pneg %p36
        %p130 = pneg %p65
        %p131 = pneg %p62
        %s132 = sand.u32 %s52, 1
        %s133 = scalar_lea.sflag [#allocation4], %s132
        %s134 = sand.u32 %s52, 1
        %s135 = smul.addr %s134, 256
        %s136 = scalar_lea.vmem [#allocation5], %s135
        %s137 = smul.u32 32, %s18
        %s138 = smul.u32 32, %s18
        %v139 = vld [vmem:[%s117] sm:$0xff]
        %v140 = vld [vmem:[%s117 + $0x8] sm:$0xff]
        %v141 = vld [vmem:[%s117 + $0x10] sm:$0xff]
        %v142 = vld [vmem:[%s117 + $0x18] sm:$0xff]
        %v143 = vld [vmem:[%s117 + $0x20] sm:$0xff]
        %v144 = vld [vmem:[%s117 + $0x28] sm:$0xff]
        %v145 = vld [vmem:[%s117 + $0x30] sm:$0xff]
        %v146 = vld [vmem:[%s117 + $0x38] sm:$0xff]
        %v147 = vld [vmem:[%s117 + $0x40] sm:$0xff]
        %v148 = vld [vmem:[%s117 + $0x48] sm:$0xff]
        %v149 = vld [vmem:[%s117 + $0x50] sm:$0xff]
        %v150 = vld [vmem:[%s117 + $0x58] sm:$0xff]
        %v151 = vld [vmem:[%s117 + $0x60] sm:$0xff]
        %v152 = vld [vmem:[%s117 + $0x68] sm:$0xff]
        %v153 = vld [vmem:[%s117 + $0x70] sm:$0xff]
        %v154 = vld [vmem:[%s117 + $0x78] sm:$0xff]
        %v155 = vld [vmem:[%s117 + $0x80] sm:$0xff]
        %v156 = vld [vmem:[%s117 + $0x88] sm:$0xff]
        %v157 = vld [vmem:[%s117 + $0x90] sm:$0xff]
        %v158 = vld [vmem:[%s117 + $0x98] sm:$0xff]
        %v159 = vld [vmem:[%s117 + $0xa0] sm:$0xff]
        %v160 = vld [vmem:[%s117 + $0xa8] sm:$0xff]
        %v161 = vld [vmem:[%s117 + $0xb0] sm:$0xff]
        %v162 = vld [vmem:[%s117 + $0xb8] sm:$0xff]
        %v163 = vld [vmem:[%s117 + $0xc0] sm:$0xff]
        %v164 = vld [vmem:[%s117 + $0xc8] sm:$0xff]
        %v165 = vld [vmem:[%s117 + $0xd0] sm:$0xff]
        %v166 = vld [vmem:[%s117 + $0xd8] sm:$0xff]
        %v167 = vld [vmem:[%s117 + $0xe0] sm:$0xff]
        %v168 = vld [vmem:[%s117 + $0xe8] sm:$0xff]
        %v169 = vld [vmem:[%s117 + $0xf0] sm:$0xff]
        %v170 = vld [vmem:[%s117 + $0xf8] sm:$0xff]
        %v171 = vmul.f32 %v139, 30.0
        %v172 = vmul.f32 %v140, 30.0
        %v173 = vmul.f32 %v141, 30.0
        %v174 = vmul.f32 %v142, 30.0
        %v175 = vmul.f32 %v143, 30.0
        %v176 = vmul.f32 %v144, 30.0
        %v177 = vmul.f32 %v145, 30.0
        %v178 = vmul.f32 %v146, 30.0
        %v179 = vmul.f32 %v147, 30.0
        %v180 = vmul.f32 %v148, 30.0
        %v181 = vmul.f32 %v149, 30.0
        %v182 = vmul.f32 %v150, 30.0
        %v183 = vmul.f32 %v151, 30.0
        %v184 = vmul.f32 %v152, 30.0
        %v185 = vmul.f32 %v153, 30.0
        %v186 = vmul.f32 %v154, 30.0
        %v187 = vmul.f32 %v155, 30.0
        %v188 = vmul.f32 %v156, 30.0
        %v189 = vmul.f32 %v157, 30.0
        %v190 = vmul.f32 %v158, 30.0
        %v191 = vmul.f32 %v159, 30.0
        %v192 = vmul.f32 %v160, 30.0
        %v193 = vmul.f32 %v161, 30.0
        %v194 = vmul.f32 %v162, 30.0
        %v195 = vmul.f32 %v163, 30.0
        %v196 = vmul.f32 %v164, 30.0
        %v197 = vmul.f32 %v165, 30.0
        %v198 = vmul.f32 %v166, 30.0
        %v199 = vmul.f32 %v167, 30.0
        %v200 = vmul.f32 %v168, 30.0
        %v201 = vmul.f32 %v169, 30.0
        %v202 = vmul.f32 %v170, 30.0
        %v203 = vand.u32 2147483647, %v171
        %vm204 = vcmp.le.f32.partialorder %v203, 0.7853982
        %vm205 = vcmp.lt.s32.totalorder %v171, 0
        %v206 = vand.u32 %v171, 2139095040
        %v207 = vshrl.u32 %v206, 23
        %v208 = vsub.s32 %v207, 127
        %v209 = vand.u32 2147483647, %v171
        %v210 = vand.u32 %v209, 8388607
        %v211 = vor.u32 %v210, 8388608
        %v212 = vsub.s32 0, %v211
        %v213 = vadd.s32 %v208, 1
        %vm214 = vcmp.gt.s32.totalorder %v213, 0
        %v215 = vsel %vm214, %v213, 0
        %v216 = vshrl.u32 %v215, 5
        %v217 = vand.u32 %v215, 31
        %v218 = vsub.s32 32, %v217
        %v219 = vshrl.u32 683565275, %v218
        %v220 = vshll.u32 683565275, %v217
        %v221 = vshrl.u32 2475754826, %v218
        %v222 = vor.u32 %v220, %v221
        %v223 = vshll.u32 2475754826, %v217
        %v224 = vshrl.u32 2131351028, %v218
        %v225 = vor.u32 %v223, %v224
        %v226 = vshll.u32 2131351028, %v217
        %v227 = vshrl.u32 2102212464, %v218
        %v228 = vor.u32 %v226, %v227
        %v229 = vshll.u32 2102212464, %v217
        %v230 = vshrl.u32 920167782, %v218
        %v231 = vor.u32 %v229, %v230
        %v232 = vshll.u32 920167782, %v217
        %v233 = vshrl.u32 1326507024, %v218
        %v234 = vor.u32 %v232, %v233
        %vm235 = vcmp.lt.s32.totalorder %v216, 1
        %vm236 = vcmp.lt.s32.totalorder %v216, 2
        %vm237 = vcmp.lt.s32.totalorder %v216, 3
        %vm238 = vcmp.lt.s32.totalorder %v216, 4
        %v239 = vsel %vm235, %v219, %v222
        %v240 = vsel %vm238, %v228, 2102212464
        %v241 = vsel %vm237, %v225, %v240
        %v242 = vsel %vm236, %v239, %v241
        %v243 = vsel %vm235, %v222, %v225
        %v244 = vsel %vm238, %v231, 920167782
        %v245 = vsel %vm237, %v228, %v244
        %v246 = vsel %vm236, %v243, %v245
        %v247 = vsel %vm235, %v225, %v228
        %v248 = vsel %vm238, %v234, 1326507024
        %v249 = vsel %vm237, %v231, %v248
        %v250 = vsel %vm236, %v247, %v249
        %v251 = vshll.u32 %v211, 8
        %v252 = vand.u32 %v251, 65535
        %v253 = vshrl.u32 %v251, 16
        %v254 = vand.u32 %v250, 65535
        %v255 = vshrl.u32 %v250, 16
        %v256 = vmul.u32 %v252, %v254
        %v257 = vmul.u32 %v252, %v255
        %v258 = vmul.u32 %v253, %v254
        %v259 = vmul.u32 %v253, %v255
        %v260 = vshll.u32 %v257, 16
        %v261 = vshrl.u32 %v257, 16
        %v262 = vshll.u32 %v258, 16
        %v263 = vshrl.u32 %v258, 16
        %vm264 = vc.u32 %v256, %v260
        %v265 = vsel %vm264, 1, 0
        %v266 = vadd.s32 %v256, %v260
        %v267 = vadd.s32 %v259, %v265
        %vm268 = vc.u32 %v266, %v262
        %v269 = vsel %vm268, 1, 0
        %v270 = vadd.s32 %v266, %v262
        %v271 = vadd.s32 %v267, %v269
        %v272 = vadd.s32 %v271, %v261
        %v273 = vadd.s32 %v272, %v263
        %v274 = vand.u32 %v251, 65535
        %v275 = vshrl.u32 %v251, 16
        %v276 = vand.u32 %v246, 65535
        %v277 = vshrl.u32 %v246, 16
        %v278 = vmul.u32 %v274, %v276
        %v279 = vmul.u32 %v274, %v277
        %v280 = vmul.u32 %v275, %v276
        %v281 = vmul.u32 %v275, %v277
        %v282 = vshll.u32 %v279, 16
        %v283 = vshrl.u32 %v279, 16
        %v284 = vshll.u32 %v280, 16
        %v285 = vshrl.u32 %v280, 16
        %vm286 = vc.u32 %v278, %v282
        %v287 = vsel %vm286, 1, 0
        %v288 = vadd.s32 %v278, %v282
        %v289 = vadd.s32 %v281, %v287
        %vm290 = vc.u32 %v288, %v284
        %v291 = vsel %vm290, 1, 0
        %v292 = vadd.s32 %v288, %v284
        %v293 = vadd.s32 %v289, %v291
        %v294 = vadd.s32 %v293, %v283
        %v295 = vadd.s32 %v294, %v285
        %v296 = vmul.u32 %v251, %v242
        %v297 = vadd.s32 %v273, %v292
        %vm298 = vc.u32 %v273, %v292
        %v299 = vadd.s32 %v295, 1
        %v300 = vsel %vm298, %v299, %v295
        %v301 = vadd.s32 %v296, %v300
        %v302 = vadd.s32 %v301, 536870912
        %v303 = vshrl.u32 %v302, 30
        %v304 = vshll.u32 %v303, 30
        %v305 = vsub.s32 %v301, %v304
        %vm306 = vcmp.lt.s32.totalorder %v305, 0
        %v307 = vsub.s32 0, %v305
        %v308 = vsel %vm306, %v307, %v305
        %v309 = vclz %v308
        %v310 = vsub.s32 %v309, 2
        %vm311 = vcmp.gt.s32.totalorder 0, %v310
        %v312 = vsel %vm311, 0, %v310
        %v313 = vsub.s32 32, %v312
        %v314 = vshll.u32 %v305, %v312
        %v315 = vshrl.u32 %v297, %v313
        %v316 = vor.u32 %v314, %v315
        %v317 = vsub.s32 4294967266, %v312
        %v318 = vadd.s32 %v317, 127
        %v319 = vshll.u32 %v318, 23
        %v320 = vor.u32 4788187, %v319
        %v321 = vand.u32 2147483647, %v320
        %v323 = vcvt.s32.f32 %v316
        %v324 = vmul.f32 %v323, %v321
        %v325 = vxor.u32 %v324, 2147483648
        %v326 = vsel %vm205, %v325, %v324
        %v327 = vsub.s32 4, %v303
        %v328 = vsel %vm205, %v327, %v303
        %v329 = vsel %vm204, %v171, %v326
        %v330 = vsel %vm204, 0, %v328
        %v331 = vmul.f32 %v329, %v329
        %v332 = vmul.f32 %v331, -0.001358992
        %v333 = vadd.f32 %v332, 0.041655596
        %v334 = vmul.f32 %v331, %v333
        %v335 = vadd.f32 %v334, -0.4999988
        %v336 = vmul.f32 %v331, %v335
        %v337 = vadd.f32 1.0, %v336
        %v338 = vmul.f32 %v329, %v329
        %v339 = vmul.f32 %v338, -0.00019511016
        %v340 = vadd.f32 %v339, 0.008332121
        %v341 = vmul.f32 %v338, %v340
        %v342 = vadd.f32 %v341, -0.16666654
        %v343 = vmul.f32 %v338, %v342
        %v344 = vadd.f32 %v343, 1.0
        %v345 = vmul.f32 %v344, %v329
        %vm346 = vweird.f32 %v171
        %v347 = vadd.s32 %v330, 3
        %v348 = vand.u32 %v347, 3
        %vm349 = vcmp.lt.s32.totalorder %v348, 2
        %vm350 = vcmp.eq.s32.totalorder %v348, 0
        %v351 = vxor.u32 %v345, 2147483648
        %v352 = vsel %vm350, %v337, %v351
        %vm353 = vcmp.eq.s32.totalorder %v348, 2
        %v354 = vxor.u32 %v337, 2147483648
        %v355 = vsel %vm353, %v354, %v345
        %v356 = vsel %vm349, %v352, %v355
        %v357 = vsel %vm346, nan, %v356
        %v358 = vand.u32 2147483647, %v172
        %vm359 = vcmp.le.f32.partialorder %v358, 0.7853982
        %vm360 = vcmp.lt.s32.totalorder %v172, 0
        %v361 = vand.u32 %v172, 2139095040
        %v362 = vshrl.u32 %v361, 23
        %v363 = vsub.s32 %v362, 127
        %v364 = vand.u32 2147483647, %v172
        %v365 = vand.u32 %v364, 8388607
        %v366 = vor.u32 %v365, 8388608
        %v367 = vsub.s32 0, %v366
        %v368 = vadd.s32 %v363, 1
        %vm369 = vcmp.gt.s32.totalorder %v368, 0
        %v370 = vsel %vm369, %v368, 0
        %v371 = vshrl.u32 %v370, 5
        %v372 = vand.u32 %v370, 31
        %v373 = vsub.s32 32, %v372
        %v374 = vshrl.u32 683565275, %v373
        %v375 = vshll.u32 683565275, %v372
        %v376 = vshrl.u32 2475754826, %v373
        %v377 = vor.u32 %v375, %v376
        %v378 = vshll.u32 2475754826, %v372
        %v379 = vshrl.u32 2131351028, %v373
        %v380 = vor.u32 %v378, %v379
        %v381 = vshll.u32 2131351028, %v372
        %v382 = vshrl.u32 2102212464, %v373
        %v383 = vor.u32 %v381, %v382
        %v384 = vshll.u32 2102212464, %v372
        %v385 = vshrl.u32 920167782, %v373
        %v386 = vor.u32 %v384, %v385
        %v387 = vshll.u32 920167782, %v372
        %v388 = vshrl.u32 1326507024, %v373
        %v389 = vor.u32 %v387, %v388
        %vm390 = vcmp.lt.s32.totalorder %v371, 1
        %vm391 = vcmp.lt.s32.totalorder %v371, 2
        %vm392 = vcmp.lt.s32.totalorder %v371, 3
        %vm393 = vcmp.lt.s32.totalorder %v371, 4
        %v394 = vsel %vm390, %v374, %v377
        %v395 = vsel %vm393, %v383, 2102212464
        %v396 = vsel %vm392, %v380, %v395
        %v397 = vsel %vm391, %v394, %v396
        %v398 = vsel %vm390, %v377, %v380
        %v399 = vsel %vm393, %v386, 920167782
        %v400 = vsel %vm392, %v383, %v399
        %v401 = vsel %vm391, %v398, %v400
        %v402 = vsel %vm390, %v380, %v383
        %v403 = vsel %vm393, %v389, 1326507024
        %v404 = vsel %vm392, %v386, %v403
        %v405 = vsel %vm391, %v402, %v404
        %v406 = vshll.u32 %v366, 8
        %v407 = vand.u32 %v406, 65535
        %v408 = vshrl.u32 %v406, 16
        %v409 = vand.u32 %v405, 65535
        %v410 = vshrl.u32 %v405, 16
        %v411 = vmul.u32 %v407, %v409
        %v412 = vmul.u32 %v407, %v410
        %v413 = vmul.u32 %v408, %v409
        %v414 = vmul.u32 %v408, %v410
        %v415 = vshll.u32 %v412, 16
        %v416 = vshrl.u32 %v412, 16
        %v417 = vshll.u32 %v413, 16
        %v418 = vshrl.u32 %v413, 16
        %vm419 = vc.u32 %v411, %v415
        %v420 = vsel %vm419, 1, 0
        %v421 = vadd.s32 %v411, %v415
        %v422 = vadd.s32 %v414, %v420
        %vm423 = vc.u32 %v421, %v417
        %v424 = vsel %vm423, 1, 0
        %v425 = vadd.s32 %v421, %v417
        %v426 = vadd.s32 %v422, %v424
        %v427 = vadd.s32 %v426, %v416
        %v428 = vadd.s32 %v427, %v418
        %v429 = vand.u32 %v406, 65535
        %v430 = vshrl.u32 %v406, 16
        %v431 = vand.u32 %v401, 65535
        %v432 = vshrl.u32 %v401, 16
        %v433 = vmul.u32 %v429, %v431
        %v434 = vmul.u32 %v429, %v432
        %v435 = vmul.u32 %v430, %v431
        %v436 = vmul.u32 %v430, %v432
        %v437 = vshll.u32 %v434, 16
        %v438 = vshrl.u32 %v434, 16
        %v439 = vshll.u32 %v435, 16
        %v440 = vshrl.u32 %v435, 16
        %vm441 = vc.u32 %v433, %v437
        %v442 = vsel %vm441, 1, 0
        %v443 = vadd.s32 %v433, %v437
        %v444 = vadd.s32 %v436, %v442
        %vm445 = vc.u32 %v443, %v439
        %v446 = vsel %vm445, 1, 0
        %v447 = vadd.s32 %v443, %v439
        %v448 = vadd.s32 %v444, %v446
        %v449 = vadd.s32 %v448, %v438
        %v450 = vadd.s32 %v449, %v440
        %v451 = vmul.u32 %v406, %v397
        %v452 = vadd.s32 %v428, %v447
        %vm453 = vc.u32 %v428, %v447
        %v454 = vadd.s32 %v450, 1
        %v455 = vsel %vm453, %v454, %v450
        %v456 = vadd.s32 %v451, %v455
        %v457 = vadd.s32 %v456, 536870912
        %v458 = vshrl.u32 %v457, 30
        %v459 = vshll.u32 %v458, 30
        %v460 = vsub.s32 %v456, %v459
        %vm461 = vcmp.lt.s32.totalorder %v460, 0
        %v462 = vsub.s32 0, %v460
        %v463 = vsel %vm461, %v462, %v460
        %v464 = vclz %v463
        %v465 = vsub.s32 %v464, 2
        %vm466 = vcmp.gt.s32.totalorder 0, %v465
        %v467 = vsel %vm466, 0, %v465
        %v468 = vsub.s32 32, %v467
        %v469 = vshll.u32 %v460, %v467
        %v470 = vshrl.u32 %v452, %v468
        %v471 = vor.u32 %v469, %v470
        %v472 = vsub.s32 4294967266, %v467
        %v473 = vadd.s32 %v472, 127
        %v474 = vshll.u32 %v473, 23
        %v475 = vor.u32 4788187, %v474
        %v476 = vand.u32 2147483647, %v475
        %v478 = vcvt.s32.f32 %v471
        %v479 = vmul.f32 %v478, %v476
        %v480 = vxor.u32 %v479, 2147483648
        %v481 = vsel %vm360, %v480, %v479
        %v482 = vsub.s32 4, %v458
        %v483 = vsel %vm360, %v482, %v458
        %v484 = vsel %vm359, %v172, %v481
        %v485 = vsel %vm359, 0, %v483
        %v486 = vmul.f32 %v484, %v484
        %v487 = vmul.f32 %v486, -0.001358992
        %v488 = vadd.f32 %v487, 0.041655596
        %v489 = vmul.f32 %v486, %v488
        %v490 = vadd.f32 %v489, -0.4999988
        %v491 = vmul.f32 %v486, %v490
        %v492 = vadd.f32 1.0, %v491
        %v493 = vmul.f32 %v484, %v484
        %v494 = vmul.f32 %v493, -0.00019511016
        %v495 = vadd.f32 %v494, 0.008332121
        %v496 = vmul.f32 %v493, %v495
        %v497 = vadd.f32 %v496, -0.16666654
        %v498 = vmul.f32 %v493, %v497
        %v499 = vadd.f32 %v498, 1.0
        %v500 = vmul.f32 %v499, %v484
        %vm501 = vweird.f32 %v172
        %v502 = vadd.s32 %v485, 3
        %v503 = vand.u32 %v502, 3
        %vm504 = vcmp.lt.s32.totalorder %v503, 2
        %vm505 = vcmp.eq.s32.totalorder %v503, 0
        %v506 = vxor.u32 %v500, 2147483648
        %v507 = vsel %vm505, %v492, %v506
        %vm508 = vcmp.eq.s32.totalorder %v503, 2
        %v509 = vxor.u32 %v492, 2147483648
        %v510 = vsel %vm508, %v509, %v500
        %v511 = vsel %vm504, %v507, %v510
        %v512 = vsel %vm501, nan, %v511
        %v513 = vand.u32 2147483647, %v173
        %vm514 = vcmp.le.f32.partialorder %v513, 0.7853982
        %vm515 = vcmp.lt.s32.totalorder %v173, 0
        %v516 = vand.u32 %v173, 2139095040
        %v517 = vshrl.u32 %v516, 23
        %v518 = vsub.s32 %v517, 127
        %v519 = vand.u32 2147483647, %v173
        %v520 = vand.u32 %v519, 8388607
        %v521 = vor.u32 %v520, 8388608
        %v522 = vsub.s32 0, %v521
        %v523 = vadd.s32 %v518, 1
        %vm524 = vcmp.gt.s32.totalorder %v523, 0
        %v525 = vsel %vm524, %v523, 0
        %v526 = vshrl.u32 %v525, 5
        %v527 = vand.u32 %v525, 31
        %v528 = vsub.s32 32, %v527
        %v529 = vshrl.u32 683565275, %v528
        %v530 = vshll.u32 683565275, %v527
        %v531 = vshrl.u32 2475754826, %v528
        %v532 = vor.u32 %v530, %v531
        %v533 = vshll.u32 2475754826, %v527
        %v534 = vshrl.u32 2131351028, %v528
        %v535 = vor.u32 %v533, %v534
        %v536 = vshll.u32 2131351028, %v527
        %v537 = vshrl.u32 2102212464, %v528
        %v538 = vor.u32 %v536, %v537
        %v539 = vshll.u32 2102212464, %v527
        %v540 = vshrl.u32 920167782, %v528
        %v541 = vor.u32 %v539, %v540
        %v542 = vshll.u32 920167782, %v527
        %v543 = vshrl.u32 1326507024, %v528
        %v544 = vor.u32 %v542, %v543
        %vm545 = vcmp.lt.s32.totalorder %v526, 1
        %vm546 = vcmp.lt.s32.totalorder %v526, 2
        %vm547 = vcmp.lt.s32.totalorder %v526, 3
        %vm548 = vcmp.lt.s32.totalorder %v526, 4
        %v549 = vsel %vm545, %v529, %v532
        %v550 = vsel %vm548, %v538, 2102212464
        %v551 = vsel %vm547, %v535, %v550
        %v552 = vsel %vm546, %v549, %v551
        %v553 = vsel %vm545, %v532, %v535
        %v554 = vsel %vm548, %v541, 920167782
        %v555 = vsel %vm547, %v538, %v554
        %v556 = vsel %vm546, %v553, %v555
        %v557 = vsel %vm545, %v535, %v538
        %v558 = vsel %vm548, %v544, 1326507024
        %v559 = vsel %vm547, %v541, %v558
        %v560 = vsel %vm546, %v557, %v559
        %v561 = vshll.u32 %v521, 8
        %v562 = vand.u32 %v561, 65535
        %v563 = vshrl.u32 %v561, 16
        %v564 = vand.u32 %v560, 65535
        %v565 = vshrl.u32 %v560, 16
        %v566 = vmul.u32 %v562, %v564
        %v567 = vmul.u32 %v562, %v565
        %v568 = vmul.u32 %v563, %v564
        %v569 = vmul.u32 %v563, %v565
        %v570 = vshll.u32 %v567, 16
        %v571 = vshrl.u32 %v567, 16
        %v572 = vshll.u32 %v568, 16
        %v573 = vshrl.u32 %v568, 16
        %vm574 = vc.u32 %v566, %v570
        %v575 = vsel %vm574, 1, 0
        %v576 = vadd.s32 %v566, %v570
        %v577 = vadd.s32 %v569, %v575
        %vm578 = vc.u32 %v576, %v572
        %v579 = vsel %vm578, 1, 0
        %v580 = vadd.s32 %v576, %v572
        %v581 = vadd.s32 %v577, %v579
        %v582 = vadd.s32 %v581, %v571
        %v583 = vadd.s32 %v582, %v573
        %v584 = vand.u32 %v561, 65535
        %v585 = vshrl.u32 %v561, 16
        %v586 = vand.u32 %v556, 65535
        %v587 = vshrl.u32 %v556, 16
        %v588 = vmul.u32 %v584, %v586
        %v589 = vmul.u32 %v584, %v587
        %v590 = vmul.u32 %v585, %v586
        %v591 = vmul.u32 %v585, %v587
        %v592 = vshll.u32 %v589, 16
        %v593 = vshrl.u32 %v589, 16
        %v594 = vshll.u32 %v590, 16
        %v595 = vshrl.u32 %v590, 16
        %vm596 = vc.u32 %v588, %v592
        %v597 = vsel %vm596, 1, 0
        %v598 = vadd.s32 %v588, %v592
        %v599 = vadd.s32 %v591, %v597
        %vm600 = vc.u32 %v598, %v594
        %v601 = vsel %vm600, 1, 0
        %v602 = vadd.s32 %v598, %v594
        %v603 = vadd.s32 %v599, %v601
        %v604 = vadd.s32 %v603, %v593
        %v605 = vadd.s32 %v604, %v595
        %v606 = vmul.u32 %v561, %v552
        %v607 = vadd.s32 %v583, %v602
        %vm608 = vc.u32 %v583, %v602
        %v609 = vadd.s32 %v605, 1
        %v610 = vsel %vm608, %v609, %v605
        %v611 = vadd.s32 %v606, %v610
        %v612 = vadd.s32 %v611, 536870912
        %v613 = vshrl.u32 %v612, 30
        %v614 = vshll.u32 %v613, 30
        %v615 = vsub.s32 %v611, %v614
        %vm616 = vcmp.lt.s32.totalorder %v615, 0
        %v617 = vsub.s32 0, %v615
        %v618 = vsel %vm616, %v617, %v615
        %v619 = vclz %v618
        %v620 = vsub.s32 %v619, 2
        %vm621 = vcmp.gt.s32.totalorder 0, %v620
        %v622 = vsel %vm621, 0, %v620
        %v623 = vsub.s32 32, %v622
        %v624 = vshll.u32 %v615, %v622
        %v625 = vshrl.u32 %v607, %v623
        %v626 = vor.u32 %v624, %v625
        %v627 = vsub.s32 4294967266, %v622
        %v628 = vadd.s32 %v627, 127
        %v629 = vshll.u32 %v628, 23
        %v630 = vor.u32 4788187, %v629
        %v631 = vand.u32 2147483647, %v630
        %v633 = vcvt.s32.f32 %v626
        %v634 = vmul.f32 %v633, %v631
        %v635 = vxor.u32 %v634, 2147483648
        %v636 = vsel %vm515, %v635, %v634
        %v637 = vsub.s32 4, %v613
        %v638 = vsel %vm515, %v637, %v613
        %v639 = vsel %vm514, %v173, %v636
        %v640 = vsel %vm514, 0, %v638
        %v641 = vmul.f32 %v639, %v639
        %v642 = vmul.f32 %v641, -0.001358992
        %v643 = vadd.f32 %v642, 0.041655596
        %v644 = vmul.f32 %v641, %v643
        %v645 = vadd.f32 %v644, -0.4999988
        %v646 = vmul.f32 %v641, %v645
        %v647 = vadd.f32 1.0, %v646
        %v648 = vmul.f32 %v639, %v639
        %v649 = vmul.f32 %v648, -0.00019511016
        %v650 = vadd.f32 %v649, 0.008332121
        %v651 = vmul.f32 %v648, %v650
        %v652 = vadd.f32 %v651, -0.16666654
        %v653 = vmul.f32 %v648, %v652
        %v654 = vadd.f32 %v653, 1.0
        %v655 = vmul.f32 %v654, %v639
        %vm656 = vweird.f32 %v173
        %v657 = vadd.s32 %v640, 3
        %v658 = vand.u32 %v657, 3
        %vm659 = vcmp.lt.s32.totalorder %v658, 2
        %vm660 = vcmp.eq.s32.totalorder %v658, 0
        %v661 = vxor.u32 %v655, 2147483648
        %v662 = vsel %vm660, %v647, %v661
        %vm663 = vcmp.eq.s32.totalorder %v658, 2
        %v664 = vxor.u32 %v647, 2147483648
        %v665 = vsel %vm663, %v664, %v655
        %v666 = vsel %vm659, %v662, %v665
        %v667 = vsel %vm656, nan, %v666
        %v668 = vand.u32 2147483647, %v174
        %vm669 = vcmp.le.f32.partialorder %v668, 0.7853982
        %vm670 = vcmp.lt.s32.totalorder %v174, 0
        %v671 = vand.u32 %v174, 2139095040
        %v672 = vshrl.u32 %v671, 23
        %v673 = vsub.s32 %v672, 127
        %v674 = vand.u32 2147483647, %v174
        %v675 = vand.u32 %v674, 8388607
        %v676 = vor.u32 %v675, 8388608
        %v677 = vsub.s32 0, %v676
        %v678 = vadd.s32 %v673, 1
        %vm679 = vcmp.gt.s32.totalorder %v678, 0
        %v680 = vsel %vm679, %v678, 0
        %v681 = vshrl.u32 %v680, 5
        %v682 = vand.u32 %v680, 31
        %v683 = vsub.s32 32, %v682
        %v684 = vshrl.u32 683565275, %v683
        %v685 = vshll.u32 683565275, %v682
        %v686 = vshrl.u32 2475754826, %v683
        %v687 = vor.u32 %v685, %v686
        %v688 = vshll.u32 2475754826, %v682
        %v689 = vshrl.u32 2131351028, %v683
        %v690 = vor.u32 %v688, %v689
        %v691 = vshll.u32 2131351028, %v682
        %v692 = vshrl.u32 2102212464, %v683
        %v693 = vor.u32 %v691, %v692
        %v694 = vshll.u32 2102212464, %v682
        %v695 = vshrl.u32 920167782, %v683
        %v696 = vor.u32 %v694, %v695
        %v697 = vshll.u32 920167782, %v682
        %v698 = vshrl.u32 1326507024, %v683
        %v699 = vor.u32 %v697, %v698
        %vm700 = vcmp.lt.s32.totalorder %v681, 1
        %vm701 = vcmp.lt.s32.totalorder %v681, 2
        %vm702 = vcmp.lt.s32.totalorder %v681, 3
        %vm703 = vcmp.lt.s32.totalorder %v681, 4
        %v704 = vsel %vm700, %v684, %v687
        %v705 = vsel %vm703, %v693, 2102212464
        %v706 = vsel %vm702, %v690, %v705
        %v707 = vsel %vm701, %v704, %v706
        %v708 = vsel %vm700, %v687, %v690
        %v709 = vsel %vm703, %v696, 920167782
        %v710 = vsel %vm702, %v693, %v709
        %v711 = vsel %vm701, %v708, %v710
        %v712 = vsel %vm700, %v690, %v693
        %v713 = vsel %vm703, %v699, 1326507024
        %v714 = vsel %vm702, %v696, %v713
        %v715 = vsel %vm701, %v712, %v714
        %v716 = vshll.u32 %v676, 8
        %v717 = vand.u32 %v716, 65535
        %v718 = vshrl.u32 %v716, 16
        %v719 = vand.u32 %v715, 65535
        %v720 = vshrl.u32 %v715, 16
        %v721 = vmul.u32 %v717, %v719
        %v722 = vmul.u32 %v717, %v720
        %v723 = vmul.u32 %v718, %v719
        %v724 = vmul.u32 %v718, %v720
        %v725 = vshll.u32 %v722, 16
        %v726 = vshrl.u32 %v722, 16
        %v727 = vshll.u32 %v723, 16
        %v728 = vshrl.u32 %v723, 16
        %vm729 = vc.u32 %v721, %v725
        %v730 = vsel %vm729, 1, 0
        %v731 = vadd.s32 %v721, %v725
        %v732 = vadd.s32 %v724, %v730
        %vm733 = vc.u32 %v731, %v727
        %v734 = vsel %vm733, 1, 0
        %v735 = vadd.s32 %v731, %v727
        %v736 = vadd.s32 %v732, %v734
        %v737 = vadd.s32 %v736, %v726
        %v738 = vadd.s32 %v737, %v728
        %v739 = vand.u32 %v716, 65535
        %v740 = vshrl.u32 %v716, 16
        %v741 = vand.u32 %v711, 65535
        %v742 = vshrl.u32 %v711, 16
        %v743 = vmul.u32 %v739, %v741
        %v744 = vmul.u32 %v739, %v742
        %v745 = vmul.u32 %v740, %v741
        %v746 = vmul.u32 %v740, %v742
        %v747 = vshll.u32 %v744, 16
        %v748 = vshrl.u32 %v744, 16
        %v749 = vshll.u32 %v745, 16
        %v750 = vshrl.u32 %v745, 16
        %vm751 = vc.u32 %v743, %v747
        %v752 = vsel %vm751, 1, 0
        %v753 = vadd.s32 %v743, %v747
        %v754 = vadd.s32 %v746, %v752
        %vm755 = vc.u32 %v753, %v749
        %v756 = vsel %vm755, 1, 0
        %v757 = vadd.s32 %v753, %v749
        %v758 = vadd.s32 %v754, %v756
        %v759 = vadd.s32 %v758, %v748
        %v760 = vadd.s32 %v759, %v750
        %v761 = vmul.u32 %v716, %v707
        %v762 = vadd.s32 %v738, %v757
        %vm763 = vc.u32 %v738, %v757
        %v764 = vadd.s32 %v760, 1
        %v765 = vsel %vm763, %v764, %v760
        %v766 = vadd.s32 %v761, %v765
        %v767 = vadd.s32 %v766, 536870912
        %v768 = vshrl.u32 %v767, 30
        %v769 = vshll.u32 %v768, 30
        %v770 = vsub.s32 %v766, %v769
        %vm771 = vcmp.lt.s32.totalorder %v770, 0
        %v772 = vsub.s32 0, %v770
        %v773 = vsel %vm771, %v772, %v770
        %v774 = vclz %v773
        %v775 = vsub.s32 %v774, 2
        %vm776 = vcmp.gt.s32.totalorder 0, %v775
        %v777 = vsel %vm776, 0, %v775
        %v778 = vsub.s32 32, %v777
        %v779 = vshll.u32 %v770, %v777
        %v780 = vshrl.u32 %v762, %v778
        %v781 = vor.u32 %v779, %v780
        %v782 = vsub.s32 4294967266, %v777
        %v783 = vadd.s32 %v782, 127
        %v784 = vshll.u32 %v783, 23
        %v785 = vor.u32 4788187, %v784
        %v786 = vand.u32 2147483647, %v785
        %v788 = vcvt.s32.f32 %v781
        %v789 = vmul.f32 %v788, %v786
        %v790 = vxor.u32 %v789, 2147483648
        %v791 = vsel %vm670, %v790, %v789
        %v792 = vsub.s32 4, %v768
        %v793 = vsel %vm670, %v792, %v768
        %v794 = vsel %vm669, %v174, %v791
        %v795 = vsel %vm669, 0, %v793
        %v796 = vmul.f32 %v794, %v794
        %v797 = vmul.f32 %v796, -0.001358992
        %v798 = vadd.f32 %v797, 0.041655596
        %v799 = vmul.f32 %v796, %v798
        %v800 = vadd.f32 %v799, -0.4999988
        %v801 = vmul.f32 %v796, %v800
        %v802 = vadd.f32 1.0, %v801
        %v803 = vmul.f32 %v794, %v794
        %v804 = vmul.f32 %v803, -0.00019511016
        %v805 = vadd.f32 %v804, 0.008332121
        %v806 = vmul.f32 %v803, %v805
        %v807 = vadd.f32 %v806, -0.16666654
        %v808 = vmul.f32 %v803, %v807
        %v809 = vadd.f32 %v808, 1.0
        %v810 = vmul.f32 %v809, %v794
        %vm811 = vweird.f32 %v174
        %v812 = vadd.s32 %v795, 3
        %v813 = vand.u32 %v812, 3
        %vm814 = vcmp.lt.s32.totalorder %v813, 2
        %vm815 = vcmp.eq.s32.totalorder %v813, 0
        %v816 = vxor.u32 %v810, 2147483648
        %v817 = vsel %vm815, %v802, %v816
        %vm818 = vcmp.eq.s32.totalorder %v813, 2
        %v819 = vxor.u32 %v802, 2147483648
        %v820 = vsel %vm818, %v819, %v810
        %v821 = vsel %vm814, %v817, %v820
        %v822 = vsel %vm811, nan, %v821
        %v823 = vand.u32 2147483647, %v175
        %vm824 = vcmp.le.f32.partialorder %v823, 0.7853982
        %vm825 = vcmp.lt.s32.totalorder %v175, 0
        %v826 = vand.u32 %v175, 2139095040
        %v827 = vshrl.u32 %v826, 23
        %v828 = vsub.s32 %v827, 127
        %v829 = vand.u32 2147483647, %v175
        %v830 = vand.u32 %v829, 8388607
        %v831 = vor.u32 %v830, 8388608
        %v832 = vsub.s32 0, %v831
        %v833 = vadd.s32 %v828, 1
        %vm834 = vcmp.gt.s32.totalorder %v833, 0
        %v835 = vsel %vm834, %v833, 0
        %v836 = vshrl.u32 %v835, 5
        %v837 = vand.u32 %v835, 31
        %v838 = vsub.s32 32, %v837
        %v839 = vshrl.u32 683565275, %v838
        %v840 = vshll.u32 683565275, %v837
        %v841 = vshrl.u32 2475754826, %v838
        %v842 = vor.u32 %v840, %v841
        %v843 = vshll.u32 2475754826, %v837
        %v844 = vshrl.u32 2131351028, %v838
        %v845 = vor.u32 %v843, %v844
        %v846 = vshll.u32 2131351028, %v837
        %v847 = vshrl.u32 2102212464, %v838
        %v848 = vor.u32 %v846, %v847
        %v849 = vshll.u32 2102212464, %v837
        %v850 = vshrl.u32 920167782, %v838
        %v851 = vor.u32 %v849, %v850
        %v852 = vshll.u32 920167782, %v837
        %v853 = vshrl.u32 1326507024, %v838
        %v854 = vor.u32 %v852, %v853
        %vm855 = vcmp.lt.s32.totalorder %v836, 1
        %vm856 = vcmp.lt.s32.totalorder %v836, 2
        %vm857 = vcmp.lt.s32.totalorder %v836, 3
        %vm858 = vcmp.lt.s32.totalorder %v836, 4
        %v859 = vsel %vm855, %v839, %v842
        %v860 = vsel %vm858, %v848, 2102212464
        %v861 = vsel %vm857, %v845, %v860
        %v862 = vsel %vm856, %v859, %v861
        %v863 = vsel %vm855, %v842, %v845
        %v864 = vsel %vm858, %v851, 920167782
        %v865 = vsel %vm857, %v848, %v864
        %v866 = vsel %vm856, %v863, %v865
        %v867 = vsel %vm855, %v845, %v848
        %v868 = vsel %vm858, %v854, 1326507024
        %v869 = vsel %vm857, %v851, %v868
        %v870 = vsel %vm856, %v867, %v869
        %v871 = vshll.u32 %v831, 8
        %v872 = vand.u32 %v871, 65535
        %v873 = vshrl.u32 %v871, 16
        %v874 = vand.u32 %v870, 65535
        %v875 = vshrl.u32 %v870, 16
        %v876 = vmul.u32 %v872, %v874
        %v877 = vmul.u32 %v872, %v875
        %v878 = vmul.u32 %v873, %v874
        %v879 = vmul.u32 %v873, %v875
        %v880 = vshll.u32 %v877, 16
        %v881 = vshrl.u32 %v877, 16
        %v882 = vshll.u32 %v878, 16
        %v883 = vshrl.u32 %v878, 16
        %vm884 = vc.u32 %v876, %v880
        %v885 = vsel %vm884, 1, 0
        %v886 = vadd.s32 %v876, %v880
        %v887 = vadd.s32 %v879, %v885
        %vm888 = vc.u32 %v886, %v882
        %v889 = vsel %vm888, 1, 0
        %v890 = vadd.s32 %v886, %v882
        %v891 = vadd.s32 %v887, %v889
        %v892 = vadd.s32 %v891, %v881
        %v893 = vadd.s32 %v892, %v883
        %v894 = vand.u32 %v871, 65535
        %v895 = vshrl.u32 %v871, 16
        %v896 = vand.u32 %v866, 65535
        %v897 = vshrl.u32 %v866, 16
        %v898 = vmul.u32 %v894, %v896
        %v899 = vmul.u32 %v894, %v897
        %v900 = vmul.u32 %v895, %v896
        %v901 = vmul.u32 %v895, %v897
        %v902 = vshll.u32 %v899, 16
        %v903 = vshrl.u32 %v899, 16
        %v904 = vshll.u32 %v900, 16
        %v905 = vshrl.u32 %v900, 16
        %vm906 = vc.u32 %v898, %v902
        %v907 = vsel %vm906, 1, 0
        %v908 = vadd.s32 %v898, %v902
        %v909 = vadd.s32 %v901, %v907
        %vm910 = vc.u32 %v908, %v904
        %v911 = vsel %vm910, 1, 0
        %v912 = vadd.s32 %v908, %v904
        %v913 = vadd.s32 %v909, %v911
        %v914 = vadd.s32 %v913, %v903
        %v915 = vadd.s32 %v914, %v905
        %v916 = vmul.u32 %v871, %v862
        %v917 = vadd.s32 %v893, %v912
        %vm918 = vc.u32 %v893, %v912
        %v919 = vadd.s32 %v915, 1
        %v920 = vsel %vm918, %v919, %v915
        %v921 = vadd.s32 %v916, %v920
        %v922 = vadd.s32 %v921, 536870912
        %v923 = vshrl.u32 %v922, 30
        %v924 = vshll.u32 %v923, 30
        %v925 = vsub.s32 %v921, %v924
        %vm926 = vcmp.lt.s32.totalorder %v925, 0
        %v927 = vsub.s32 0, %v925
        %v928 = vsel %vm926, %v927, %v925
        %v929 = vclz %v928
        %v930 = vsub.s32 %v929, 2
        %vm931 = vcmp.gt.s32.totalorder 0, %v930
        %v932 = vsel %vm931, 0, %v930
        %v933 = vsub.s32 32, %v932
        %v934 = vshll.u32 %v925, %v932
        %v935 = vshrl.u32 %v917, %v933
        %v936 = vor.u32 %v934, %v935
        %v937 = vsub.s32 4294967266, %v932
        %v938 = vadd.s32 %v937, 127
        %v939 = vshll.u32 %v938, 23
        %v940 = vor.u32 4788187, %v939
        %v941 = vand.u32 2147483647, %v940
        %v943 = vcvt.s32.f32 %v936
        %v944 = vmul.f32 %v943, %v941
        %v945 = vxor.u32 %v944, 2147483648
        %v946 = vsel %vm825, %v945, %v944
        %v947 = vsub.s32 4, %v923
        %v948 = vsel %vm825, %v947, %v923
        %v949 = vsel %vm824, %v175, %v946
        %v950 = vsel %vm824, 0, %v948
        %v951 = vmul.f32 %v949, %v949
        %v952 = vmul.f32 %v951, -0.001358992
        %v953 = vadd.f32 %v952, 0.041655596
        %v954 = vmul.f32 %v951, %v953
        %v955 = vadd.f32 %v954, -0.4999988
        %v956 = vmul.f32 %v951, %v955
        %v957 = vadd.f32 1.0, %v956
        %v958 = vmul.f32 %v949, %v949
        %v959 = vmul.f32 %v958, -0.00019511016
        %v960 = vadd.f32 %v959, 0.008332121
        %v961 = vmul.f32 %v958, %v960
        %v962 = vadd.f32 %v961, -0.16666654
        %v963 = vmul.f32 %v958, %v962
        %v964 = vadd.f32 %v963, 1.0
        %v965 = vmul.f32 %v964, %v949
        %vm966 = vweird.f32 %v175
        %v967 = vadd.s32 %v950, 3
        %v968 = vand.u32 %v967, 3
        %vm969 = vcmp.lt.s32.totalorder %v968, 2
        %vm970 = vcmp.eq.s32.totalorder %v968, 0
        %v971 = vxor.u32 %v965, 2147483648
        %v972 = vsel %vm970, %v957, %v971
        %vm973 = vcmp.eq.s32.totalorder %v968, 2
        %v974 = vxor.u32 %v957, 2147483648
        %v975 = vsel %vm973, %v974, %v965
        %v976 = vsel %vm969, %v972, %v975
        %v977 = vsel %vm966, nan, %v976
        %v978 = vand.u32 2147483647, %v176
        %vm979 = vcmp.le.f32.partialorder %v978, 0.7853982
        %vm980 = vcmp.lt.s32.totalorder %v176, 0
        %v981 = vand.u32 %v176, 2139095040
        %v982 = vshrl.u32 %v981, 23
        %v983 = vsub.s32 %v982, 127
        %v984 = vand.u32 2147483647, %v176
        %v985 = vand.u32 %v984, 8388607
        %v986 = vor.u32 %v985, 8388608
        %v987 = vsub.s32 0, %v986
        %v988 = vadd.s32 %v983, 1
        %vm989 = vcmp.gt.s32.totalorder %v988, 0
        %v990 = vsel %vm989, %v988, 0
        %v991 = vshrl.u32 %v990, 5
        %v992 = vand.u32 %v990, 31
        %v993 = vsub.s32 32, %v992
        %v994 = vshrl.u32 683565275, %v993
        %v995 = vshll.u32 683565275, %v992
        %v996 = vshrl.u32 2475754826, %v993
        %v997 = vor.u32 %v995, %v996
        %v998 = vshll.u32 2475754826, %v992
        %v999 = vshrl.u32 2131351028, %v993
        %v1000 = vor.u32 %v998, %v999
        %v1001 = vshll.u32 2131351028, %v992
        %v1002 = vshrl.u32 2102212464, %v993
        %v1003 = vor.u32 %v1001, %v1002
        %v1004 = vshll.u32 2102212464, %v992
        %v1005 = vshrl.u32 920167782, %v993
        %v1006 = vor.u32 %v1004, %v1005
        %v1007 = vshll.u32 920167782, %v992
        %v1008 = vshrl.u32 1326507024, %v993
        %v1009 = vor.u32 %v1007, %v1008
        %vm1010 = vcmp.lt.s32.totalorder %v991, 1
        %vm1011 = vcmp.lt.s32.totalorder %v991, 2
        %vm1012 = vcmp.lt.s32.totalorder %v991, 3
        %vm1013 = vcmp.lt.s32.totalorder %v991, 4
        %v1014 = vsel %vm1010, %v994, %v997
        %v1015 = vsel %vm1013, %v1003, 2102212464
        %v1016 = vsel %vm1012, %v1000, %v1015
        %v1017 = vsel %vm1011, %v1014, %v1016
        %v1018 = vsel %vm1010, %v997, %v1000
        %v1019 = vsel %vm1013, %v1006, 920167782
        %v1020 = vsel %vm1012, %v1003, %v1019
        %v1021 = vsel %vm1011, %v1018, %v1020
        %v1022 = vsel %vm1010, %v1000, %v1003
        %v1023 = vsel %vm1013, %v1009, 1326507024
        %v1024 = vsel %vm1012, %v1006, %v1023
        %v1025 = vsel %vm1011, %v1022, %v1024
        %v1026 = vshll.u32 %v986, 8
        %v1027 = vand.u32 %v1026, 65535
        %v1028 = vshrl.u32 %v1026, 16
        %v1029 = vand.u32 %v1025, 65535
        %v1030 = vshrl.u32 %v1025, 16
        %v1031 = vmul.u32 %v1027, %v1029
        %v1032 = vmul.u32 %v1027, %v1030
        %v1033 = vmul.u32 %v1028, %v1029
        %v1034 = vmul.u32 %v1028, %v1030
        %v1035 = vshll.u32 %v1032, 16
        %v1036 = vshrl.u32 %v1032, 16
        %v1037 = vshll.u32 %v1033, 16
        %v1038 = vshrl.u32 %v1033, 16
        %vm1039 = vc.u32 %v1031, %v1035
        %v1040 = vsel %vm1039, 1, 0
        %v1041 = vadd.s32 %v1031, %v1035
        %v1042 = vadd.s32 %v1034, %v1040
        %vm1043 = vc.u32 %v1041, %v1037
        %v1044 = vsel %vm1043, 1, 0
        %v1045 = vadd.s32 %v1041, %v1037
        %v1046 = vadd.s32 %v1042, %v1044
        %v1047 = vadd.s32 %v1046, %v1036
        %v1048 = vadd.s32 %v1047, %v1038
        %v1049 = vand.u32 %v1026, 65535
        %v1050 = vshrl.u32 %v1026, 16
        %v1051 = vand.u32 %v1021, 65535
        %v1052 = vshrl.u32 %v1021, 16
        %v1053 = vmul.u32 %v1049, %v1051
        %v1054 = vmul.u32 %v1049, %v1052
        %v1055 = vmul.u32 %v1050, %v1051
        %v1056 = vmul.u32 %v1050, %v1052
        %v1057 = vshll.u32 %v1054, 16
        %v1058 = vshrl.u32 %v1054, 16
        %v1059 = vshll.u32 %v1055, 16
        %v1060 = vshrl.u32 %v1055, 16
        %vm1061 = vc.u32 %v1053, %v1057
        %v1062 = vsel %vm1061, 1, 0
        %v1063 = vadd.s32 %v1053, %v1057
        %v1064 = vadd.s32 %v1056, %v1062
        %vm1065 = vc.u32 %v1063, %v1059
        %v1066 = vsel %vm1065, 1, 0
        %v1067 = vadd.s32 %v1063, %v1059
        %v1068 = vadd.s32 %v1064, %v1066
        %v1069 = vadd.s32 %v1068, %v1058
        %v1070 = vadd.s32 %v1069, %v1060
        %v1071 = vmul.u32 %v1026, %v1017
        %v1072 = vadd.s32 %v1048, %v1067
        %vm1073 = vc.u32 %v1048, %v1067
        %v1074 = vadd.s32 %v1070, 1
        %v1075 = vsel %vm1073, %v1074, %v1070
        %v1076 = vadd.s32 %v1071, %v1075
        %v1077 = vadd.s32 %v1076, 536870912
        %v1078 = vshrl.u32 %v1077, 30
        %v1079 = vshll.u32 %v1078, 30
        %v1080 = vsub.s32 %v1076, %v1079
        %vm1081 = vcmp.lt.s32.totalorder %v1080, 0
        %v1082 = vsub.s32 0, %v1080
        %v1083 = vsel %vm1081, %v1082, %v1080
        %v1084 = vclz %v1083
        %v1085 = vsub.s32 %v1084, 2
        %vm1086 = vcmp.gt.s32.totalorder 0, %v1085
        %v1087 = vsel %vm1086, 0, %v1085
        %v1088 = vsub.s32 32, %v1087
        %v1089 = vshll.u32 %v1080, %v1087
        %v1090 = vshrl.u32 %v1072, %v1088
        %v1091 = vor.u32 %v1089, %v1090
        %v1092 = vsub.s32 4294967266, %v1087
        %v1093 = vadd.s32 %v1092, 127
        %v1094 = vshll.u32 %v1093, 23
        %v1095 = vor.u32 4788187, %v1094
        %v1096 = vand.u32 2147483647, %v1095
        %v1098 = vcvt.s32.f32 %v1091
        %v1099 = vmul.f32 %v1098, %v1096
        %v1100 = vxor.u32 %v1099, 2147483648
        %v1101 = vsel %vm980, %v1100, %v1099
        %v1102 = vsub.s32 4, %v1078
        %v1103 = vsel %vm980, %v1102, %v1078
        %v1104 = vsel %vm979, %v176, %v1101
        %v1105 = vsel %vm979, 0, %v1103
        %v1106 = vmul.f32 %v1104, %v1104
        %v1107 = vmul.f32 %v1106, -0.001358992
        %v1108 = vadd.f32 %v1107, 0.041655596
        %v1109 = vmul.f32 %v1106, %v1108
        %v1110 = vadd.f32 %v1109, -0.4999988
        %v1111 = vmul.f32 %v1106, %v1110
        %v1112 = vadd.f32 1.0, %v1111
        %v1113 = vmul.f32 %v1104, %v1104
        %v1114 = vmul.f32 %v1113, -0.00019511016
        %v1115 = vadd.f32 %v1114, 0.008332121
        %v1116 = vmul.f32 %v1113, %v1115
        %v1117 = vadd.f32 %v1116, -0.16666654
        %v1118 = vmul.f32 %v1113, %v1117
        %v1119 = vadd.f32 %v1118, 1.0
        %v1120 = vmul.f32 %v1119, %v1104
        %vm1121 = vweird.f32 %v176
        %v1122 = vadd.s32 %v1105, 3
        %v1123 = vand.u32 %v1122, 3
        %vm1124 = vcmp.lt.s32.totalorder %v1123, 2
        %vm1125 = vcmp.eq.s32.totalorder %v1123, 0
        %v1126 = vxor.u32 %v1120, 2147483648
        %v1127 = vsel %vm1125, %v1112, %v1126
        %vm1128 = vcmp.eq.s32.totalorder %v1123, 2
        %v1129 = vxor.u32 %v1112, 2147483648
        %v1130 = vsel %vm1128, %v1129, %v1120
        %v1131 = vsel %vm1124, %v1127, %v1130
        %v1132 = vsel %vm1121, nan, %v1131
        %v1133 = vand.u32 2147483647, %v177
        %vm1134 = vcmp.le.f32.partialorder %v1133, 0.7853982
        %vm1135 = vcmp.lt.s32.totalorder %v177, 0
        %v1136 = vand.u32 %v177, 2139095040
        %v1137 = vshrl.u32 %v1136, 23
        %v1138 = vsub.s32 %v1137, 127
        %v1139 = vand.u32 2147483647, %v177
        %v1140 = vand.u32 %v1139, 8388607
        %v1141 = vor.u32 %v1140, 8388608
        %v1142 = vsub.s32 0, %v1141
        %v1143 = vadd.s32 %v1138, 1
        %vm1144 = vcmp.gt.s32.totalorder %v1143, 0
        %v1145 = vsel %vm1144, %v1143, 0
        %v1146 = vshrl.u32 %v1145, 5
        %v1147 = vand.u32 %v1145, 31
        %v1148 = vsub.s32 32, %v1147
        %v1149 = vshrl.u32 683565275, %v1148
        %v1150 = vshll.u32 683565275, %v1147
        %v1151 = vshrl.u32 2475754826, %v1148
        %v1152 = vor.u32 %v1150, %v1151
        %v1153 = vshll.u32 2475754826, %v1147
        %v1154 = vshrl.u32 2131351028, %v1148
        %v1155 = vor.u32 %v1153, %v1154
        %v1156 = vshll.u32 2131351028, %v1147
        %v1157 = vshrl.u32 2102212464, %v1148
        %v1158 = vor.u32 %v1156, %v1157
        %v1159 = vshll.u32 2102212464, %v1147
        %v1160 = vshrl.u32 920167782, %v1148
        %v1161 = vor.u32 %v1159, %v1160
        %v1162 = vshll.u32 920167782, %v1147
        %v1163 = vshrl.u32 1326507024, %v1148
        %v1164 = vor.u32 %v1162, %v1163
        %vm1165 = vcmp.lt.s32.totalorder %v1146, 1
        %vm1166 = vcmp.lt.s32.totalorder %v1146, 2
        %vm1167 = vcmp.lt.s32.totalorder %v1146, 3
        %vm1168 = vcmp.lt.s32.totalorder %v1146, 4
        %v1169 = vsel %vm1165, %v1149, %v1152
        %v1170 = vsel %vm1168, %v1158, 2102212464
        %v1171 = vsel %vm1167, %v1155, %v1170
        %v1172 = vsel %vm1166, %v1169, %v1171
        %v1173 = vsel %vm1165, %v1152, %v1155
        %v1174 = vsel %vm1168, %v1161, 920167782
        %v1175 = vsel %vm1167, %v1158, %v1174
        %v1176 = vsel %vm1166, %v1173, %v1175
        %v1177 = vsel %vm1165, %v1155, %v1158
        %v1178 = vsel %vm1168, %v1164, 1326507024
        %v1179 = vsel %vm1167, %v1161, %v1178
        %v1180 = vsel %vm1166, %v1177, %v1179
        %v1181 = vshll.u32 %v1141, 8
        %v1182 = vand.u32 %v1181, 65535
        %v1183 = vshrl.u32 %v1181, 16
        %v1184 = vand.u32 %v1180, 65535
        %v1185 = vshrl.u32 %v1180, 16
        %v1186 = vmul.u32 %v1182, %v1184
        %v1187 = vmul.u32 %v1182, %v1185
        %v1188 = vmul.u32 %v1183, %v1184
        %v1189 = vmul.u32 %v1183, %v1185
        %v1190 = vshll.u32 %v1187, 16
        %v1191 = vshrl.u32 %v1187, 16
        %v1192 = vshll.u32 %v1188, 16
        %v1193 = vshrl.u32 %v1188, 16
        %vm1194 = vc.u32 %v1186, %v1190
        %v1195 = vsel %vm1194, 1, 0
        %v1196 = vadd.s32 %v1186, %v1190
        %v1197 = vadd.s32 %v1189, %v1195
        %vm1198 = vc.u32 %v1196, %v1192
        %v1199 = vsel %vm1198, 1, 0
        %v1200 = vadd.s32 %v1196, %v1192
        %v1201 = vadd.s32 %v1197, %v1199
        %v1202 = vadd.s32 %v1201, %v1191
        %v1203 = vadd.s32 %v1202, %v1193
        %v1204 = vand.u32 %v1181, 65535
        %v1205 = vshrl.u32 %v1181, 16
        %v1206 = vand.u32 %v1176, 65535
        %v1207 = vshrl.u32 %v1176, 16
        %v1208 = vmul.u32 %v1204, %v1206
        %v1209 = vmul.u32 %v1204, %v1207
        %v1210 = vmul.u32 %v1205, %v1206
        %v1211 = vmul.u32 %v1205, %v1207
        %v1212 = vshll.u32 %v1209, 16
        %v1213 = vshrl.u32 %v1209, 16
        %v1214 = vshll.u32 %v1210, 16
        %v1215 = vshrl.u32 %v1210, 16
        %vm1216 = vc.u32 %v1208, %v1212
        %v1217 = vsel %vm1216, 1, 0
        %v1218 = vadd.s32 %v1208, %v1212
        %v1219 = vadd.s32 %v1211, %v1217
        %vm1220 = vc.u32 %v1218, %v1214
        %v1221 = vsel %vm1220, 1, 0
        %v1222 = vadd.s32 %v1218, %v1214
        %v1223 = vadd.s32 %v1219, %v1221
        %v1224 = vadd.s32 %v1223, %v1213
        %v1225 = vadd.s32 %v1224, %v1215
        %v1226 = vmul.u32 %v1181, %v1172
        %v1227 = vadd.s32 %v1203, %v1222
        %vm1228 = vc.u32 %v1203, %v1222
        %v1229 = vadd.s32 %v1225, 1
        %v1230 = vsel %vm1228, %v1229, %v1225
        %v1231 = vadd.s32 %v1226, %v1230
        %v1232 = vadd.s32 %v1231, 536870912
        %v1233 = vshrl.u32 %v1232, 30
        %v1234 = vshll.u32 %v1233, 30
        %v1235 = vsub.s32 %v1231, %v1234
        %vm1236 = vcmp.lt.s32.totalorder %v1235, 0
        %v1237 = vsub.s32 0, %v1235
        %v1238 = vsel %vm1236, %v1237, %v1235
        %v1239 = vclz %v1238
        %v1240 = vsub.s32 %v1239, 2
        %vm1241 = vcmp.gt.s32.totalorder 0, %v1240
        %v1242 = vsel %vm1241, 0, %v1240
        %v1243 = vsub.s32 32, %v1242
        %v1244 = vshll.u32 %v1235, %v1242
        %v1245 = vshrl.u32 %v1227, %v1243
        %v1246 = vor.u32 %v1244, %v1245
        %v1247 = vsub.s32 4294967266, %v1242
        %v1248 = vadd.s32 %v1247, 127
        %v1249 = vshll.u32 %v1248, 23
        %v1250 = vor.u32 4788187, %v1249
        %v1251 = vand.u32 2147483647, %v1250
        %v1253 = vcvt.s32.f32 %v1246
        %v1254 = vmul.f32 %v1253, %v1251
        %v1255 = vxor.u32 %v1254, 2147483648
        %v1256 = vsel %vm1135, %v1255, %v1254
        %v1257 = vsub.s32 4, %v1233
        %v1258 = vsel %vm1135, %v1257, %v1233
        %v1259 = vsel %vm1134, %v177, %v1256
        %v1260 = vsel %vm1134, 0, %v1258
        %v1261 = vmul.f32 %v1259, %v1259
        %v1262 = vmul.f32 %v1261, -0.001358992
        %v1263 = vadd.f32 %v1262, 0.041655596
        %v1264 = vmul.f32 %v1261, %v1263
        %v1265 = vadd.f32 %v1264, -0.4999988
        %v1266 = vmul.f32 %v1261, %v1265
        %v1267 = vadd.f32 1.0, %v1266
        %v1268 = vmul.f32 %v1259, %v1259
        %v1269 = vmul.f32 %v1268, -0.00019511016
        %v1270 = vadd.f32 %v1269, 0.008332121
        %v1271 = vmul.f32 %v1268, %v1270
        %v1272 = vadd.f32 %v1271, -0.16666654
        %v1273 = vmul.f32 %v1268, %v1272
        %v1274 = vadd.f32 %v1273, 1.0
        %v1275 = vmul.f32 %v1274, %v1259
        %vm1276 = vweird.f32 %v177
        %v1277 = vadd.s32 %v1260, 3
        %v1278 = vand.u32 %v1277, 3
        %vm1279 = vcmp.lt.s32.totalorder %v1278, 2
        %vm1280 = vcmp.eq.s32.totalorder %v1278, 0
        %v1281 = vxor.u32 %v1275, 2147483648
        %v1282 = vsel %vm1280, %v1267, %v1281
        %vm1283 = vcmp.eq.s32.totalorder %v1278, 2
        %v1284 = vxor.u32 %v1267, 2147483648
        %v1285 = vsel %vm1283, %v1284, %v1275
        %v1286 = vsel %vm1279, %v1282, %v1285
        %v1287 = vsel %vm1276, nan, %v1286
        %v1288 = vand.u32 2147483647, %v178
        %vm1289 = vcmp.le.f32.partialorder %v1288, 0.7853982
        %vm1290 = vcmp.lt.s32.totalorder %v178, 0
        %v1291 = vand.u32 %v178, 2139095040
        %v1292 = vshrl.u32 %v1291, 23
        %v1293 = vsub.s32 %v1292, 127
        %v1294 = vand.u32 2147483647, %v178
        %v1295 = vand.u32 %v1294, 8388607
        %v1296 = vor.u32 %v1295, 8388608
        %v1297 = vsub.s32 0, %v1296
        %v1298 = vadd.s32 %v1293, 1
        %vm1299 = vcmp.gt.s32.totalorder %v1298, 0
        %v1300 = vsel %vm1299, %v1298, 0
        %v1301 = vshrl.u32 %v1300, 5
        %v1302 = vand.u32 %v1300, 31
        %v1303 = vsub.s32 32, %v1302
        %v1304 = vshrl.u32 683565275, %v1303
        %v1305 = vshll.u32 683565275, %v1302
        %v1306 = vshrl.u32 2475754826, %v1303
        %v1307 = vor.u32 %v1305, %v1306
        %v1308 = vshll.u32 2475754826, %v1302
        %v1309 = vshrl.u32 2131351028, %v1303
        %v1310 = vor.u32 %v1308, %v1309
        %v1311 = vshll.u32 2131351028, %v1302
        %v1312 = vshrl.u32 2102212464, %v1303
        %v1313 = vor.u32 %v1311, %v1312
        %v1314 = vshll.u32 2102212464, %v1302
        %v1315 = vshrl.u32 920167782, %v1303
        %v1316 = vor.u32 %v1314, %v1315
        %v1317 = vshll.u32 920167782, %v1302
        %v1318 = vshrl.u32 1326507024, %v1303
        %v1319 = vor.u32 %v1317, %v1318
        %vm1320 = vcmp.lt.s32.totalorder %v1301, 1
        %vm1321 = vcmp.lt.s32.totalorder %v1301, 2
        %vm1322 = vcmp.lt.s32.totalorder %v1301, 3
        %vm1323 = vcmp.lt.s32.totalorder %v1301, 4
        %v1324 = vsel %vm1320, %v1304, %v1307
        %v1325 = vsel %vm1323, %v1313, 2102212464
        %v1326 = vsel %vm1322, %v1310, %v1325
        %v1327 = vsel %vm1321, %v1324, %v1326
        %v1328 = vsel %vm1320, %v1307, %v1310
        %v1329 = vsel %vm1323, %v1316, 920167782
        %v1330 = vsel %vm1322, %v1313, %v1329
        %v1331 = vsel %vm1321, %v1328, %v1330
        %v1332 = vsel %vm1320, %v1310, %v1313
        %v1333 = vsel %vm1323, %v1319, 1326507024
        %v1334 = vsel %vm1322, %v1316, %v1333
        %v1335 = vsel %vm1321, %v1332, %v1334
        %v1336 = vshll.u32 %v1296, 8
        %v1337 = vand.u32 %v1336, 65535
        %v1338 = vshrl.u32 %v1336, 16
        %v1339 = vand.u32 %v1335, 65535
        %v1340 = vshrl.u32 %v1335, 16
        %v1341 = vmul.u32 %v1337, %v1339
        %v1342 = vmul.u32 %v1337, %v1340
        %v1343 = vmul.u32 %v1338, %v1339
        %v1344 = vmul.u32 %v1338, %v1340
        %v1345 = vshll.u32 %v1342, 16
        %v1346 = vshrl.u32 %v1342, 16
        %v1347 = vshll.u32 %v1343, 16
        %v1348 = vshrl.u32 %v1343, 16
        %vm1349 = vc.u32 %v1341, %v1345
        %v1350 = vsel %vm1349, 1, 0
        %v1351 = vadd.s32 %v1341, %v1345
        %v1352 = vadd.s32 %v1344, %v1350
        %vm1353 = vc.u32 %v1351, %v1347
        %v1354 = vsel %vm1353, 1, 0
        %v1355 = vadd.s32 %v1351, %v1347
        %v1356 = vadd.s32 %v1352, %v1354
        %v1357 = vadd.s32 %v1356, %v1346
        %v1358 = vadd.s32 %v1357, %v1348
        %v1359 = vand.u32 %v1336, 65535
        %v1360 = vshrl.u32 %v1336, 16
        %v1361 = vand.u32 %v1331, 65535
        %v1362 = vshrl.u32 %v1331, 16
        %v1363 = vmul.u32 %v1359, %v1361
        %v1364 = vmul.u32 %v1359, %v1362
        %v1365 = vmul.u32 %v1360, %v1361
        %v1366 = vmul.u32 %v1360, %v1362
        %v1367 = vshll.u32 %v1364, 16
        %v1368 = vshrl.u32 %v1364, 16
        %v1369 = vshll.u32 %v1365, 16
        %v1370 = vshrl.u32 %v1365, 16
        %vm1371 = vc.u32 %v1363, %v1367
        %v1372 = vsel %vm1371, 1, 0
        %v1373 = vadd.s32 %v1363, %v1367
        %v1374 = vadd.s32 %v1366, %v1372
        %vm1375 = vc.u32 %v1373, %v1369
        %v1376 = vsel %vm1375, 1, 0
        %v1377 = vadd.s32 %v1373, %v1369
        %v1378 = vadd.s32 %v1374, %v1376
        %v1379 = vadd.s32 %v1378, %v1368
        %v1380 = vadd.s32 %v1379, %v1370
        %v1381 = vmul.u32 %v1336, %v1327
        %v1382 = vadd.s32 %v1358, %v1377
        %vm1383 = vc.u32 %v1358, %v1377
        %v1384 = vadd.s32 %v1380, 1
        %v1385 = vsel %vm1383, %v1384, %v1380
        %v1386 = vadd.s32 %v1381, %v1385
        %v1387 = vadd.s32 %v1386, 536870912
        %v1388 = vshrl.u32 %v1387, 30
        %v1389 = vshll.u32 %v1388, 30
        %v1390 = vsub.s32 %v1386, %v1389
        %vm1391 = vcmp.lt.s32.totalorder %v1390, 0
        %v1392 = vsub.s32 0, %v1390
        %v1393 = vsel %vm1391, %v1392, %v1390
        %v1394 = vclz %v1393
        %v1395 = vsub.s32 %v1394, 2
        %vm1396 = vcmp.gt.s32.totalorder 0, %v1395
        %v1397 = vsel %vm1396, 0, %v1395
        %v1398 = vsub.s32 32, %v1397
        %v1399 = vshll.u32 %v1390, %v1397
        %v1400 = vshrl.u32 %v1382, %v1398
        %v1401 = vor.u32 %v1399, %v1400
        %v1402 = vsub.s32 4294967266, %v1397
        %v1403 = vadd.s32 %v1402, 127
        %v1404 = vshll.u32 %v1403, 23
        %v1405 = vor.u32 4788187, %v1404
        %v1406 = vand.u32 2147483647, %v1405
        %v1408 = vcvt.s32.f32 %v1401
        %v1409 = vmul.f32 %v1408, %v1406
        %v1410 = vxor.u32 %v1409, 2147483648
        %v1411 = vsel %vm1290, %v1410, %v1409
        %v1412 = vsub.s32 4, %v1388
        %v1413 = vsel %vm1290, %v1412, %v1388
        %v1414 = vsel %vm1289, %v178, %v1411
        %v1415 = vsel %vm1289, 0, %v1413
        %v1416 = vmul.f32 %v1414, %v1414
        %v1417 = vmul.f32 %v1416, -0.001358992
        %v1418 = vadd.f32 %v1417, 0.041655596
        %v1419 = vmul.f32 %v1416, %v1418
        %v1420 = vadd.f32 %v1419, -0.4999988
        %v1421 = vmul.f32 %v1416, %v1420
        %v1422 = vadd.f32 1.0, %v1421
        %v1423 = vmul.f32 %v1414, %v1414
        %v1424 = vmul.f32 %v1423, -0.00019511016
        %v1425 = vadd.f32 %v1424, 0.008332121
        %v1426 = vmul.f32 %v1423, %v1425
        %v1427 = vadd.f32 %v1426, -0.16666654
        %v1428 = vmul.f32 %v1423, %v1427
        %v1429 = vadd.f32 %v1428, 1.0
        %v1430 = vmul.f32 %v1429, %v1414
        %vm1431 = vweird.f32 %v178
        %v1432 = vadd.s32 %v1415, 3
        %v1433 = vand.u32 %v1432, 3
        %vm1434 = vcmp.lt.s32.totalorder %v1433, 2
        %vm1435 = vcmp.eq.s32.totalorder %v1433, 0
        %v1436 = vxor.u32 %v1430, 2147483648
        %v1437 = vsel %vm1435, %v1422, %v1436
        %vm1438 = vcmp.eq.s32.totalorder %v1433, 2
        %v1439 = vxor.u32 %v1422, 2147483648
        %v1440 = vsel %vm1438, %v1439, %v1430
        %v1441 = vsel %vm1434, %v1437, %v1440
        %v1442 = vsel %vm1431, nan, %v1441
        %v1443 = vand.u32 2147483647, %v179
        %vm1444 = vcmp.le.f32.partialorder %v1443, 0.7853982
        %vm1445 = vcmp.lt.s32.totalorder %v179, 0
        %v1446 = vand.u32 %v179, 2139095040
        %v1447 = vshrl.u32 %v1446, 23
        %v1448 = vsub.s32 %v1447, 127
        %v1449 = vand.u32 2147483647, %v179
        %v1450 = vand.u32 %v1449, 8388607
        %v1451 = vor.u32 %v1450, 8388608
        %v1452 = vsub.s32 0, %v1451
        %v1453 = vadd.s32 %v1448, 1
        %vm1454 = vcmp.gt.s32.totalorder %v1453, 0
        %v1455 = vsel %vm1454, %v1453, 0
        %v1456 = vshrl.u32 %v1455, 5
        %v1457 = vand.u32 %v1455, 31
        %v1458 = vsub.s32 32, %v1457
        %v1459 = vshrl.u32 683565275, %v1458
        %v1460 = vshll.u32 683565275, %v1457
        %v1461 = vshrl.u32 2475754826, %v1458
        %v1462 = vor.u32 %v1460, %v1461
        %v1463 = vshll.u32 2475754826, %v1457
        %v1464 = vshrl.u32 2131351028, %v1458
        %v1465 = vor.u32 %v1463, %v1464
        %v1466 = vshll.u32 2131351028, %v1457
        %v1467 = vshrl.u32 2102212464, %v1458
        %v1468 = vor.u32 %v1466, %v1467
        %v1469 = vshll.u32 2102212464, %v1457
        %v1470 = vshrl.u32 920167782, %v1458
        %v1471 = vor.u32 %v1469, %v1470
        %v1472 = vshll.u32 920167782, %v1457
        %v1473 = vshrl.u32 1326507024, %v1458
        %v1474 = vor.u32 %v1472, %v1473
        %vm1475 = vcmp.lt.s32.totalorder %v1456, 1
        %vm1476 = vcmp.lt.s32.totalorder %v1456, 2
        %vm1477 = vcmp.lt.s32.totalorder %v1456, 3
        %vm1478 = vcmp.lt.s32.totalorder %v1456, 4
        %v1479 = vsel %vm1475, %v1459, %v1462
        %v1480 = vsel %vm1478, %v1468, 2102212464
        %v1481 = vsel %vm1477, %v1465, %v1480
        %v1482 = vsel %vm1476, %v1479, %v1481
        %v1483 = vsel %vm1475, %v1462, %v1465
        %v1484 = vsel %vm1478, %v1471, 920167782
        %v1485 = vsel %vm1477, %v1468, %v1484
        %v1486 = vsel %vm1476, %v1483, %v1485
        %v1487 = vsel %vm1475, %v1465, %v1468
        %v1488 = vsel %vm1478, %v1474, 1326507024
        %v1489 = vsel %vm1477, %v1471, %v1488
        %v1490 = vsel %vm1476, %v1487, %v1489
        %v1491 = vshll.u32 %v1451, 8
        %v1492 = vand.u32 %v1491, 65535
        %v1493 = vshrl.u32 %v1491, 16
        %v1494 = vand.u32 %v1490, 65535
        %v1495 = vshrl.u32 %v1490, 16
        %v1496 = vmul.u32 %v1492, %v1494
        %v1497 = vmul.u32 %v1492, %v1495
        %v1498 = vmul.u32 %v1493, %v1494
        %v1499 = vmul.u32 %v1493, %v1495
        %v1500 = vshll.u32 %v1497, 16
        %v1501 = vshrl.u32 %v1497, 16
        %v1502 = vshll.u32 %v1498, 16
        %v1503 = vshrl.u32 %v1498, 16
        %vm1504 = vc.u32 %v1496, %v1500
        %v1505 = vsel %vm1504, 1, 0
        %v1506 = vadd.s32 %v1496, %v1500
        %v1507 = vadd.s32 %v1499, %v1505
        %vm1508 = vc.u32 %v1506, %v1502
        %v1509 = vsel %vm1508, 1, 0
        %v1510 = vadd.s32 %v1506, %v1502
        %v1511 = vadd.s32 %v1507, %v1509
        %v1512 = vadd.s32 %v1511, %v1501
        %v1513 = vadd.s32 %v1512, %v1503
        %v1514 = vand.u32 %v1491, 65535
        %v1515 = vshrl.u32 %v1491, 16
        %v1516 = vand.u32 %v1486, 65535
        %v1517 = vshrl.u32 %v1486, 16
        %v1518 = vmul.u32 %v1514, %v1516
        %v1519 = vmul.u32 %v1514, %v1517
        %v1520 = vmul.u32 %v1515, %v1516
        %v1521 = vmul.u32 %v1515, %v1517
        %v1522 = vshll.u32 %v1519, 16
        %v1523 = vshrl.u32 %v1519, 16
        %v1524 = vshll.u32 %v1520, 16
        %v1525 = vshrl.u32 %v1520, 16
        %vm1526 = vc.u32 %v1518, %v1522
        %v1527 = vsel %vm1526, 1, 0
        %v1528 = vadd.s32 %v1518, %v1522
        %v1529 = vadd.s32 %v1521, %v1527
        %vm1530 = vc.u32 %v1528, %v1524
        %v1531 = vsel %vm1530, 1, 0
        %v1532 = vadd.s32 %v1528, %v1524
        %v1533 = vadd.s32 %v1529, %v1531
        %v1534 = vadd.s32 %v1533, %v1523
        %v1535 = vadd.s32 %v1534, %v1525
        %v1536 = vmul.u32 %v1491, %v1482
        %v1537 = vadd.s32 %v1513, %v1532
        %vm1538 = vc.u32 %v1513, %v1532
        %v1539 = vadd.s32 %v1535, 1
        %v1540 = vsel %vm1538, %v1539, %v1535
        %v1541 = vadd.s32 %v1536, %v1540
        %v1542 = vadd.s32 %v1541, 536870912
        %v1543 = vshrl.u32 %v1542, 30
        %v1544 = vshll.u32 %v1543, 30
        %v1545 = vsub.s32 %v1541, %v1544
        %vm1546 = vcmp.lt.s32.totalorder %v1545, 0
        %v1547 = vsub.s32 0, %v1545
        %v1548 = vsel %vm1546, %v1547, %v1545
        %v1549 = vclz %v1548
        %v1550 = vsub.s32 %v1549, 2
        %vm1551 = vcmp.gt.s32.totalorder 0, %v1550
        %v1552 = vsel %vm1551, 0, %v1550
        %v1553 = vsub.s32 32, %v1552
        %v1554 = vshll.u32 %v1545, %v1552
        %v1555 = vshrl.u32 %v1537, %v1553
        %v1556 = vor.u32 %v1554, %v1555
        %v1557 = vsub.s32 4294967266, %v1552
        %v1558 = vadd.s32 %v1557, 127
        %v1559 = vshll.u32 %v1558, 23
        %v1560 = vor.u32 4788187, %v1559
        %v1561 = vand.u32 2147483647, %v1560
        %v1563 = vcvt.s32.f32 %v1556
        %v1564 = vmul.f32 %v1563, %v1561
        %v1565 = vxor.u32 %v1564, 2147483648
        %v1566 = vsel %vm1445, %v1565, %v1564
        %v1567 = vsub.s32 4, %v1543
        %v1568 = vsel %vm1445, %v1567, %v1543
        %v1569 = vsel %vm1444, %v179, %v1566
        %v1570 = vsel %vm1444, 0, %v1568
        %v1571 = vmul.f32 %v1569, %v1569
        %v1572 = vmul.f32 %v1571, -0.001358992
        %v1573 = vadd.f32 %v1572, 0.041655596
        %v1574 = vmul.f32 %v1571, %v1573
        %v1575 = vadd.f32 %v1574, -0.4999988
        %v1576 = vmul.f32 %v1571, %v1575
        %v1577 = vadd.f32 1.0, %v1576
        %v1578 = vmul.f32 %v1569, %v1569
        %v1579 = vmul.f32 %v1578, -0.00019511016
        %v1580 = vadd.f32 %v1579, 0.008332121
        %v1581 = vmul.f32 %v1578, %v1580
        %v1582 = vadd.f32 %v1581, -0.16666654
        %v1583 = vmul.f32 %v1578, %v1582
        %v1584 = vadd.f32 %v1583, 1.0
        %v1585 = vmul.f32 %v1584, %v1569
        %vm1586 = vweird.f32 %v179
        %v1587 = vadd.s32 %v1570, 3
        %v1588 = vand.u32 %v1587, 3
        %vm1589 = vcmp.lt.s32.totalorder %v1588, 2
        %vm1590 = vcmp.eq.s32.totalorder %v1588, 0
        %v1591 = vxor.u32 %v1585, 2147483648
        %v1592 = vsel %vm1590, %v1577, %v1591
        %vm1593 = vcmp.eq.s32.totalorder %v1588, 2
        %v1594 = vxor.u32 %v1577, 2147483648
        %v1595 = vsel %vm1593, %v1594, %v1585
        %v1596 = vsel %vm1589, %v1592, %v1595
        %v1597 = vsel %vm1586, nan, %v1596
        %v1598 = vand.u32 2147483647, %v180
        %vm1599 = vcmp.le.f32.partialorder %v1598, 0.7853982
        %vm1600 = vcmp.lt.s32.totalorder %v180, 0
        %v1601 = vand.u32 %v180, 2139095040
        %v1602 = vshrl.u32 %v1601, 23
        %v1603 = vsub.s32 %v1602, 127
        %v1604 = vand.u32 2147483647, %v180
        %v1605 = vand.u32 %v1604, 8388607
        %v1606 = vor.u32 %v1605, 8388608
        %v1607 = vsub.s32 0, %v1606
        %v1608 = vadd.s32 %v1603, 1
        %vm1609 = vcmp.gt.s32.totalorder %v1608, 0
        %v1610 = vsel %vm1609, %v1608, 0
        %v1611 = vshrl.u32 %v1610, 5
        %v1612 = vand.u32 %v1610, 31
        %v1613 = vsub.s32 32, %v1612
        %v1614 = vshrl.u32 683565275, %v1613
        %v1615 = vshll.u32 683565275, %v1612
        %v1616 = vshrl.u32 2475754826, %v1613
        %v1617 = vor.u32 %v1615, %v1616
        %v1618 = vshll.u32 2475754826, %v1612
        %v1619 = vshrl.u32 2131351028, %v1613
        %v1620 = vor.u32 %v1618, %v1619
        %v1621 = vshll.u32 2131351028, %v1612
        %v1622 = vshrl.u32 2102212464, %v1613
        %v1623 = vor.u32 %v1621, %v1622
        %v1624 = vshll.u32 2102212464, %v1612
        %v1625 = vshrl.u32 920167782, %v1613
        %v1626 = vor.u32 %v1624, %v1625
        %v1627 = vshll.u32 920167782, %v1612
        %v1628 = vshrl.u32 1326507024, %v1613
        %v1629 = vor.u32 %v1627, %v1628
        %vm1630 = vcmp.lt.s32.totalorder %v1611, 1
        %vm1631 = vcmp.lt.s32.totalorder %v1611, 2
        %vm1632 = vcmp.lt.s32.totalorder %v1611, 3
        %vm1633 = vcmp.lt.s32.totalorder %v1611, 4
        %v1634 = vsel %vm1630, %v1614, %v1617
        %v1635 = vsel %vm1633, %v1623, 2102212464
        %v1636 = vsel %vm1632, %v1620, %v1635
        %v1637 = vsel %vm1631, %v1634, %v1636
        %v1638 = vsel %vm1630, %v1617, %v1620
        %v1639 = vsel %vm1633, %v1626, 920167782
        %v1640 = vsel %vm1632, %v1623, %v1639
        %v1641 = vsel %vm1631, %v1638, %v1640
        %v1642 = vsel %vm1630, %v1620, %v1623
        %v1643 = vsel %vm1633, %v1629, 1326507024
        %v1644 = vsel %vm1632, %v1626, %v1643
        %v1645 = vsel %vm1631, %v1642, %v1644
        %v1646 = vshll.u32 %v1606, 8
        %v1647 = vand.u32 %v1646, 65535
        %v1648 = vshrl.u32 %v1646, 16
        %v1649 = vand.u32 %v1645, 65535
        %v1650 = vshrl.u32 %v1645, 16
        %v1651 = vmul.u32 %v1647, %v1649
        %v1652 = vmul.u32 %v1647, %v1650
        %v1653 = vmul.u32 %v1648, %v1649
        %v1654 = vmul.u32 %v1648, %v1650
        %v1655 = vshll.u32 %v1652, 16
        %v1656 = vshrl.u32 %v1652, 16
        %v1657 = vshll.u32 %v1653, 16
        %v1658 = vshrl.u32 %v1653, 16
        %vm1659 = vc.u32 %v1651, %v1655
        %v1660 = vsel %vm1659, 1, 0
        %v1661 = vadd.s32 %v1651, %v1655
        %v1662 = vadd.s32 %v1654, %v1660
        %vm1663 = vc.u32 %v1661, %v1657
        %v1664 = vsel %vm1663, 1, 0
        %v1665 = vadd.s32 %v1661, %v1657
        %v1666 = vadd.s32 %v1662, %v1664
        %v1667 = vadd.s32 %v1666, %v1656
        %v1668 = vadd.s32 %v1667, %v1658
        %v1669 = vand.u32 %v1646, 65535
        %v1670 = vshrl.u32 %v1646, 16
        %v1671 = vand.u32 %v1641, 65535
        %v1672 = vshrl.u32 %v1641, 16
        %v1673 = vmul.u32 %v1669, %v1671
        %v1674 = vmul.u32 %v1669, %v1672
        %v1675 = vmul.u32 %v1670, %v1671
        %v1676 = vmul.u32 %v1670, %v1672
        %v1677 = vshll.u32 %v1674, 16
        %v1678 = vshrl.u32 %v1674, 16
        %v1679 = vshll.u32 %v1675, 16
        %v1680 = vshrl.u32 %v1675, 16
        %vm1681 = vc.u32 %v1673, %v1677
        %v1682 = vsel %vm1681, 1, 0
        %v1683 = vadd.s32 %v1673, %v1677
        %v1684 = vadd.s32 %v1676, %v1682
        %vm1685 = vc.u32 %v1683, %v1679
        %v1686 = vsel %vm1685, 1, 0
        %v1687 = vadd.s32 %v1683, %v1679
        %v1688 = vadd.s32 %v1684, %v1686
        %v1689 = vadd.s32 %v1688, %v1678
        %v1690 = vadd.s32 %v1689, %v1680
        %v1691 = vmul.u32 %v1646, %v1637
        %v1692 = vadd.s32 %v1668, %v1687
        %vm1693 = vc.u32 %v1668, %v1687
        %v1694 = vadd.s32 %v1690, 1
        %v1695 = vsel %vm1693, %v1694, %v1690
        %v1696 = vadd.s32 %v1691, %v1695
        %v1697 = vadd.s32 %v1696, 536870912
        %v1698 = vshrl.u32 %v1697, 30
        %v1699 = vshll.u32 %v1698, 30
        %v1700 = vsub.s32 %v1696, %v1699
        %vm1701 = vcmp.lt.s32.totalorder %v1700, 0
        %v1702 = vsub.s32 0, %v1700
        %v1703 = vsel %vm1701, %v1702, %v1700
        %v1704 = vclz %v1703
        %v1705 = vsub.s32 %v1704, 2
        %vm1706 = vcmp.gt.s32.totalorder 0, %v1705
        %v1707 = vsel %vm1706, 0, %v1705
        %v1708 = vsub.s32 32, %v1707
        %v1709 = vshll.u32 %v1700, %v1707
        %v1710 = vshrl.u32 %v1692, %v1708
        %v1711 = vor.u32 %v1709, %v1710
        %v1712 = vsub.s32 4294967266, %v1707
        %v1713 = vadd.s32 %v1712, 127
        %v1714 = vshll.u32 %v1713, 23
        %v1715 = vor.u32 4788187, %v1714
        %v1716 = vand.u32 2147483647, %v1715
        %v1718 = vcvt.s32.f32 %v1711
        %v1719 = vmul.f32 %v1718, %v1716
        %v1720 = vxor.u32 %v1719, 2147483648
        %v1721 = vsel %vm1600, %v1720, %v1719
        %v1722 = vsub.s32 4, %v1698
        %v1723 = vsel %vm1600, %v1722, %v1698
        %v1724 = vsel %vm1599, %v180, %v1721
        %v1725 = vsel %vm1599, 0, %v1723
        %v1726 = vmul.f32 %v1724, %v1724
        %v1727 = vmul.f32 %v1726, -0.001358992
        %v1728 = vadd.f32 %v1727, 0.041655596
        %v1729 = vmul.f32 %v1726, %v1728
        %v1730 = vadd.f32 %v1729, -0.4999988
        %v1731 = vmul.f32 %v1726, %v1730
        %v1732 = vadd.f32 1.0, %v1731
        %v1733 = vmul.f32 %v1724, %v1724
        %v1734 = vmul.f32 %v1733, -0.00019511016
        %v1735 = vadd.f32 %v1734, 0.008332121
        %v1736 = vmul.f32 %v1733, %v1735
        %v1737 = vadd.f32 %v1736, -0.16666654
        %v1738 = vmul.f32 %v1733, %v1737
        %v1739 = vadd.f32 %v1738, 1.0
        %v1740 = vmul.f32 %v1739, %v1724
        %vm1741 = vweird.f32 %v180
        %v1742 = vadd.s32 %v1725, 3
        %v1743 = vand.u32 %v1742, 3
        %vm1744 = vcmp.lt.s32.totalorder %v1743, 2
        %vm1745 = vcmp.eq.s32.totalorder %v1743, 0
        %v1746 = vxor.u32 %v1740, 2147483648
        %v1747 = vsel %vm1745, %v1732, %v1746
        %vm1748 = vcmp.eq.s32.totalorder %v1743, 2
        %v1749 = vxor.u32 %v1732, 2147483648
        %v1750 = vsel %vm1748, %v1749, %v1740
        %v1751 = vsel %vm1744, %v1747, %v1750
        %v1752 = vsel %vm1741, nan, %v1751
        %v1753 = vand.u32 2147483647, %v181
        %vm1754 = vcmp.le.f32.partialorder %v1753, 0.7853982
        %vm1755 = vcmp.lt.s32.totalorder %v181, 0
        %v1756 = vand.u32 %v181, 2139095040
        %v1757 = vshrl.u32 %v1756, 23
        %v1758 = vsub.s32 %v1757, 127
        %v1759 = vand.u32 2147483647, %v181
        %v1760 = vand.u32 %v1759, 8388607
        %v1761 = vor.u32 %v1760, 8388608
        %v1762 = vsub.s32 0, %v1761
        %v1763 = vadd.s32 %v1758, 1
        %vm1764 = vcmp.gt.s32.totalorder %v1763, 0
        %v1765 = vsel %vm1764, %v1763, 0
        %v1766 = vshrl.u32 %v1765, 5
        %v1767 = vand.u32 %v1765, 31
        %v1768 = vsub.s32 32, %v1767
        %v1769 = vshrl.u32 683565275, %v1768
        %v1770 = vshll.u32 683565275, %v1767
        %v1771 = vshrl.u32 2475754826, %v1768
        %v1772 = vor.u32 %v1770, %v1771
        %v1773 = vshll.u32 2475754826, %v1767
        %v1774 = vshrl.u32 2131351028, %v1768
        %v1775 = vor.u32 %v1773, %v1774
        %v1776 = vshll.u32 2131351028, %v1767
        %v1777 = vshrl.u32 2102212464, %v1768
        %v1778 = vor.u32 %v1776, %v1777
        %v1779 = vshll.u32 2102212464, %v1767
        %v1780 = vshrl.u32 920167782, %v1768
        %v1781 = vor.u32 %v1779, %v1780
        %v1782 = vshll.u32 920167782, %v1767
        %v1783 = vshrl.u32 1326507024, %v1768
        %v1784 = vor.u32 %v1782, %v1783
        %vm1785 = vcmp.lt.s32.totalorder %v1766, 1
        %vm1786 = vcmp.lt.s32.totalorder %v1766, 2
        %vm1787 = vcmp.lt.s32.totalorder %v1766, 3
        %vm1788 = vcmp.lt.s32.totalorder %v1766, 4
        %v1789 = vsel %vm1785, %v1769, %v1772
        %v1790 = vsel %vm1788, %v1778, 2102212464
        %v1791 = vsel %vm1787, %v1775, %v1790
        %v1792 = vsel %vm1786, %v1789, %v1791
        %v1793 = vsel %vm1785, %v1772, %v1775
        %v1794 = vsel %vm1788, %v1781, 920167782
        %v1795 = vsel %vm1787, %v1778, %v1794
        %v1796 = vsel %vm1786, %v1793, %v1795
        %v1797 = vsel %vm1785, %v1775, %v1778
        %v1798 = vsel %vm1788, %v1784, 1326507024
        %v1799 = vsel %vm1787, %v1781, %v1798
        %v1800 = vsel %vm1786, %v1797, %v1799
        %v1801 = vshll.u32 %v1761, 8
        %v1802 = vand.u32 %v1801, 65535
        %v1803 = vshrl.u32 %v1801, 16
        %v1804 = vand.u32 %v1800, 65535
        %v1805 = vshrl.u32 %v1800, 16
        %v1806 = vmul.u32 %v1802, %v1804
        %v1807 = vmul.u32 %v1802, %v1805
        %v1808 = vmul.u32 %v1803, %v1804
        %v1809 = vmul.u32 %v1803, %v1805
        %v1810 = vshll.u32 %v1807, 16
        %v1811 = vshrl.u32 %v1807, 16
        %v1812 = vshll.u32 %v1808, 16
        %v1813 = vshrl.u32 %v1808, 16
        %vm1814 = vc.u32 %v1806, %v1810
        %v1815 = vsel %vm1814, 1, 0
        %v1816 = vadd.s32 %v1806, %v1810
        %v1817 = vadd.s32 %v1809, %v1815
        %vm1818 = vc.u32 %v1816, %v1812
        %v1819 = vsel %vm1818, 1, 0
        %v1820 = vadd.s32 %v1816, %v1812
        %v1821 = vadd.s32 %v1817, %v1819
        %v1822 = vadd.s32 %v1821, %v1811
        %v1823 = vadd.s32 %v1822, %v1813
        %v1824 = vand.u32 %v1801, 65535
        %v1825 = vshrl.u32 %v1801, 16
        %v1826 = vand.u32 %v1796, 65535
        %v1827 = vshrl.u32 %v1796, 16
        %v1828 = vmul.u32 %v1824, %v1826
        %v1829 = vmul.u32 %v1824, %v1827
        %v1830 = vmul.u32 %v1825, %v1826
        %v1831 = vmul.u32 %v1825, %v1827
        %v1832 = vshll.u32 %v1829, 16
        %v1833 = vshrl.u32 %v1829, 16
        %v1834 = vshll.u32 %v1830, 16
        %v1835 = vshrl.u32 %v1830, 16
        %vm1836 = vc.u32 %v1828, %v1832
        %v1837 = vsel %vm1836, 1, 0
        %v1838 = vadd.s32 %v1828, %v1832
        %v1839 = vadd.s32 %v1831, %v1837
        %vm1840 = vc.u32 %v1838, %v1834
        %v1841 = vsel %vm1840, 1, 0
        %v1842 = vadd.s32 %v1838, %v1834
        %v1843 = vadd.s32 %v1839, %v1841
        %v1844 = vadd.s32 %v1843, %v1833
        %v1845 = vadd.s32 %v1844, %v1835
        %v1846 = vmul.u32 %v1801, %v1792
        %v1847 = vadd.s32 %v1823, %v1842
        %vm1848 = vc.u32 %v1823, %v1842
        %v1849 = vadd.s32 %v1845, 1
        %v1850 = vsel %vm1848, %v1849, %v1845
        %v1851 = vadd.s32 %v1846, %v1850
        %v1852 = vadd.s32 %v1851, 536870912
        %v1853 = vshrl.u32 %v1852, 30
        %v1854 = vshll.u32 %v1853, 30
        %v1855 = vsub.s32 %v1851, %v1854
        %vm1856 = vcmp.lt.s32.totalorder %v1855, 0
        %v1857 = vsub.s32 0, %v1855
        %v1858 = vsel %vm1856, %v1857, %v1855
        %v1859 = vclz %v1858
        %v1860 = vsub.s32 %v1859, 2
        %vm1861 = vcmp.gt.s32.totalorder 0, %v1860
        %v1862 = vsel %vm1861, 0, %v1860
        %v1863 = vsub.s32 32, %v1862
        %v1864 = vshll.u32 %v1855, %v1862
        %v1865 = vshrl.u32 %v1847, %v1863
        %v1866 = vor.u32 %v1864, %v1865
        %v1867 = vsub.s32 4294967266, %v1862
        %v1868 = vadd.s32 %v1867, 127
        %v1869 = vshll.u32 %v1868, 23
        %v1870 = vor.u32 4788187, %v1869
        %v1871 = vand.u32 2147483647, %v1870
        %v1873 = vcvt.s32.f32 %v1866
        %v1874 = vmul.f32 %v1873, %v1871
        %v1875 = vxor.u32 %v1874, 2147483648
        %v1876 = vsel %vm1755, %v1875, %v1874
        %v1877 = vsub.s32 4, %v1853
        %v1878 = vsel %vm1755, %v1877, %v1853
        %v1879 = vsel %vm1754, %v181, %v1876
        %v1880 = vsel %vm1754, 0, %v1878
        %v1881 = vmul.f32 %v1879, %v1879
        %v1882 = vmul.f32 %v1881, -0.001358992
        %v1883 = vadd.f32 %v1882, 0.041655596
        %v1884 = vmul.f32 %v1881, %v1883
        %v1885 = vadd.f32 %v1884, -0.4999988
        %v1886 = vmul.f32 %v1881, %v1885
        %v1887 = vadd.f32 1.0, %v1886
        %v1888 = vmul.f32 %v1879, %v1879
        %v1889 = vmul.f32 %v1888, -0.00019511016
        %v1890 = vadd.f32 %v1889, 0.008332121
        %v1891 = vmul.f32 %v1888, %v1890
        %v1892 = vadd.f32 %v1891, -0.16666654
        %v1893 = vmul.f32 %v1888, %v1892
        %v1894 = vadd.f32 %v1893, 1.0
        %v1895 = vmul.f32 %v1894, %v1879
        %vm1896 = vweird.f32 %v181
        %v1897 = vadd.s32 %v1880, 3
        %v1898 = vand.u32 %v1897, 3
        %vm1899 = vcmp.lt.s32.totalorder %v1898, 2
        %vm1900 = vcmp.eq.s32.totalorder %v1898, 0
        %v1901 = vxor.u32 %v1895, 2147483648
        %v1902 = vsel %vm1900, %v1887, %v1901
        %vm1903 = vcmp.eq.s32.totalorder %v1898, 2
        %v1904 = vxor.u32 %v1887, 2147483648
        %v1905 = vsel %vm1903, %v1904, %v1895
        %v1906 = vsel %vm1899, %v1902, %v1905
        %v1907 = vsel %vm1896, nan, %v1906
        %v1908 = vand.u32 2147483647, %v182
        %vm1909 = vcmp.le.f32.partialorder %v1908, 0.7853982
        %vm1910 = vcmp.lt.s32.totalorder %v182, 0
        %v1911 = vand.u32 %v182, 2139095040
        %v1912 = vshrl.u32 %v1911, 23
        %v1913 = vsub.s32 %v1912, 127
        %v1914 = vand.u32 2147483647, %v182
        %v1915 = vand.u32 %v1914, 8388607
        %v1916 = vor.u32 %v1915, 8388608
        %v1917 = vsub.s32 0, %v1916
        %v1918 = vadd.s32 %v1913, 1
        %vm1919 = vcmp.gt.s32.totalorder %v1918, 0
        %v1920 = vsel %vm1919, %v1918, 0
        %v1921 = vshrl.u32 %v1920, 5
        %v1922 = vand.u32 %v1920, 31
        %v1923 = vsub.s32 32, %v1922
        %v1924 = vshrl.u32 683565275, %v1923
        %v1925 = vshll.u32 683565275, %v1922
        %v1926 = vshrl.u32 2475754826, %v1923
        %v1927 = vor.u32 %v1925, %v1926
        %v1928 = vshll.u32 2475754826, %v1922
        %v1929 = vshrl.u32 2131351028, %v1923
        %v1930 = vor.u32 %v1928, %v1929
        %v1931 = vshll.u32 2131351028, %v1922
        %v1932 = vshrl.u32 2102212464, %v1923
        %v1933 = vor.u32 %v1931, %v1932
        %v1934 = vshll.u32 2102212464, %v1922
        %v1935 = vshrl.u32 920167782, %v1923
        %v1936 = vor.u32 %v1934, %v1935
        %v1937 = vshll.u32 920167782, %v1922
        %v1938 = vshrl.u32 1326507024, %v1923
        %v1939 = vor.u32 %v1937, %v1938
        %vm1940 = vcmp.lt.s32.totalorder %v1921, 1
        %vm1941 = vcmp.lt.s32.totalorder %v1921, 2
        %vm1942 = vcmp.lt.s32.totalorder %v1921, 3
        %vm1943 = vcmp.lt.s32.totalorder %v1921, 4
        %v1944 = vsel %vm1940, %v1924, %v1927
        %v1945 = vsel %vm1943, %v1933, 2102212464
        %v1946 = vsel %vm1942, %v1930, %v1945
        %v1947 = vsel %vm1941, %v1944, %v1946
        %v1948 = vsel %vm1940, %v1927, %v1930
        %v1949 = vsel %vm1943, %v1936, 920167782
        %v1950 = vsel %vm1942, %v1933, %v1949
        %v1951 = vsel %vm1941, %v1948, %v1950
        %v1952 = vsel %vm1940, %v1930, %v1933
        %v1953 = vsel %vm1943, %v1939, 1326507024
        %v1954 = vsel %vm1942, %v1936, %v1953
        %v1955 = vsel %vm1941, %v1952, %v1954
        %v1956 = vshll.u32 %v1916, 8
        %v1957 = vand.u32 %v1956, 65535
        %v1958 = vshrl.u32 %v1956, 16
        %v1959 = vand.u32 %v1955, 65535
        %v1960 = vshrl.u32 %v1955, 16
        %v1961 = vmul.u32 %v1957, %v1959
        %v1962 = vmul.u32 %v1957, %v1960
        %v1963 = vmul.u32 %v1958, %v1959
        %v1964 = vmul.u32 %v1958, %v1960
        %v1965 = vshll.u32 %v1962, 16
        %v1966 = vshrl.u32 %v1962, 16
        %v1967 = vshll.u32 %v1963, 16
        %v1968 = vshrl.u32 %v1963, 16
        %vm1969 = vc.u32 %v1961, %v1965
        %v1970 = vsel %vm1969, 1, 0
        %v1971 = vadd.s32 %v1961, %v1965
        %v1972 = vadd.s32 %v1964, %v1970
        %vm1973 = vc.u32 %v1971, %v1967
        %v1974 = vsel %vm1973, 1, 0
        %v1975 = vadd.s32 %v1971, %v1967
        %v1976 = vadd.s32 %v1972, %v1974
        %v1977 = vadd.s32 %v1976, %v1966
        %v1978 = vadd.s32 %v1977, %v1968
        %v1979 = vand.u32 %v1956, 65535
        %v1980 = vshrl.u32 %v1956, 16
        %v1981 = vand.u32 %v1951, 65535
        %v1982 = vshrl.u32 %v1951, 16
        %v1983 = vmul.u32 %v1979, %v1981
        %v1984 = vmul.u32 %v1979, %v1982
        %v1985 = vmul.u32 %v1980, %v1981
        %v1986 = vmul.u32 %v1980, %v1982
        %v1987 = vshll.u32 %v1984, 16
        %v1988 = vshrl.u32 %v1984, 16
        %v1989 = vshll.u32 %v1985, 16
        %v1990 = vshrl.u32 %v1985, 16
        %vm1991 = vc.u32 %v1983, %v1987
        %v1992 = vsel %vm1991, 1, 0
        %v1993 = vadd.s32 %v1983, %v1987
        %v1994 = vadd.s32 %v1986, %v1992
        %vm1995 = vc.u32 %v1993, %v1989
        %v1996 = vsel %vm1995, 1, 0
        %v1997 = vadd.s32 %v1993, %v1989
        %v1998 = vadd.s32 %v1994, %v1996
        %v1999 = vadd.s32 %v1998, %v1988
        %v2000 = vadd.s32 %v1999, %v1990
        %v2001 = vmul.u32 %v1956, %v1947
        %v2002 = vadd.s32 %v1978, %v1997
        %vm2003 = vc.u32 %v1978, %v1997
        %v2004 = vadd.s32 %v2000, 1
        %v2005 = vsel %vm2003, %v2004, %v2000
        %v2006 = vadd.s32 %v2001, %v2005
        %v2007 = vadd.s32 %v2006, 536870912
        %v2008 = vshrl.u32 %v2007, 30
        %v2009 = vshll.u32 %v2008, 30
        %v2010 = vsub.s32 %v2006, %v2009
        %vm2011 = vcmp.lt.s32.totalorder %v2010, 0
        %v2012 = vsub.s32 0, %v2010
        %v2013 = vsel %vm2011, %v2012, %v2010
        %v2014 = vclz %v2013
        %v2015 = vsub.s32 %v2014, 2
        %vm2016 = vcmp.gt.s32.totalorder 0, %v2015
        %v2017 = vsel %vm2016, 0, %v2015
        %v2018 = vsub.s32 32, %v2017
        %v2019 = vshll.u32 %v2010, %v2017
        %v2020 = vshrl.u32 %v2002, %v2018
        %v2021 = vor.u32 %v2019, %v2020
        %v2022 = vsub.s32 4294967266, %v2017
        %v2023 = vadd.s32 %v2022, 127
        %v2024 = vshll.u32 %v2023, 23
        %v2025 = vor.u32 4788187, %v2024
        %v2026 = vand.u32 2147483647, %v2025
        %v2028 = vcvt.s32.f32 %v2021
        %v2029 = vmul.f32 %v2028, %v2026
        %v2030 = vxor.u32 %v2029, 2147483648
        %v2031 = vsel %vm1910, %v2030, %v2029
        %v2032 = vsub.s32 4, %v2008
        %v2033 = vsel %vm1910, %v2032, %v2008
        %v2034 = vsel %vm1909, %v182, %v2031
        %v2035 = vsel %vm1909, 0, %v2033
        %v2036 = vmul.f32 %v2034, %v2034
        %v2037 = vmul.f32 %v2036, -0.001358992
        %v2038 = vadd.f32 %v2037, 0.041655596
        %v2039 = vmul.f32 %v2036, %v2038
        %v2040 = vadd.f32 %v2039, -0.4999988
        %v2041 = vmul.f32 %v2036, %v2040
        %v2042 = vadd.f32 1.0, %v2041
        %v2043 = vmul.f32 %v2034, %v2034
        %v2044 = vmul.f32 %v2043, -0.00019511016
        %v2045 = vadd.f32 %v2044, 0.008332121
        %v2046 = vmul.f32 %v2043, %v2045
        %v2047 = vadd.f32 %v2046, -0.16666654
        %v2048 = vmul.f32 %v2043, %v2047
        %v2049 = vadd.f32 %v2048, 1.0
        %v2050 = vmul.f32 %v2049, %v2034
        %vm2051 = vweird.f32 %v182
        %v2052 = vadd.s32 %v2035, 3
        %v2053 = vand.u32 %v2052, 3
        %vm2054 = vcmp.lt.s32.totalorder %v2053, 2
        %vm2055 = vcmp.eq.s32.totalorder %v2053, 0
        %v2056 = vxor.u32 %v2050, 2147483648
        %v2057 = vsel %vm2055, %v2042, %v2056
        %vm2058 = vcmp.eq.s32.totalorder %v2053, 2
        %v2059 = vxor.u32 %v2042, 2147483648
        %v2060 = vsel %vm2058, %v2059, %v2050
        %v2061 = vsel %vm2054, %v2057, %v2060
        %v2062 = vsel %vm2051, nan, %v2061
        %v2063 = vand.u32 2147483647, %v183
        %vm2064 = vcmp.le.f32.partialorder %v2063, 0.7853982
        %vm2065 = vcmp.lt.s32.totalorder %v183, 0
        %v2066 = vand.u32 %v183, 2139095040
        %v2067 = vshrl.u32 %v2066, 23
        %v2068 = vsub.s32 %v2067, 127
        %v2069 = vand.u32 2147483647, %v183
        %v2070 = vand.u32 %v2069, 8388607
        %v2071 = vor.u32 %v2070, 8388608
        %v2072 = vsub.s32 0, %v2071
        %v2073 = vadd.s32 %v2068, 1
        %vm2074 = vcmp.gt.s32.totalorder %v2073, 0
        %v2075 = vsel %vm2074, %v2073, 0
        %v2076 = vshrl.u32 %v2075, 5
        %v2077 = vand.u32 %v2075, 31
        %v2078 = vsub.s32 32, %v2077
        %v2079 = vshrl.u32 683565275, %v2078
        %v2080 = vshll.u32 683565275, %v2077
        %v2081 = vshrl.u32 2475754826, %v2078
        %v2082 = vor.u32 %v2080, %v2081
        %v2083 = vshll.u32 2475754826, %v2077
        %v2084 = vshrl.u32 2131351028, %v2078
        %v2085 = vor.u32 %v2083, %v2084
        %v2086 = vshll.u32 2131351028, %v2077
        %v2087 = vshrl.u32 2102212464, %v2078
        %v2088 = vor.u32 %v2086, %v2087
        %v2089 = vshll.u32 2102212464, %v2077
        %v2090 = vshrl.u32 920167782, %v2078
        %v2091 = vor.u32 %v2089, %v2090
        %v2092 = vshll.u32 920167782, %v2077
        %v2093 = vshrl.u32 1326507024, %v2078
        %v2094 = vor.u32 %v2092, %v2093
        %vm2095 = vcmp.lt.s32.totalorder %v2076, 1
        %vm2096 = vcmp.lt.s32.totalorder %v2076, 2
        %vm2097 = vcmp.lt.s32.totalorder %v2076, 3
        %vm2098 = vcmp.lt.s32.totalorder %v2076, 4
        %v2099 = vsel %vm2095, %v2079, %v2082
        %v2100 = vsel %vm2098, %v2088, 2102212464
        %v2101 = vsel %vm2097, %v2085, %v2100
        %v2102 = vsel %vm2096, %v2099, %v2101
        %v2103 = vsel %vm2095, %v2082, %v2085
        %v2104 = vsel %vm2098, %v2091, 920167782
        %v2105 = vsel %vm2097, %v2088, %v2104
        %v2106 = vsel %vm2096, %v2103, %v2105
        %v2107 = vsel %vm2095, %v2085, %v2088
        %v2108 = vsel %vm2098, %v2094, 1326507024
        %v2109 = vsel %vm2097, %v2091, %v2108
        %v2110 = vsel %vm2096, %v2107, %v2109
        %v2111 = vshll.u32 %v2071, 8
        %v2112 = vand.u32 %v2111, 65535
        %v2113 = vshrl.u32 %v2111, 16
        %v2114 = vand.u32 %v2110, 65535
        %v2115 = vshrl.u32 %v2110, 16
        %v2116 = vmul.u32 %v2112, %v2114
        %v2117 = vmul.u32 %v2112, %v2115
        %v2118 = vmul.u32 %v2113, %v2114
        %v2119 = vmul.u32 %v2113, %v2115
        %v2120 = vshll.u32 %v2117, 16
        %v2121 = vshrl.u32 %v2117, 16
        %v2122 = vshll.u32 %v2118, 16
        %v2123 = vshrl.u32 %v2118, 16
        %vm2124 = vc.u32 %v2116, %v2120
        %v2125 = vsel %vm2124, 1, 0
        %v2126 = vadd.s32 %v2116, %v2120
        %v2127 = vadd.s32 %v2119, %v2125
        %vm2128 = vc.u32 %v2126, %v2122
        %v2129 = vsel %vm2128, 1, 0
        %v2130 = vadd.s32 %v2126, %v2122
        %v2131 = vadd.s32 %v2127, %v2129
        %v2132 = vadd.s32 %v2131, %v2121
        %v2133 = vadd.s32 %v2132, %v2123
        %v2134 = vand.u32 %v2111, 65535
        %v2135 = vshrl.u32 %v2111, 16
        %v2136 = vand.u32 %v2106, 65535
        %v2137 = vshrl.u32 %v2106, 16
        %v2138 = vmul.u32 %v2134, %v2136
        %v2139 = vmul.u32 %v2134, %v2137
        %v2140 = vmul.u32 %v2135, %v2136
        %v2141 = vmul.u32 %v2135, %v2137
        %v2142 = vshll.u32 %v2139, 16
        %v2143 = vshrl.u32 %v2139, 16
        %v2144 = vshll.u32 %v2140, 16
        %v2145 = vshrl.u32 %v2140, 16
        %vm2146 = vc.u32 %v2138, %v2142
        %v2147 = vsel %vm2146, 1, 0
        %v2148 = vadd.s32 %v2138, %v2142
        %v2149 = vadd.s32 %v2141, %v2147
        %vm2150 = vc.u32 %v2148, %v2144
        %v2151 = vsel %vm2150, 1, 0
        %v2152 = vadd.s32 %v2148, %v2144
        %v2153 = vadd.s32 %v2149, %v2151
        %v2154 = vadd.s32 %v2153, %v2143
        %v2155 = vadd.s32 %v2154, %v2145
        %v2156 = vmul.u32 %v2111, %v2102
        %v2157 = vadd.s32 %v2133, %v2152
        %vm2158 = vc.u32 %v2133, %v2152
        %v2159 = vadd.s32 %v2155, 1
        %v2160 = vsel %vm2158, %v2159, %v2155
        %v2161 = vadd.s32 %v2156, %v2160
        %v2162 = vadd.s32 %v2161, 536870912
        %v2163 = vshrl.u32 %v2162, 30
        %v2164 = vshll.u32 %v2163, 30
        %v2165 = vsub.s32 %v2161, %v2164
        %vm2166 = vcmp.lt.s32.totalorder %v2165, 0
        %v2167 = vsub.s32 0, %v2165
        %v2168 = vsel %vm2166, %v2167, %v2165
        %v2169 = vclz %v2168
        %v2170 = vsub.s32 %v2169, 2
        %vm2171 = vcmp.gt.s32.totalorder 0, %v2170
        %v2172 = vsel %vm2171, 0, %v2170
        %v2173 = vsub.s32 32, %v2172
        %v2174 = vshll.u32 %v2165, %v2172
        %v2175 = vshrl.u32 %v2157, %v2173
        %v2176 = vor.u32 %v2174, %v2175
        %v2177 = vsub.s32 4294967266, %v2172
        %v2178 = vadd.s32 %v2177, 127
        %v2179 = vshll.u32 %v2178, 23
        %v2180 = vor.u32 4788187, %v2179
        %v2181 = vand.u32 2147483647, %v2180
        %v2183 = vcvt.s32.f32 %v2176
        %v2184 = vmul.f32 %v2183, %v2181
        %v2185 = vxor.u32 %v2184, 2147483648
        %v2186 = vsel %vm2065, %v2185, %v2184
        %v2187 = vsub.s32 4, %v2163
        %v2188 = vsel %vm2065, %v2187, %v2163
        %v2189 = vsel %vm2064, %v183, %v2186
        %v2190 = vsel %vm2064, 0, %v2188
        %v2191 = vmul.f32 %v2189, %v2189
        %v2192 = vmul.f32 %v2191, -0.001358992
        %v2193 = vadd.f32 %v2192, 0.041655596
        %v2194 = vmul.f32 %v2191, %v2193
        %v2195 = vadd.f32 %v2194, -0.4999988
        %v2196 = vmul.f32 %v2191, %v2195
        %v2197 = vadd.f32 1.0, %v2196
        %v2198 = vmul.f32 %v2189, %v2189
        %v2199 = vmul.f32 %v2198, -0.00019511016
        %v2200 = vadd.f32 %v2199, 0.008332121
        %v2201 = vmul.f32 %v2198, %v2200
        %v2202 = vadd.f32 %v2201, -0.16666654
        %v2203 = vmul.f32 %v2198, %v2202
        %v2204 = vadd.f32 %v2203, 1.0
        %v2205 = vmul.f32 %v2204, %v2189
        %vm2206 = vweird.f32 %v183
        %v2207 = vadd.s32 %v2190, 3
        %v2208 = vand.u32 %v2207, 3
        %vm2209 = vcmp.lt.s32.totalorder %v2208, 2
        %vm2210 = vcmp.eq.s32.totalorder %v2208, 0
        %v2211 = vxor.u32 %v2205, 2147483648
        %v2212 = vsel %vm2210, %v2197, %v2211
        %vm2213 = vcmp.eq.s32.totalorder %v2208, 2
        %v2214 = vxor.u32 %v2197, 2147483648
        %v2215 = vsel %vm2213, %v2214, %v2205
        %v2216 = vsel %vm2209, %v2212, %v2215
        %v2217 = vsel %vm2206, nan, %v2216
        %v2218 = vand.u32 2147483647, %v184
        %vm2219 = vcmp.le.f32.partialorder %v2218, 0.7853982
        %vm2220 = vcmp.lt.s32.totalorder %v184, 0
        %v2221 = vand.u32 %v184, 2139095040
        %v2222 = vshrl.u32 %v2221, 23
        %v2223 = vsub.s32 %v2222, 127
        %v2224 = vand.u32 2147483647, %v184
        %v2225 = vand.u32 %v2224, 8388607
        %v2226 = vor.u32 %v2225, 8388608
        %v2227 = vsub.s32 0, %v2226
        %v2228 = vadd.s32 %v2223, 1
        %vm2229 = vcmp.gt.s32.totalorder %v2228, 0
        %v2230 = vsel %vm2229, %v2228, 0
        %v2231 = vshrl.u32 %v2230, 5
        %v2232 = vand.u32 %v2230, 31
        %v2233 = vsub.s32 32, %v2232
        %v2234 = vshrl.u32 683565275, %v2233
        %v2235 = vshll.u32 683565275, %v2232
        %v2236 = vshrl.u32 2475754826, %v2233
        %v2237 = vor.u32 %v2235, %v2236
        %v2238 = vshll.u32 2475754826, %v2232
        %v2239 = vshrl.u32 2131351028, %v2233
        %v2240 = vor.u32 %v2238, %v2239
        %v2241 = vshll.u32 2131351028, %v2232
        %v2242 = vshrl.u32 2102212464, %v2233
        %v2243 = vor.u32 %v2241, %v2242
        %v2244 = vshll.u32 2102212464, %v2232
        %v2245 = vshrl.u32 920167782, %v2233
        %v2246 = vor.u32 %v2244, %v2245
        %v2247 = vshll.u32 920167782, %v2232
        %v2248 = vshrl.u32 1326507024, %v2233
        %v2249 = vor.u32 %v2247, %v2248
        %vm2250 = vcmp.lt.s32.totalorder %v2231, 1
        %vm2251 = vcmp.lt.s32.totalorder %v2231, 2
        %vm2252 = vcmp.lt.s32.totalorder %v2231, 3
        %vm2253 = vcmp.lt.s32.totalorder %v2231, 4
        %v2254 = vsel %vm2250, %v2234, %v2237
        %v2255 = vsel %vm2253, %v2243, 2102212464
        %v2256 = vsel %vm2252, %v2240, %v2255
        %v2257 = vsel %vm2251, %v2254, %v2256
        %v2258 = vsel %vm2250, %v2237, %v2240
        %v2259 = vsel %vm2253, %v2246, 920167782
        %v2260 = vsel %vm2252, %v2243, %v2259
        %v2261 = vsel %vm2251, %v2258, %v2260
        %v2262 = vsel %vm2250, %v2240, %v2243
        %v2263 = vsel %vm2253, %v2249, 1326507024
        %v2264 = vsel %vm2252, %v2246, %v2263
        %v2265 = vsel %vm2251, %v2262, %v2264
        %v2266 = vshll.u32 %v2226, 8
        %v2267 = vand.u32 %v2266, 65535
        %v2268 = vshrl.u32 %v2266, 16
        %v2269 = vand.u32 %v2265, 65535
        %v2270 = vshrl.u32 %v2265, 16
        %v2271 = vmul.u32 %v2267, %v2269
        %v2272 = vmul.u32 %v2267, %v2270
        %v2273 = vmul.u32 %v2268, %v2269
        %v2274 = vmul.u32 %v2268, %v2270
        %v2275 = vshll.u32 %v2272, 16
        %v2276 = vshrl.u32 %v2272, 16
        %v2277 = vshll.u32 %v2273, 16
        %v2278 = vshrl.u32 %v2273, 16
        %vm2279 = vc.u32 %v2271, %v2275
        %v2280 = vsel %vm2279, 1, 0
        %v2281 = vadd.s32 %v2271, %v2275
        %v2282 = vadd.s32 %v2274, %v2280
        %vm2283 = vc.u32 %v2281, %v2277
        %v2284 = vsel %vm2283, 1, 0
        %v2285 = vadd.s32 %v2281, %v2277
        %v2286 = vadd.s32 %v2282, %v2284
        %v2287 = vadd.s32 %v2286, %v2276
        %v2288 = vadd.s32 %v2287, %v2278
        %v2289 = vand.u32 %v2266, 65535
        %v2290 = vshrl.u32 %v2266, 16
        %v2291 = vand.u32 %v2261, 65535
        %v2292 = vshrl.u32 %v2261, 16
        %v2293 = vmul.u32 %v2289, %v2291
        %v2294 = vmul.u32 %v2289, %v2292
        %v2295 = vmul.u32 %v2290, %v2291
        %v2296 = vmul.u32 %v2290, %v2292
        %v2297 = vshll.u32 %v2294, 16
        %v2298 = vshrl.u32 %v2294, 16
        %v2299 = vshll.u32 %v2295, 16
        %v2300 = vshrl.u32 %v2295, 16
        %vm2301 = vc.u32 %v2293, %v2297
        %v2302 = vsel %vm2301, 1, 0
        %v2303 = vadd.s32 %v2293, %v2297
        %v2304 = vadd.s32 %v2296, %v2302
        %vm2305 = vc.u32 %v2303, %v2299
        %v2306 = vsel %vm2305, 1, 0
        %v2307 = vadd.s32 %v2303, %v2299
        %v2308 = vadd.s32 %v2304, %v2306
        %v2309 = vadd.s32 %v2308, %v2298
        %v2310 = vadd.s32 %v2309, %v2300
        %v2311 = vmul.u32 %v2266, %v2257
        %v2312 = vadd.s32 %v2288, %v2307
        %vm2313 = vc.u32 %v2288, %v2307
        %v2314 = vadd.s32 %v2310, 1
        %v2315 = vsel %vm2313, %v2314, %v2310
        %v2316 = vadd.s32 %v2311, %v2315
        %v2317 = vadd.s32 %v2316, 536870912
        %v2318 = vshrl.u32 %v2317, 30
        %v2319 = vshll.u32 %v2318, 30
        %v2320 = vsub.s32 %v2316, %v2319
        %vm2321 = vcmp.lt.s32.totalorder %v2320, 0
        %v2322 = vsub.s32 0, %v2320
        %v2323 = vsel %vm2321, %v2322, %v2320
        %v2324 = vclz %v2323
        %v2325 = vsub.s32 %v2324, 2
        %vm2326 = vcmp.gt.s32.totalorder 0, %v2325
        %v2327 = vsel %vm2326, 0, %v2325
        %v2328 = vsub.s32 32, %v2327
        %v2329 = vshll.u32 %v2320, %v2327
        %v2330 = vshrl.u32 %v2312, %v2328
        %v2331 = vor.u32 %v2329, %v2330
        %v2332 = vsub.s32 4294967266, %v2327
        %v2333 = vadd.s32 %v2332, 127
        %v2334 = vshll.u32 %v2333, 23
        %v2335 = vor.u32 4788187, %v2334
        %v2336 = vand.u32 2147483647, %v2335
        %v2338 = vcvt.s32.f32 %v2331
        %v2339 = vmul.f32 %v2338, %v2336
        %v2340 = vxor.u32 %v2339, 2147483648
        %v2341 = vsel %vm2220, %v2340, %v2339
        %v2342 = vsub.s32 4, %v2318
        %v2343 = vsel %vm2220, %v2342, %v2318
        %v2344 = vsel %vm2219, %v184, %v2341
        %v2345 = vsel %vm2219, 0, %v2343
        %v2346 = vmul.f32 %v2344, %v2344
        %v2347 = vmul.f32 %v2346, -0.001358992
        %v2348 = vadd.f32 %v2347, 0.041655596
        %v2349 = vmul.f32 %v2346, %v2348
        %v2350 = vadd.f32 %v2349, -0.4999988
        %v2351 = vmul.f32 %v2346, %v2350
        %v2352 = vadd.f32 1.0, %v2351
        %v2353 = vmul.f32 %v2344, %v2344
        %v2354 = vmul.f32 %v2353, -0.00019511016
        %v2355 = vadd.f32 %v2354, 0.008332121
        %v2356 = vmul.f32 %v2353, %v2355
        %v2357 = vadd.f32 %v2356, -0.16666654
        %v2358 = vmul.f32 %v2353, %v2357
        %v2359 = vadd.f32 %v2358, 1.0
        %v2360 = vmul.f32 %v2359, %v2344
        %vm2361 = vweird.f32 %v184
        %v2362 = vadd.s32 %v2345, 3
        %v2363 = vand.u32 %v2362, 3
        %vm2364 = vcmp.lt.s32.totalorder %v2363, 2
        %vm2365 = vcmp.eq.s32.totalorder %v2363, 0
        %v2366 = vxor.u32 %v2360, 2147483648
        %v2367 = vsel %vm2365, %v2352, %v2366
        %vm2368 = vcmp.eq.s32.totalorder %v2363, 2
        %v2369 = vxor.u32 %v2352, 2147483648
        %v2370 = vsel %vm2368, %v2369, %v2360
        %v2371 = vsel %vm2364, %v2367, %v2370
        %v2372 = vsel %vm2361, nan, %v2371
        %v2373 = vand.u32 2147483647, %v185
        %vm2374 = vcmp.le.f32.partialorder %v2373, 0.7853982
        %vm2375 = vcmp.lt.s32.totalorder %v185, 0
        %v2376 = vand.u32 %v185, 2139095040
        %v2377 = vshrl.u32 %v2376, 23
        %v2378 = vsub.s32 %v2377, 127
        %v2379 = vand.u32 2147483647, %v185
        %v2380 = vand.u32 %v2379, 8388607
        %v2381 = vor.u32 %v2380, 8388608
        %v2382 = vsub.s32 0, %v2381
        %v2383 = vadd.s32 %v2378, 1
        %vm2384 = vcmp.gt.s32.totalorder %v2383, 0
        %v2385 = vsel %vm2384, %v2383, 0
        %v2386 = vshrl.u32 %v2385, 5
        %v2387 = vand.u32 %v2385, 31
        %v2388 = vsub.s32 32, %v2387
        %v2389 = vshrl.u32 683565275, %v2388
        %v2390 = vshll.u32 683565275, %v2387
        %v2391 = vshrl.u32 2475754826, %v2388
        %v2392 = vor.u32 %v2390, %v2391
        %v2393 = vshll.u32 2475754826, %v2387
        %v2394 = vshrl.u32 2131351028, %v2388
        %v2395 = vor.u32 %v2393, %v2394
        %v2396 = vshll.u32 2131351028, %v2387
        %v2397 = vshrl.u32 2102212464, %v2388
        %v2398 = vor.u32 %v2396, %v2397
        %v2399 = vshll.u32 2102212464, %v2387
        %v2400 = vshrl.u32 920167782, %v2388
        %v2401 = vor.u32 %v2399, %v2400
        %v2402 = vshll.u32 920167782, %v2387
        %v2403 = vshrl.u32 1326507024, %v2388
        %v2404 = vor.u32 %v2402, %v2403
        %vm2405 = vcmp.lt.s32.totalorder %v2386, 1
        %vm2406 = vcmp.lt.s32.totalorder %v2386, 2
        %vm2407 = vcmp.lt.s32.totalorder %v2386, 3
        %vm2408 = vcmp.lt.s32.totalorder %v2386, 4
        %v2409 = vsel %vm2405, %v2389, %v2392
        %v2410 = vsel %vm2408, %v2398, 2102212464
        %v2411 = vsel %vm2407, %v2395, %v2410
        %v2412 = vsel %vm2406, %v2409, %v2411
        %v2413 = vsel %vm2405, %v2392, %v2395
        %v2414 = vsel %vm2408, %v2401, 920167782
        %v2415 = vsel %vm2407, %v2398, %v2414
        %v2416 = vsel %vm2406, %v2413, %v2415
        %v2417 = vsel %vm2405, %v2395, %v2398
        %v2418 = vsel %vm2408, %v2404, 1326507024
        %v2419 = vsel %vm2407, %v2401, %v2418
        %v2420 = vsel %vm2406, %v2417, %v2419
        %v2421 = vshll.u32 %v2381, 8
        %v2422 = vand.u32 %v2421, 65535
        %v2423 = vshrl.u32 %v2421, 16
        %v2424 = vand.u32 %v2420, 65535
        %v2425 = vshrl.u32 %v2420, 16
        %v2426 = vmul.u32 %v2422, %v2424
        %v2427 = vmul.u32 %v2422, %v2425
        %v2428 = vmul.u32 %v2423, %v2424
        %v2429 = vmul.u32 %v2423, %v2425
        %v2430 = vshll.u32 %v2427, 16
        %v2431 = vshrl.u32 %v2427, 16
        %v2432 = vshll.u32 %v2428, 16
        %v2433 = vshrl.u32 %v2428, 16
        %vm2434 = vc.u32 %v2426, %v2430
        %v2435 = vsel %vm2434, 1, 0
        %v2436 = vadd.s32 %v2426, %v2430
        %v2437 = vadd.s32 %v2429, %v2435
        %vm2438 = vc.u32 %v2436, %v2432
        %v2439 = vsel %vm2438, 1, 0
        %v2440 = vadd.s32 %v2436, %v2432
        %v2441 = vadd.s32 %v2437, %v2439
        %v2442 = vadd.s32 %v2441, %v2431
        %v2443 = vadd.s32 %v2442, %v2433
        %v2444 = vand.u32 %v2421, 65535
        %v2445 = vshrl.u32 %v2421, 16
        %v2446 = vand.u32 %v2416, 65535
        %v2447 = vshrl.u32 %v2416, 16
        %v2448 = vmul.u32 %v2444, %v2446
        %v2449 = vmul.u32 %v2444, %v2447
        %v2450 = vmul.u32 %v2445, %v2446
        %v2451 = vmul.u32 %v2445, %v2447
        %v2452 = vshll.u32 %v2449, 16
        %v2453 = vshrl.u32 %v2449, 16
        %v2454 = vshll.u32 %v2450, 16
        %v2455 = vshrl.u32 %v2450, 16
        %vm2456 = vc.u32 %v2448, %v2452
        %v2457 = vsel %vm2456, 1, 0
        %v2458 = vadd.s32 %v2448, %v2452
        %v2459 = vadd.s32 %v2451, %v2457
        %vm2460 = vc.u32 %v2458, %v2454
        %v2461 = vsel %vm2460, 1, 0
        %v2462 = vadd.s32 %v2458, %v2454
        %v2463 = vadd.s32 %v2459, %v2461
        %v2464 = vadd.s32 %v2463, %v2453
        %v2465 = vadd.s32 %v2464, %v2455
        %v2466 = vmul.u32 %v2421, %v2412
        %v2467 = vadd.s32 %v2443, %v2462
        %vm2468 = vc.u32 %v2443, %v2462
        %v2469 = vadd.s32 %v2465, 1
        %v2470 = vsel %vm2468, %v2469, %v2465
        %v2471 = vadd.s32 %v2466, %v2470
        %v2472 = vadd.s32 %v2471, 536870912
        %v2473 = vshrl.u32 %v2472, 30
        %v2474 = vshll.u32 %v2473, 30
        %v2475 = vsub.s32 %v2471, %v2474
        %vm2476 = vcmp.lt.s32.totalorder %v2475, 0
        %v2477 = vsub.s32 0, %v2475
        %v2478 = vsel %vm2476, %v2477, %v2475
        %v2479 = vclz %v2478
        %v2480 = vsub.s32 %v2479, 2
        %vm2481 = vcmp.gt.s32.totalorder 0, %v2480
        %v2482 = vsel %vm2481, 0, %v2480
        %v2483 = vsub.s32 32, %v2482
        %v2484 = vshll.u32 %v2475, %v2482
        %v2485 = vshrl.u32 %v2467, %v2483
        %v2486 = vor.u32 %v2484, %v2485
        %v2487 = vsub.s32 4294967266, %v2482
        %v2488 = vadd.s32 %v2487, 127
        %v2489 = vshll.u32 %v2488, 23
        %v2490 = vor.u32 4788187, %v2489
        %v2491 = vand.u32 2147483647, %v2490
        %v2493 = vcvt.s32.f32 %v2486
        %v2494 = vmul.f32 %v2493, %v2491
        %v2495 = vxor.u32 %v2494, 2147483648
        %v2496 = vsel %vm2375, %v2495, %v2494
        %v2497 = vsub.s32 4, %v2473
        %v2498 = vsel %vm2375, %v2497, %v2473
        %v2499 = vsel %vm2374, %v185, %v2496
        %v2500 = vsel %vm2374, 0, %v2498
        %v2501 = vmul.f32 %v2499, %v2499
        %v2502 = vmul.f32 %v2501, -0.001358992
        %v2503 = vadd.f32 %v2502, 0.041655596
        %v2504 = vmul.f32 %v2501, %v2503
        %v2505 = vadd.f32 %v2504, -0.4999988
        %v2506 = vmul.f32 %v2501, %v2505
        %v2507 = vadd.f32 1.0, %v2506
        %v2508 = vmul.f32 %v2499, %v2499
        %v2509 = vmul.f32 %v2508, -0.00019511016
        %v2510 = vadd.f32 %v2509, 0.008332121
        %v2511 = vmul.f32 %v2508, %v2510
        %v2512 = vadd.f32 %v2511, -0.16666654
        %v2513 = vmul.f32 %v2508, %v2512
        %v2514 = vadd.f32 %v2513, 1.0
        %v2515 = vmul.f32 %v2514, %v2499
        %vm2516 = vweird.f32 %v185
        %v2517 = vadd.s32 %v2500, 3
        %v2518 = vand.u32 %v2517, 3
        %vm2519 = vcmp.lt.s32.totalorder %v2518, 2
        %vm2520 = vcmp.eq.s32.totalorder %v2518, 0
        %v2521 = vxor.u32 %v2515, 2147483648
        %v2522 = vsel %vm2520, %v2507, %v2521
        %vm2523 = vcmp.eq.s32.totalorder %v2518, 2
        %v2524 = vxor.u32 %v2507, 2147483648
        %v2525 = vsel %vm2523, %v2524, %v2515
        %v2526 = vsel %vm2519, %v2522, %v2525
        %v2527 = vsel %vm2516, nan, %v2526
        %v2528 = vand.u32 2147483647, %v186
        %vm2529 = vcmp.le.f32.partialorder %v2528, 0.7853982
        %vm2530 = vcmp.lt.s32.totalorder %v186, 0
        %v2531 = vand.u32 %v186, 2139095040
        %v2532 = vshrl.u32 %v2531, 23
        %v2533 = vsub.s32 %v2532, 127
        %v2534 = vand.u32 2147483647, %v186
        %v2535 = vand.u32 %v2534, 8388607
        %v2536 = vor.u32 %v2535, 8388608
        %v2537 = vsub.s32 0, %v2536
        %v2538 = vadd.s32 %v2533, 1
        %vm2539 = vcmp.gt.s32.totalorder %v2538, 0
        %v2540 = vsel %vm2539, %v2538, 0
        %v2541 = vshrl.u32 %v2540, 5
        %v2542 = vand.u32 %v2540, 31
        %v2543 = vsub.s32 32, %v2542
        %v2544 = vshrl.u32 683565275, %v2543
        %v2545 = vshll.u32 683565275, %v2542
        %v2546 = vshrl.u32 2475754826, %v2543
        %v2547 = vor.u32 %v2545, %v2546
        %v2548 = vshll.u32 2475754826, %v2542
        %v2549 = vshrl.u32 2131351028, %v2543
        %v2550 = vor.u32 %v2548, %v2549
        %v2551 = vshll.u32 2131351028, %v2542
        %v2552 = vshrl.u32 2102212464, %v2543
        %v2553 = vor.u32 %v2551, %v2552
        %v2554 = vshll.u32 2102212464, %v2542
        %v2555 = vshrl.u32 920167782, %v2543
        %v2556 = vor.u32 %v2554, %v2555
        %v2557 = vshll.u32 920167782, %v2542
        %v2558 = vshrl.u32 1326507024, %v2543
        %v2559 = vor.u32 %v2557, %v2558
        %vm2560 = vcmp.lt.s32.totalorder %v2541, 1
        %vm2561 = vcmp.lt.s32.totalorder %v2541, 2
        %vm2562 = vcmp.lt.s32.totalorder %v2541, 3
        %vm2563 = vcmp.lt.s32.totalorder %v2541, 4
        %v2564 = vsel %vm2560, %v2544, %v2547
        %v2565 = vsel %vm2563, %v2553, 2102212464
        %v2566 = vsel %vm2562, %v2550, %v2565
        %v2567 = vsel %vm2561, %v2564, %v2566
        %v2568 = vsel %vm2560, %v2547, %v2550
        %v2569 = vsel %vm2563, %v2556, 920167782
        %v2570 = vsel %vm2562, %v2553, %v2569
        %v2571 = vsel %vm2561, %v2568, %v2570
        %v2572 = vsel %vm2560, %v2550, %v2553
        %v2573 = vsel %vm2563, %v2559, 1326507024
        %v2574 = vsel %vm2562, %v2556, %v2573
        %v2575 = vsel %vm2561, %v2572, %v2574
        %v2576 = vshll.u32 %v2536, 8
        %v2577 = vand.u32 %v2576, 65535
        %v2578 = vshrl.u32 %v2576, 16
        %v2579 = vand.u32 %v2575, 65535
        %v2580 = vshrl.u32 %v2575, 16
        %v2581 = vmul.u32 %v2577, %v2579
        %v2582 = vmul.u32 %v2577, %v2580
        %v2583 = vmul.u32 %v2578, %v2579
        %v2584 = vmul.u32 %v2578, %v2580
        %v2585 = vshll.u32 %v2582, 16
        %v2586 = vshrl.u32 %v2582, 16
        %v2587 = vshll.u32 %v2583, 16
        %v2588 = vshrl.u32 %v2583, 16
        %vm2589 = vc.u32 %v2581, %v2585
        %v2590 = vsel %vm2589, 1, 0
        %v2591 = vadd.s32 %v2581, %v2585
        %v2592 = vadd.s32 %v2584, %v2590
        %vm2593 = vc.u32 %v2591, %v2587
        %v2594 = vsel %vm2593, 1, 0
        %v2595 = vadd.s32 %v2591, %v2587
        %v2596 = vadd.s32 %v2592, %v2594
        %v2597 = vadd.s32 %v2596, %v2586
        %v2598 = vadd.s32 %v2597, %v2588
        %v2599 = vand.u32 %v2576, 65535
        %v2600 = vshrl.u32 %v2576, 16
        %v2601 = vand.u32 %v2571, 65535
        %v2602 = vshrl.u32 %v2571, 16
        %v2603 = vmul.u32 %v2599, %v2601
        %v2604 = vmul.u32 %v2599, %v2602
        %v2605 = vmul.u32 %v2600, %v2601
        %v2606 = vmul.u32 %v2600, %v2602
        %v2607 = vshll.u32 %v2604, 16
        %v2608 = vshrl.u32 %v2604, 16
        %v2609 = vshll.u32 %v2605, 16
        %v2610 = vshrl.u32 %v2605, 16
        %vm2611 = vc.u32 %v2603, %v2607
        %v2612 = vsel %vm2611, 1, 0
        %v2613 = vadd.s32 %v2603, %v2607
        %v2614 = vadd.s32 %v2606, %v2612
        %vm2615 = vc.u32 %v2613, %v2609
        %v2616 = vsel %vm2615, 1, 0
        %v2617 = vadd.s32 %v2613, %v2609
        %v2618 = vadd.s32 %v2614, %v2616
        %v2619 = vadd.s32 %v2618, %v2608
        %v2620 = vadd.s32 %v2619, %v2610
        %v2621 = vmul.u32 %v2576, %v2567
        %v2622 = vadd.s32 %v2598, %v2617
        %vm2623 = vc.u32 %v2598, %v2617
        %v2624 = vadd.s32 %v2620, 1
        %v2625 = vsel %vm2623, %v2624, %v2620
        %v2626 = vadd.s32 %v2621, %v2625
        %v2627 = vadd.s32 %v2626, 536870912
        %v2628 = vshrl.u32 %v2627, 30
        %v2629 = vshll.u32 %v2628, 30
        %v2630 = vsub.s32 %v2626, %v2629
        %vm2631 = vcmp.lt.s32.totalorder %v2630, 0
        %v2632 = vsub.s32 0, %v2630
        %v2633 = vsel %vm2631, %v2632, %v2630
        %v2634 = vclz %v2633
        %v2635 = vsub.s32 %v2634, 2
        %vm2636 = vcmp.gt.s32.totalorder 0, %v2635
        %v2637 = vsel %vm2636, 0, %v2635
        %v2638 = vsub.s32 32, %v2637
        %v2639 = vshll.u32 %v2630, %v2637
        %v2640 = vshrl.u32 %v2622, %v2638
        %v2641 = vor.u32 %v2639, %v2640
        %v2642 = vsub.s32 4294967266, %v2637
        %v2643 = vadd.s32 %v2642, 127
        %v2644 = vshll.u32 %v2643, 23
        %v2645 = vor.u32 4788187, %v2644
        %v2646 = vand.u32 2147483647, %v2645
        %v2648 = vcvt.s32.f32 %v2641
        %v2649 = vmul.f32 %v2648, %v2646
        %v2650 = vxor.u32 %v2649, 2147483648
        %v2651 = vsel %vm2530, %v2650, %v2649
        %v2652 = vsub.s32 4, %v2628
        %v2653 = vsel %vm2530, %v2652, %v2628
        %v2654 = vsel %vm2529, %v186, %v2651
        %v2655 = vsel %vm2529, 0, %v2653
        %v2656 = vmul.f32 %v2654, %v2654
        %v2657 = vmul.f32 %v2656, -0.001358992
        %v2658 = vadd.f32 %v2657, 0.041655596
        %v2659 = vmul.f32 %v2656, %v2658
        %v2660 = vadd.f32 %v2659, -0.4999988
        %v2661 = vmul.f32 %v2656, %v2660
        %v2662 = vadd.f32 1.0, %v2661
        %v2663 = vmul.f32 %v2654, %v2654
        %v2664 = vmul.f32 %v2663, -0.00019511016
        %v2665 = vadd.f32 %v2664, 0.008332121
        %v2666 = vmul.f32 %v2663, %v2665
        %v2667 = vadd.f32 %v2666, -0.16666654
        %v2668 = vmul.f32 %v2663, %v2667
        %v2669 = vadd.f32 %v2668, 1.0
        %v2670 = vmul.f32 %v2669, %v2654
        %vm2671 = vweird.f32 %v186
        %v2672 = vadd.s32 %v2655, 3
        %v2673 = vand.u32 %v2672, 3
        %vm2674 = vcmp.lt.s32.totalorder %v2673, 2
        %vm2675 = vcmp.eq.s32.totalorder %v2673, 0
        %v2676 = vxor.u32 %v2670, 2147483648
        %v2677 = vsel %vm2675, %v2662, %v2676
        %vm2678 = vcmp.eq.s32.totalorder %v2673, 2
        %v2679 = vxor.u32 %v2662, 2147483648
        %v2680 = vsel %vm2678, %v2679, %v2670
        %v2681 = vsel %vm2674, %v2677, %v2680
        %v2682 = vsel %vm2671, nan, %v2681
        %v2683 = vand.u32 2147483647, %v187
        %vm2684 = vcmp.le.f32.partialorder %v2683, 0.7853982
        %vm2685 = vcmp.lt.s32.totalorder %v187, 0
        %v2686 = vand.u32 %v187, 2139095040
        %v2687 = vshrl.u32 %v2686, 23
        %v2688 = vsub.s32 %v2687, 127
        %v2689 = vand.u32 2147483647, %v187
        %v2690 = vand.u32 %v2689, 8388607
        %v2691 = vor.u32 %v2690, 8388608
        %v2692 = vsub.s32 0, %v2691
        %v2693 = vadd.s32 %v2688, 1
        %vm2694 = vcmp.gt.s32.totalorder %v2693, 0
        %v2695 = vsel %vm2694, %v2693, 0
        %v2696 = vshrl.u32 %v2695, 5
        %v2697 = vand.u32 %v2695, 31
        %v2698 = vsub.s32 32, %v2697
        %v2699 = vshrl.u32 683565275, %v2698
        %v2700 = vshll.u32 683565275, %v2697
        %v2701 = vshrl.u32 2475754826, %v2698
        %v2702 = vor.u32 %v2700, %v2701
        %v2703 = vshll.u32 2475754826, %v2697
        %v2704 = vshrl.u32 2131351028, %v2698
        %v2705 = vor.u32 %v2703, %v2704
        %v2706 = vshll.u32 2131351028, %v2697
        %v2707 = vshrl.u32 2102212464, %v2698
        %v2708 = vor.u32 %v2706, %v2707
        %v2709 = vshll.u32 2102212464, %v2697
        %v2710 = vshrl.u32 920167782, %v2698
        %v2711 = vor.u32 %v2709, %v2710
        %v2712 = vshll.u32 920167782, %v2697
        %v2713 = vshrl.u32 1326507024, %v2698
        %v2714 = vor.u32 %v2712, %v2713
        %vm2715 = vcmp.lt.s32.totalorder %v2696, 1
        %vm2716 = vcmp.lt.s32.totalorder %v2696, 2
        %vm2717 = vcmp.lt.s32.totalorder %v2696, 3
        %vm2718 = vcmp.lt.s32.totalorder %v2696, 4
        %v2719 = vsel %vm2715, %v2699, %v2702
        %v2720 = vsel %vm2718, %v2708, 2102212464
        %v2721 = vsel %vm2717, %v2705, %v2720
        %v2722 = vsel %vm2716, %v2719, %v2721
        %v2723 = vsel %vm2715, %v2702, %v2705
        %v2724 = vsel %vm2718, %v2711, 920167782
        %v2725 = vsel %vm2717, %v2708, %v2724
        %v2726 = vsel %vm2716, %v2723, %v2725
        %v2727 = vsel %vm2715, %v2705, %v2708
        %v2728 = vsel %vm2718, %v2714, 1326507024
        %v2729 = vsel %vm2717, %v2711, %v2728
        %v2730 = vsel %vm2716, %v2727, %v2729
        %v2731 = vshll.u32 %v2691, 8
        %v2732 = vand.u32 %v2731, 65535
        %v2733 = vshrl.u32 %v2731, 16
        %v2734 = vand.u32 %v2730, 65535
        %v2735 = vshrl.u32 %v2730, 16
        %v2736 = vmul.u32 %v2732, %v2734
        %v2737 = vmul.u32 %v2732, %v2735
        %v2738 = vmul.u32 %v2733, %v2734
        %v2739 = vmul.u32 %v2733, %v2735
        %v2740 = vshll.u32 %v2737, 16
        %v2741 = vshrl.u32 %v2737, 16
        %v2742 = vshll.u32 %v2738, 16
        %v2743 = vshrl.u32 %v2738, 16
        %vm2744 = vc.u32 %v2736, %v2740
        %v2745 = vsel %vm2744, 1, 0
        %v2746 = vadd.s32 %v2736, %v2740
        %v2747 = vadd.s32 %v2739, %v2745
        %vm2748 = vc.u32 %v2746, %v2742
        %v2749 = vsel %vm2748, 1, 0
        %v2750 = vadd.s32 %v2746, %v2742
        %v2751 = vadd.s32 %v2747, %v2749
        %v2752 = vadd.s32 %v2751, %v2741
        %v2753 = vadd.s32 %v2752, %v2743
        %v2754 = vand.u32 %v2731, 65535
        %v2755 = vshrl.u32 %v2731, 16
        %v2756 = vand.u32 %v2726, 65535
        %v2757 = vshrl.u32 %v2726, 16
        %v2758 = vmul.u32 %v2754, %v2756
        %v2759 = vmul.u32 %v2754, %v2757
        %v2760 = vmul.u32 %v2755, %v2756
        %v2761 = vmul.u32 %v2755, %v2757
        %v2762 = vshll.u32 %v2759, 16
        %v2763 = vshrl.u32 %v2759, 16
        %v2764 = vshll.u32 %v2760, 16
        %v2765 = vshrl.u32 %v2760, 16
        %vm2766 = vc.u32 %v2758, %v2762
        %v2767 = vsel %vm2766, 1, 0
        %v2768 = vadd.s32 %v2758, %v2762
        %v2769 = vadd.s32 %v2761, %v2767
        %vm2770 = vc.u32 %v2768, %v2764
        %v2771 = vsel %vm2770, 1, 0
        %v2772 = vadd.s32 %v2768, %v2764
        %v2773 = vadd.s32 %v2769, %v2771
        %v2774 = vadd.s32 %v2773, %v2763
        %v2775 = vadd.s32 %v2774, %v2765
        %v2776 = vmul.u32 %v2731, %v2722
        %v2777 = vadd.s32 %v2753, %v2772
        %vm2778 = vc.u32 %v2753, %v2772
        %v2779 = vadd.s32 %v2775, 1
        %v2780 = vsel %vm2778, %v2779, %v2775
        %v2781 = vadd.s32 %v2776, %v2780
        %v2782 = vadd.s32 %v2781, 536870912
        %v2783 = vshrl.u32 %v2782, 30
        %v2784 = vshll.u32 %v2783, 30
        %v2785 = vsub.s32 %v2781, %v2784
        %vm2786 = vcmp.lt.s32.totalorder %v2785, 0
        %v2787 = vsub.s32 0, %v2785
        %v2788 = vsel %vm2786, %v2787, %v2785
        %v2789 = vclz %v2788
        %v2790 = vsub.s32 %v2789, 2
        %vm2791 = vcmp.gt.s32.totalorder 0, %v2790
        %v2792 = vsel %vm2791, 0, %v2790
        %v2793 = vsub.s32 32, %v2792
        %v2794 = vshll.u32 %v2785, %v2792
        %v2795 = vshrl.u32 %v2777, %v2793
        %v2796 = vor.u32 %v2794, %v2795
        %v2797 = vsub.s32 4294967266, %v2792
        %v2798 = vadd.s32 %v2797, 127
        %v2799 = vshll.u32 %v2798, 23
        %v2800 = vor.u32 4788187, %v2799
        %v2801 = vand.u32 2147483647, %v2800
        %v2803 = vcvt.s32.f32 %v2796
        %v2804 = vmul.f32 %v2803, %v2801
        %v2805 = vxor.u32 %v2804, 2147483648
        %v2806 = vsel %vm2685, %v2805, %v2804
        %v2807 = vsub.s32 4, %v2783
        %v2808 = vsel %vm2685, %v2807, %v2783
        %v2809 = vsel %vm2684, %v187, %v2806
        %v2810 = vsel %vm2684, 0, %v2808
        %v2811 = vmul.f32 %v2809, %v2809
        %v2812 = vmul.f32 %v2811, -0.001358992
        %v2813 = vadd.f32 %v2812, 0.041655596
        %v2814 = vmul.f32 %v2811, %v2813
        %v2815 = vadd.f32 %v2814, -0.4999988
        %v2816 = vmul.f32 %v2811, %v2815
        %v2817 = vadd.f32 1.0, %v2816
        %v2818 = vmul.f32 %v2809, %v2809
        %v2819 = vmul.f32 %v2818, -0.00019511016
        %v2820 = vadd.f32 %v2819, 0.008332121
        %v2821 = vmul.f32 %v2818, %v2820
        %v2822 = vadd.f32 %v2821, -0.16666654
        %v2823 = vmul.f32 %v2818, %v2822
        %v2824 = vadd.f32 %v2823, 1.0
        %v2825 = vmul.f32 %v2824, %v2809
        %vm2826 = vweird.f32 %v187
        %v2827 = vadd.s32 %v2810, 3
        %v2828 = vand.u32 %v2827, 3
        %vm2829 = vcmp.lt.s32.totalorder %v2828, 2
        %vm2830 = vcmp.eq.s32.totalorder %v2828, 0
        %v2831 = vxor.u32 %v2825, 2147483648
        %v2832 = vsel %vm2830, %v2817, %v2831
        %vm2833 = vcmp.eq.s32.totalorder %v2828, 2
        %v2834 = vxor.u32 %v2817, 2147483648
        %v2835 = vsel %vm2833, %v2834, %v2825
        %v2836 = vsel %vm2829, %v2832, %v2835
        %v2837 = vsel %vm2826, nan, %v2836
        %v2838 = vand.u32 2147483647, %v188
        %vm2839 = vcmp.le.f32.partialorder %v2838, 0.7853982
        %vm2840 = vcmp.lt.s32.totalorder %v188, 0
        %v2841 = vand.u32 %v188, 2139095040
        %v2842 = vshrl.u32 %v2841, 23
        %v2843 = vsub.s32 %v2842, 127
        %v2844 = vand.u32 2147483647, %v188
        %v2845 = vand.u32 %v2844, 8388607
        %v2846 = vor.u32 %v2845, 8388608
        %v2847 = vsub.s32 0, %v2846
        %v2848 = vadd.s32 %v2843, 1
        %vm2849 = vcmp.gt.s32.totalorder %v2848, 0
        %v2850 = vsel %vm2849, %v2848, 0
        %v2851 = vshrl.u32 %v2850, 5
        %v2852 = vand.u32 %v2850, 31
        %v2853 = vsub.s32 32, %v2852
        %v2854 = vshrl.u32 683565275, %v2853
        %v2855 = vshll.u32 683565275, %v2852
        %v2856 = vshrl.u32 2475754826, %v2853
        %v2857 = vor.u32 %v2855, %v2856
        %v2858 = vshll.u32 2475754826, %v2852
        %v2859 = vshrl.u32 2131351028, %v2853
        %v2860 = vor.u32 %v2858, %v2859
        %v2861 = vshll.u32 2131351028, %v2852
        %v2862 = vshrl.u32 2102212464, %v2853
        %v2863 = vor.u32 %v2861, %v2862
        %v2864 = vshll.u32 2102212464, %v2852
        %v2865 = vshrl.u32 920167782, %v2853
        %v2866 = vor.u32 %v2864, %v2865
        %v2867 = vshll.u32 920167782, %v2852
        %v2868 = vshrl.u32 1326507024, %v2853
        %v2869 = vor.u32 %v2867, %v2868
        %vm2870 = vcmp.lt.s32.totalorder %v2851, 1
        %vm2871 = vcmp.lt.s32.totalorder %v2851, 2
        %vm2872 = vcmp.lt.s32.totalorder %v2851, 3
        %vm2873 = vcmp.lt.s32.totalorder %v2851, 4
        %v2874 = vsel %vm2870, %v2854, %v2857
        %v2875 = vsel %vm2873, %v2863, 2102212464
        %v2876 = vsel %vm2872, %v2860, %v2875
        %v2877 = vsel %vm2871, %v2874, %v2876
        %v2878 = vsel %vm2870, %v2857, %v2860
        %v2879 = vsel %vm2873, %v2866, 920167782
        %v2880 = vsel %vm2872, %v2863, %v2879
        %v2881 = vsel %vm2871, %v2878, %v2880
        %v2882 = vsel %vm2870, %v2860, %v2863
        %v2883 = vsel %vm2873, %v2869, 1326507024
        %v2884 = vsel %vm2872, %v2866, %v2883
        %v2885 = vsel %vm2871, %v2882, %v2884
        %v2886 = vshll.u32 %v2846, 8
        %v2887 = vand.u32 %v2886, 65535
        %v2888 = vshrl.u32 %v2886, 16
        %v2889 = vand.u32 %v2885, 65535
        %v2890 = vshrl.u32 %v2885, 16
        %v2891 = vmul.u32 %v2887, %v2889
        %v2892 = vmul.u32 %v2887, %v2890
        %v2893 = vmul.u32 %v2888, %v2889
        %v2894 = vmul.u32 %v2888, %v2890
        %v2895 = vshll.u32 %v2892, 16
        %v2896 = vshrl.u32 %v2892, 16
        %v2897 = vshll.u32 %v2893, 16
        %v2898 = vshrl.u32 %v2893, 16
        %vm2899 = vc.u32 %v2891, %v2895
        %v2900 = vsel %vm2899, 1, 0
        %v2901 = vadd.s32 %v2891, %v2895
        %v2902 = vadd.s32 %v2894, %v2900
        %vm2903 = vc.u32 %v2901, %v2897
        %v2904 = vsel %vm2903, 1, 0
        %v2905 = vadd.s32 %v2901, %v2897
        %v2906 = vadd.s32 %v2902, %v2904
        %v2907 = vadd.s32 %v2906, %v2896
        %v2908 = vadd.s32 %v2907, %v2898
        %v2909 = vand.u32 %v2886, 65535
        %v2910 = vshrl.u32 %v2886, 16
        %v2911 = vand.u32 %v2881, 65535
        %v2912 = vshrl.u32 %v2881, 16
        %v2913 = vmul.u32 %v2909, %v2911
        %v2914 = vmul.u32 %v2909, %v2912
        %v2915 = vmul.u32 %v2910, %v2911
        %v2916 = vmul.u32 %v2910, %v2912
        %v2917 = vshll.u32 %v2914, 16
        %v2918 = vshrl.u32 %v2914, 16
        %v2919 = vshll.u32 %v2915, 16
        %v2920 = vshrl.u32 %v2915, 16
        %vm2921 = vc.u32 %v2913, %v2917
        %v2922 = vsel %vm2921, 1, 0
        %v2923 = vadd.s32 %v2913, %v2917
        %v2924 = vadd.s32 %v2916, %v2922
        %vm2925 = vc.u32 %v2923, %v2919
        %v2926 = vsel %vm2925, 1, 0
        %v2927 = vadd.s32 %v2923, %v2919
        %v2928 = vadd.s32 %v2924, %v2926
        %v2929 = vadd.s32 %v2928, %v2918
        %v2930 = vadd.s32 %v2929, %v2920
        %v2931 = vmul.u32 %v2886, %v2877
        %v2932 = vadd.s32 %v2908, %v2927
        %vm2933 = vc.u32 %v2908, %v2927
        %v2934 = vadd.s32 %v2930, 1
        %v2935 = vsel %vm2933, %v2934, %v2930
        %v2936 = vadd.s32 %v2931, %v2935
        %v2937 = vadd.s32 %v2936, 536870912
        %v2938 = vshrl.u32 %v2937, 30
        %v2939 = vshll.u32 %v2938, 30
        %v2940 = vsub.s32 %v2936, %v2939
        %vm2941 = vcmp.lt.s32.totalorder %v2940, 0
        %v2942 = vsub.s32 0, %v2940
        %v2943 = vsel %vm2941, %v2942, %v2940
        %v2944 = vclz %v2943
        %v2945 = vsub.s32 %v2944, 2
        %vm2946 = vcmp.gt.s32.totalorder 0, %v2945
        %v2947 = vsel %vm2946, 0, %v2945
        %v2948 = vsub.s32 32, %v2947
        %v2949 = vshll.u32 %v2940, %v2947
        %v2950 = vshrl.u32 %v2932, %v2948
        %v2951 = vor.u32 %v2949, %v2950
        %v2952 = vsub.s32 4294967266, %v2947
        %v2953 = vadd.s32 %v2952, 127
        %v2954 = vshll.u32 %v2953, 23
        %v2955 = vor.u32 4788187, %v2954
        %v2956 = vand.u32 2147483647, %v2955
        %v2958 = vcvt.s32.f32 %v2951
        %v2959 = vmul.f32 %v2958, %v2956
        %v2960 = vxor.u32 %v2959, 2147483648
        %v2961 = vsel %vm2840, %v2960, %v2959
        %v2962 = vsub.s32 4, %v2938
        %v2963 = vsel %vm2840, %v2962, %v2938
        %v2964 = vsel %vm2839, %v188, %v2961
        %v2965 = vsel %vm2839, 0, %v2963
        %v2966 = vmul.f32 %v2964, %v2964
        %v2967 = vmul.f32 %v2966, -0.001358992
        %v2968 = vadd.f32 %v2967, 0.041655596
        %v2969 = vmul.f32 %v2966, %v2968
        %v2970 = vadd.f32 %v2969, -0.4999988
        %v2971 = vmul.f32 %v2966, %v2970
        %v2972 = vadd.f32 1.0, %v2971
        %v2973 = vmul.f32 %v2964, %v2964
        %v2974 = vmul.f32 %v2973, -0.00019511016
        %v2975 = vadd.f32 %v2974, 0.008332121
        %v2976 = vmul.f32 %v2973, %v2975
        %v2977 = vadd.f32 %v2976, -0.16666654
        %v2978 = vmul.f32 %v2973, %v2977
        %v2979 = vadd.f32 %v2978, 1.0
        %v2980 = vmul.f32 %v2979, %v2964
        %vm2981 = vweird.f32 %v188
        %v2982 = vadd.s32 %v2965, 3
        %v2983 = vand.u32 %v2982, 3
        %vm2984 = vcmp.lt.s32.totalorder %v2983, 2
        %vm2985 = vcmp.eq.s32.totalorder %v2983, 0
        %v2986 = vxor.u32 %v2980, 2147483648
        %v2987 = vsel %vm2985, %v2972, %v2986
        %vm2988 = vcmp.eq.s32.totalorder %v2983, 2
        %v2989 = vxor.u32 %v2972, 2147483648
        %v2990 = vsel %vm2988, %v2989, %v2980
        %v2991 = vsel %vm2984, %v2987, %v2990
        %v2992 = vsel %vm2981, nan, %v2991
        %v2993 = vand.u32 2147483647, %v189
        %vm2994 = vcmp.le.f32.partialorder %v2993, 0.7853982
        %vm2995 = vcmp.lt.s32.totalorder %v189, 0
        %v2996 = vand.u32 %v189, 2139095040
        %v2997 = vshrl.u32 %v2996, 23
        %v2998 = vsub.s32 %v2997, 127
        %v2999 = vand.u32 2147483647, %v189
        %v3000 = vand.u32 %v2999, 8388607
        %v3001 = vor.u32 %v3000, 8388608
        %v3002 = vsub.s32 0, %v3001
        %v3003 = vadd.s32 %v2998, 1
        %vm3004 = vcmp.gt.s32.totalorder %v3003, 0
        %v3005 = vsel %vm3004, %v3003, 0
        %v3006 = vshrl.u32 %v3005, 5
        %v3007 = vand.u32 %v3005, 31
        %v3008 = vsub.s32 32, %v3007
        %v3009 = vshrl.u32 683565275, %v3008
        %v3010 = vshll.u32 683565275, %v3007
        %v3011 = vshrl.u32 2475754826, %v3008
        %v3012 = vor.u32 %v3010, %v3011
        %v3013 = vshll.u32 2475754826, %v3007
        %v3014 = vshrl.u32 2131351028, %v3008
        %v3015 = vor.u32 %v3013, %v3014
        %v3016 = vshll.u32 2131351028, %v3007
        %v3017 = vshrl.u32 2102212464, %v3008
        %v3018 = vor.u32 %v3016, %v3017
        %v3019 = vshll.u32 2102212464, %v3007
        %v3020 = vshrl.u32 920167782, %v3008
        %v3021 = vor.u32 %v3019, %v3020
        %v3022 = vshll.u32 920167782, %v3007
        %v3023 = vshrl.u32 1326507024, %v3008
        %v3024 = vor.u32 %v3022, %v3023
        %vm3025 = vcmp.lt.s32.totalorder %v3006, 1
        %vm3026 = vcmp.lt.s32.totalorder %v3006, 2
        %vm3027 = vcmp.lt.s32.totalorder %v3006, 3
        %vm3028 = vcmp.lt.s32.totalorder %v3006, 4
        %v3029 = vsel %vm3025, %v3009, %v3012
        %v3030 = vsel %vm3028, %v3018, 2102212464
        %v3031 = vsel %vm3027, %v3015, %v3030
        %v3032 = vsel %vm3026, %v3029, %v3031
        %v3033 = vsel %vm3025, %v3012, %v3015
        %v3034 = vsel %vm3028, %v3021, 920167782
        %v3035 = vsel %vm3027, %v3018, %v3034
        %v3036 = vsel %vm3026, %v3033, %v3035
        %v3037 = vsel %vm3025, %v3015, %v3018
        %v3038 = vsel %vm3028, %v3024, 1326507024
        %v3039 = vsel %vm3027, %v3021, %v3038
        %v3040 = vsel %vm3026, %v3037, %v3039
        %v3041 = vshll.u32 %v3001, 8
        %v3042 = vand.u32 %v3041, 65535
        %v3043 = vshrl.u32 %v3041, 16
        %v3044 = vand.u32 %v3040, 65535
        %v3045 = vshrl.u32 %v3040, 16
        %v3046 = vmul.u32 %v3042, %v3044
        %v3047 = vmul.u32 %v3042, %v3045
        %v3048 = vmul.u32 %v3043, %v3044
        %v3049 = vmul.u32 %v3043, %v3045
        %v3050 = vshll.u32 %v3047, 16
        %v3051 = vshrl.u32 %v3047, 16
        %v3052 = vshll.u32 %v3048, 16
        %v3053 = vshrl.u32 %v3048, 16
        %vm3054 = vc.u32 %v3046, %v3050
        %v3055 = vsel %vm3054, 1, 0
        %v3056 = vadd.s32 %v3046, %v3050
        %v3057 = vadd.s32 %v3049, %v3055
        %vm3058 = vc.u32 %v3056, %v3052
        %v3059 = vsel %vm3058, 1, 0
        %v3060 = vadd.s32 %v3056, %v3052
        %v3061 = vadd.s32 %v3057, %v3059
        %v3062 = vadd.s32 %v3061, %v3051
        %v3063 = vadd.s32 %v3062, %v3053
        %v3064 = vand.u32 %v3041, 65535
        %v3065 = vshrl.u32 %v3041, 16
        %v3066 = vand.u32 %v3036, 65535
        %v3067 = vshrl.u32 %v3036, 16
        %v3068 = vmul.u32 %v3064, %v3066
        %v3069 = vmul.u32 %v3064, %v3067
        %v3070 = vmul.u32 %v3065, %v3066
        %v3071 = vmul.u32 %v3065, %v3067
        %v3072 = vshll.u32 %v3069, 16
        %v3073 = vshrl.u32 %v3069, 16
        %v3074 = vshll.u32 %v3070, 16
        %v3075 = vshrl.u32 %v3070, 16
        %vm3076 = vc.u32 %v3068, %v3072
        %v3077 = vsel %vm3076, 1, 0
        %v3078 = vadd.s32 %v3068, %v3072
        %v3079 = vadd.s32 %v3071, %v3077
        %vm3080 = vc.u32 %v3078, %v3074
        %v3081 = vsel %vm3080, 1, 0
        %v3082 = vadd.s32 %v3078, %v3074
        %v3083 = vadd.s32 %v3079, %v3081
        %v3084 = vadd.s32 %v3083, %v3073
        %v3085 = vadd.s32 %v3084, %v3075
        %v3086 = vmul.u32 %v3041, %v3032
        %v3087 = vadd.s32 %v3063, %v3082
        %vm3088 = vc.u32 %v3063, %v3082
        %v3089 = vadd.s32 %v3085, 1
        %v3090 = vsel %vm3088, %v3089, %v3085
        %v3091 = vadd.s32 %v3086, %v3090
        %v3092 = vadd.s32 %v3091, 536870912
        %v3093 = vshrl.u32 %v3092, 30
        %v3094 = vshll.u32 %v3093, 30
        %v3095 = vsub.s32 %v3091, %v3094
        %vm3096 = vcmp.lt.s32.totalorder %v3095, 0
        %v3097 = vsub.s32 0, %v3095
        %v3098 = vsel %vm3096, %v3097, %v3095
        %v3099 = vclz %v3098
        %v3100 = vsub.s32 %v3099, 2
        %vm3101 = vcmp.gt.s32.totalorder 0, %v3100
        %v3102 = vsel %vm3101, 0, %v3100
        %v3103 = vsub.s32 32, %v3102
        %v3104 = vshll.u32 %v3095, %v3102
        %v3105 = vshrl.u32 %v3087, %v3103
        %v3106 = vor.u32 %v3104, %v3105
        %v3107 = vsub.s32 4294967266, %v3102
        %v3108 = vadd.s32 %v3107, 127
        %v3109 = vshll.u32 %v3108, 23
        %v3110 = vor.u32 4788187, %v3109
        %v3111 = vand.u32 2147483647, %v3110
        %v3113 = vcvt.s32.f32 %v3106
        %v3114 = vmul.f32 %v3113, %v3111
        %v3115 = vxor.u32 %v3114, 2147483648
        %v3116 = vsel %vm2995, %v3115, %v3114
        %v3117 = vsub.s32 4, %v3093
        %v3118 = vsel %vm2995, %v3117, %v3093
        %v3119 = vsel %vm2994, %v189, %v3116
        %v3120 = vsel %vm2994, 0, %v3118
        %v3121 = vmul.f32 %v3119, %v3119
        %v3122 = vmul.f32 %v3121, -0.001358992
        %v3123 = vadd.f32 %v3122, 0.041655596
        %v3124 = vmul.f32 %v3121, %v3123
        %v3125 = vadd.f32 %v3124, -0.4999988
        %v3126 = vmul.f32 %v3121, %v3125
        %v3127 = vadd.f32 1.0, %v3126
        %v3128 = vmul.f32 %v3119, %v3119
        %v3129 = vmul.f32 %v3128, -0.00019511016
        %v3130 = vadd.f32 %v3129, 0.008332121
        %v3131 = vmul.f32 %v3128, %v3130
        %v3132 = vadd.f32 %v3131, -0.16666654
        %v3133 = vmul.f32 %v3128, %v3132
        %v3134 = vadd.f32 %v3133, 1.0
        %v3135 = vmul.f32 %v3134, %v3119
        %vm3136 = vweird.f32 %v189
        %v3137 = vadd.s32 %v3120, 3
        %v3138 = vand.u32 %v3137, 3
        %vm3139 = vcmp.lt.s32.totalorder %v3138, 2
        %vm3140 = vcmp.eq.s32.totalorder %v3138, 0
        %v3141 = vxor.u32 %v3135, 2147483648
        %v3142 = vsel %vm3140, %v3127, %v3141
        %vm3143 = vcmp.eq.s32.totalorder %v3138, 2
        %v3144 = vxor.u32 %v3127, 2147483648
        %v3145 = vsel %vm3143, %v3144, %v3135
        %v3146 = vsel %vm3139, %v3142, %v3145
        %v3147 = vsel %vm3136, nan, %v3146
        %v3148 = vand.u32 2147483647, %v190
        %vm3149 = vcmp.le.f32.partialorder %v3148, 0.7853982
        %vm3150 = vcmp.lt.s32.totalorder %v190, 0
        %v3151 = vand.u32 %v190, 2139095040
        %v3152 = vshrl.u32 %v3151, 23
        %v3153 = vsub.s32 %v3152, 127
        %v3154 = vand.u32 2147483647, %v190
        %v3155 = vand.u32 %v3154, 8388607
        %v3156 = vor.u32 %v3155, 8388608
        %v3157 = vsub.s32 0, %v3156
        %v3158 = vadd.s32 %v3153, 1
        %vm3159 = vcmp.gt.s32.totalorder %v3158, 0
        %v3160 = vsel %vm3159, %v3158, 0
        %v3161 = vshrl.u32 %v3160, 5
        %v3162 = vand.u32 %v3160, 31
        %v3163 = vsub.s32 32, %v3162
        %v3164 = vshrl.u32 683565275, %v3163
        %v3165 = vshll.u32 683565275, %v3162
        %v3166 = vshrl.u32 2475754826, %v3163
        %v3167 = vor.u32 %v3165, %v3166
        %v3168 = vshll.u32 2475754826, %v3162
        %v3169 = vshrl.u32 2131351028, %v3163
        %v3170 = vor.u32 %v3168, %v3169
        %v3171 = vshll.u32 2131351028, %v3162
        %v3172 = vshrl.u32 2102212464, %v3163
        %v3173 = vor.u32 %v3171, %v3172
        %v3174 = vshll.u32 2102212464, %v3162
        %v3175 = vshrl.u32 920167782, %v3163
        %v3176 = vor.u32 %v3174, %v3175
        %v3177 = vshll.u32 920167782, %v3162
        %v3178 = vshrl.u32 1326507024, %v3163
        %v3179 = vor.u32 %v3177, %v3178
        %vm3180 = vcmp.lt.s32.totalorder %v3161, 1
        %vm3181 = vcmp.lt.s32.totalorder %v3161, 2
        %vm3182 = vcmp.lt.s32.totalorder %v3161, 3
        %vm3183 = vcmp.lt.s32.totalorder %v3161, 4
        %v3184 = vsel %vm3180, %v3164, %v3167
        %v3185 = vsel %vm3183, %v3173, 2102212464
        %v3186 = vsel %vm3182, %v3170, %v3185
        %v3187 = vsel %vm3181, %v3184, %v3186
        %v3188 = vsel %vm3180, %v3167, %v3170
        %v3189 = vsel %vm3183, %v3176, 920167782
        %v3190 = vsel %vm3182, %v3173, %v3189
        %v3191 = vsel %vm3181, %v3188, %v3190
        %v3192 = vsel %vm3180, %v3170, %v3173
        %v3193 = vsel %vm3183, %v3179, 1326507024
        %v3194 = vsel %vm3182, %v3176, %v3193
        %v3195 = vsel %vm3181, %v3192, %v3194
        %v3196 = vshll.u32 %v3156, 8
        %v3197 = vand.u32 %v3196, 65535
        %v3198 = vshrl.u32 %v3196, 16
        %v3199 = vand.u32 %v3195, 65535
        %v3200 = vshrl.u32 %v3195, 16
        %v3201 = vmul.u32 %v3197, %v3199
        %v3202 = vmul.u32 %v3197, %v3200
        %v3203 = vmul.u32 %v3198, %v3199
        %v3204 = vmul.u32 %v3198, %v3200
        %v3205 = vshll.u32 %v3202, 16
        %v3206 = vshrl.u32 %v3202, 16
        %v3207 = vshll.u32 %v3203, 16
        %v3208 = vshrl.u32 %v3203, 16
        %vm3209 = vc.u32 %v3201, %v3205
        %v3210 = vsel %vm3209, 1, 0
        %v3211 = vadd.s32 %v3201, %v3205
        %v3212 = vadd.s32 %v3204, %v3210
        %vm3213 = vc.u32 %v3211, %v3207
        %v3214 = vsel %vm3213, 1, 0
        %v3215 = vadd.s32 %v3211, %v3207
        %v3216 = vadd.s32 %v3212, %v3214
        %v3217 = vadd.s32 %v3216, %v3206
        %v3218 = vadd.s32 %v3217, %v3208
        %v3219 = vand.u32 %v3196, 65535
        %v3220 = vshrl.u32 %v3196, 16
        %v3221 = vand.u32 %v3191, 65535
        %v3222 = vshrl.u32 %v3191, 16
        %v3223 = vmul.u32 %v3219, %v3221
        %v3224 = vmul.u32 %v3219, %v3222
        %v3225 = vmul.u32 %v3220, %v3221
        %v3226 = vmul.u32 %v3220, %v3222
        %v3227 = vshll.u32 %v3224, 16
        %v3228 = vshrl.u32 %v3224, 16
        %v3229 = vshll.u32 %v3225, 16
        %v3230 = vshrl.u32 %v3225, 16
        %vm3231 = vc.u32 %v3223, %v3227
        %v3232 = vsel %vm3231, 1, 0
        %v3233 = vadd.s32 %v3223, %v3227
        %v3234 = vadd.s32 %v3226, %v3232
        %vm3235 = vc.u32 %v3233, %v3229
        %v3236 = vsel %vm3235, 1, 0
        %v3237 = vadd.s32 %v3233, %v3229
        %v3238 = vadd.s32 %v3234, %v3236
        %v3239 = vadd.s32 %v3238, %v3228
        %v3240 = vadd.s32 %v3239, %v3230
        %v3241 = vmul.u32 %v3196, %v3187
        %v3242 = vadd.s32 %v3218, %v3237
        %vm3243 = vc.u32 %v3218, %v3237
        %v3244 = vadd.s32 %v3240, 1
        %v3245 = vsel %vm3243, %v3244, %v3240
        %v3246 = vadd.s32 %v3241, %v3245
        %v3247 = vadd.s32 %v3246, 536870912
        %v3248 = vshrl.u32 %v3247, 30
        %v3249 = vshll.u32 %v3248, 30
        %v3250 = vsub.s32 %v3246, %v3249
        %vm3251 = vcmp.lt.s32.totalorder %v3250, 0
        %v3252 = vsub.s32 0, %v3250
        %v3253 = vsel %vm3251, %v3252, %v3250
        %v3254 = vclz %v3253
        %v3255 = vsub.s32 %v3254, 2
        %vm3256 = vcmp.gt.s32.totalorder 0, %v3255
        %v3257 = vsel %vm3256, 0, %v3255
        %v3258 = vsub.s32 32, %v3257
        %v3259 = vshll.u32 %v3250, %v3257
        %v3260 = vshrl.u32 %v3242, %v3258
        %v3261 = vor.u32 %v3259, %v3260
        %v3262 = vsub.s32 4294967266, %v3257
        %v3263 = vadd.s32 %v3262, 127
        %v3264 = vshll.u32 %v3263, 23
        %v3265 = vor.u32 4788187, %v3264
        %v3266 = vand.u32 2147483647, %v3265
        %v3268 = vcvt.s32.f32 %v3261
        %v3269 = vmul.f32 %v3268, %v3266
        %v3270 = vxor.u32 %v3269, 2147483648
        %v3271 = vsel %vm3150, %v3270, %v3269
        %v3272 = vsub.s32 4, %v3248
        %v3273 = vsel %vm3150, %v3272, %v3248
        %v3274 = vsel %vm3149, %v190, %v3271
        %v3275 = vsel %vm3149, 0, %v3273
        %v3276 = vmul.f32 %v3274, %v3274
        %v3277 = vmul.f32 %v3276, -0.001358992
        %v3278 = vadd.f32 %v3277, 0.041655596
        %v3279 = vmul.f32 %v3276, %v3278
        %v3280 = vadd.f32 %v3279, -0.4999988
        %v3281 = vmul.f32 %v3276, %v3280
        %v3282 = vadd.f32 1.0, %v3281
        %v3283 = vmul.f32 %v3274, %v3274
        %v3284 = vmul.f32 %v3283, -0.00019511016
        %v3285 = vadd.f32 %v3284, 0.008332121
        %v3286 = vmul.f32 %v3283, %v3285
        %v3287 = vadd.f32 %v3286, -0.16666654
        %v3288 = vmul.f32 %v3283, %v3287
        %v3289 = vadd.f32 %v3288, 1.0
        %v3290 = vmul.f32 %v3289, %v3274
        %vm3291 = vweird.f32 %v190
        %v3292 = vadd.s32 %v3275, 3
        %v3293 = vand.u32 %v3292, 3
        %vm3294 = vcmp.lt.s32.totalorder %v3293, 2
        %vm3295 = vcmp.eq.s32.totalorder %v3293, 0
        %v3296 = vxor.u32 %v3290, 2147483648
        %v3297 = vsel %vm3295, %v3282, %v3296
        %vm3298 = vcmp.eq.s32.totalorder %v3293, 2
        %v3299 = vxor.u32 %v3282, 2147483648
        %v3300 = vsel %vm3298, %v3299, %v3290
        %v3301 = vsel %vm3294, %v3297, %v3300
        %v3302 = vsel %vm3291, nan, %v3301
        %v3303 = vand.u32 2147483647, %v191
        %vm3304 = vcmp.le.f32.partialorder %v3303, 0.7853982
        %vm3305 = vcmp.lt.s32.totalorder %v191, 0
        %v3306 = vand.u32 %v191, 2139095040
        %v3307 = vshrl.u32 %v3306, 23
        %v3308 = vsub.s32 %v3307, 127
        %v3309 = vand.u32 2147483647, %v191
        %v3310 = vand.u32 %v3309, 8388607
        %v3311 = vor.u32 %v3310, 8388608
        %v3312 = vsub.s32 0, %v3311
        %v3313 = vadd.s32 %v3308, 1
        %vm3314 = vcmp.gt.s32.totalorder %v3313, 0
        %v3315 = vsel %vm3314, %v3313, 0
        %v3316 = vshrl.u32 %v3315, 5
        %v3317 = vand.u32 %v3315, 31
        %v3318 = vsub.s32 32, %v3317
        %v3319 = vshrl.u32 683565275, %v3318
        %v3320 = vshll.u32 683565275, %v3317
        %v3321 = vshrl.u32 2475754826, %v3318
        %v3322 = vor.u32 %v3320, %v3321
        %v3323 = vshll.u32 2475754826, %v3317
        %v3324 = vshrl.u32 2131351028, %v3318
        %v3325 = vor.u32 %v3323, %v3324
        %v3326 = vshll.u32 2131351028, %v3317
        %v3327 = vshrl.u32 2102212464, %v3318
        %v3328 = vor.u32 %v3326, %v3327
        %v3329 = vshll.u32 2102212464, %v3317
        %v3330 = vshrl.u32 920167782, %v3318
        %v3331 = vor.u32 %v3329, %v3330
        %v3332 = vshll.u32 920167782, %v3317
        %v3333 = vshrl.u32 1326507024, %v3318
        %v3334 = vor.u32 %v3332, %v3333
        %vm3335 = vcmp.lt.s32.totalorder %v3316, 1
        %vm3336 = vcmp.lt.s32.totalorder %v3316, 2
        %vm3337 = vcmp.lt.s32.totalorder %v3316, 3
        %vm3338 = vcmp.lt.s32.totalorder %v3316, 4
        %v3339 = vsel %vm3335, %v3319, %v3322
        %v3340 = vsel %vm3338, %v3328, 2102212464
        %v3341 = vsel %vm3337, %v3325, %v3340
        %v3342 = vsel %vm3336, %v3339, %v3341
        %v3343 = vsel %vm3335, %v3322, %v3325
        %v3344 = vsel %vm3338, %v3331, 920167782
        %v3345 = vsel %vm3337, %v3328, %v3344
        %v3346 = vsel %vm3336, %v3343, %v3345
        %v3347 = vsel %vm3335, %v3325, %v3328
        %v3348 = vsel %vm3338, %v3334, 1326507024
        %v3349 = vsel %vm3337, %v3331, %v3348
        %v3350 = vsel %vm3336, %v3347, %v3349
        %v3351 = vshll.u32 %v3311, 8
        %v3352 = vand.u32 %v3351, 65535
        %v3353 = vshrl.u32 %v3351, 16
        %v3354 = vand.u32 %v3350, 65535
        %v3355 = vshrl.u32 %v3350, 16
        %v3356 = vmul.u32 %v3352, %v3354
        %v3357 = vmul.u32 %v3352, %v3355
        %v3358 = vmul.u32 %v3353, %v3354
        %v3359 = vmul.u32 %v3353, %v3355
        %v3360 = vshll.u32 %v3357, 16
        %v3361 = vshrl.u32 %v3357, 16
        %v3362 = vshll.u32 %v3358, 16
        %v3363 = vshrl.u32 %v3358, 16
        %vm3364 = vc.u32 %v3356, %v3360
        %v3365 = vsel %vm3364, 1, 0
        %v3366 = vadd.s32 %v3356, %v3360
        %v3367 = vadd.s32 %v3359, %v3365
        %vm3368 = vc.u32 %v3366, %v3362
        %v3369 = vsel %vm3368, 1, 0
        %v3370 = vadd.s32 %v3366, %v3362
        %v3371 = vadd.s32 %v3367, %v3369
        %v3372 = vadd.s32 %v3371, %v3361
        %v3373 = vadd.s32 %v3372, %v3363
        %v3374 = vand.u32 %v3351, 65535
        %v3375 = vshrl.u32 %v3351, 16
        %v3376 = vand.u32 %v3346, 65535
        %v3377 = vshrl.u32 %v3346, 16
        %v3378 = vmul.u32 %v3374, %v3376
        %v3379 = vmul.u32 %v3374, %v3377
        %v3380 = vmul.u32 %v3375, %v3376
        %v3381 = vmul.u32 %v3375, %v3377
        %v3382 = vshll.u32 %v3379, 16
        %v3383 = vshrl.u32 %v3379, 16
        %v3384 = vshll.u32 %v3380, 16
        %v3385 = vshrl.u32 %v3380, 16
        %vm3386 = vc.u32 %v3378, %v3382
        %v3387 = vsel %vm3386, 1, 0
        %v3388 = vadd.s32 %v3378, %v3382
        %v3389 = vadd.s32 %v3381, %v3387
        %vm3390 = vc.u32 %v3388, %v3384
        %v3391 = vsel %vm3390, 1, 0
        %v3392 = vadd.s32 %v3388, %v3384
        %v3393 = vadd.s32 %v3389, %v3391
        %v3394 = vadd.s32 %v3393, %v3383
        %v3395 = vadd.s32 %v3394, %v3385
        %v3396 = vmul.u32 %v3351, %v3342
        %v3397 = vadd.s32 %v3373, %v3392
        %vm3398 = vc.u32 %v3373, %v3392
        %v3399 = vadd.s32 %v3395, 1
        %v3400 = vsel %vm3398, %v3399, %v3395
        %v3401 = vadd.s32 %v3396, %v3400
        %v3402 = vadd.s32 %v3401, 536870912
        %v3403 = vshrl.u32 %v3402, 30
        %v3404 = vshll.u32 %v3403, 30
        %v3405 = vsub.s32 %v3401, %v3404
        %vm3406 = vcmp.lt.s32.totalorder %v3405, 0
        %v3407 = vsub.s32 0, %v3405
        %v3408 = vsel %vm3406, %v3407, %v3405
        %v3409 = vclz %v3408
        %v3410 = vsub.s32 %v3409, 2
        %vm3411 = vcmp.gt.s32.totalorder 0, %v3410
        %v3412 = vsel %vm3411, 0, %v3410
        %v3413 = vsub.s32 32, %v3412
        %v3414 = vshll.u32 %v3405, %v3412
        %v3415 = vshrl.u32 %v3397, %v3413
        %v3416 = vor.u32 %v3414, %v3415
        %v3417 = vsub.s32 4294967266, %v3412
        %v3418 = vadd.s32 %v3417, 127
        %v3419 = vshll.u32 %v3418, 23
        %v3420 = vor.u32 4788187, %v3419
        %v3421 = vand.u32 2147483647, %v3420
        %v3423 = vcvt.s32.f32 %v3416
        %v3424 = vmul.f32 %v3423, %v3421
        %v3425 = vxor.u32 %v3424, 2147483648
        %v3426 = vsel %vm3305, %v3425, %v3424
        %v3427 = vsub.s32 4, %v3403
        %v3428 = vsel %vm3305, %v3427, %v3403
        %v3429 = vsel %vm3304, %v191, %v3426
        %v3430 = vsel %vm3304, 0, %v3428
        %v3431 = vmul.f32 %v3429, %v3429
        %v3432 = vmul.f32 %v3431, -0.001358992
        %v3433 = vadd.f32 %v3432, 0.041655596
        %v3434 = vmul.f32 %v3431, %v3433
        %v3435 = vadd.f32 %v3434, -0.4999988
        %v3436 = vmul.f32 %v3431, %v3435
        %v3437 = vadd.f32 1.0, %v3436
        %v3438 = vmul.f32 %v3429, %v3429
        %v3439 = vmul.f32 %v3438, -0.00019511016
        %v3440 = vadd.f32 %v3439, 0.008332121
        %v3441 = vmul.f32 %v3438, %v3440
        %v3442 = vadd.f32 %v3441, -0.16666654
        %v3443 = vmul.f32 %v3438, %v3442
        %v3444 = vadd.f32 %v3443, 1.0
        %v3445 = vmul.f32 %v3444, %v3429
        %vm3446 = vweird.f32 %v191
        %v3447 = vadd.s32 %v3430, 3
        %v3448 = vand.u32 %v3447, 3
        %vm3449 = vcmp.lt.s32.totalorder %v3448, 2
        %vm3450 = vcmp.eq.s32.totalorder %v3448, 0
        %v3451 = vxor.u32 %v3445, 2147483648
        %v3452 = vsel %vm3450, %v3437, %v3451
        %vm3453 = vcmp.eq.s32.totalorder %v3448, 2
        %v3454 = vxor.u32 %v3437, 2147483648
        %v3455 = vsel %vm3453, %v3454, %v3445
        %v3456 = vsel %vm3449, %v3452, %v3455
        %v3457 = vsel %vm3446, nan, %v3456
        %v3458 = vand.u32 2147483647, %v192
        %vm3459 = vcmp.le.f32.partialorder %v3458, 0.7853982
        %vm3460 = vcmp.lt.s32.totalorder %v192, 0
        %v3461 = vand.u32 %v192, 2139095040
        %v3462 = vshrl.u32 %v3461, 23
        %v3463 = vsub.s32 %v3462, 127
        %v3464 = vand.u32 2147483647, %v192
        %v3465 = vand.u32 %v3464, 8388607
        %v3466 = vor.u32 %v3465, 8388608
        %v3467 = vsub.s32 0, %v3466
        %v3468 = vadd.s32 %v3463, 1
        %vm3469 = vcmp.gt.s32.totalorder %v3468, 0
        %v3470 = vsel %vm3469, %v3468, 0
        %v3471 = vshrl.u32 %v3470, 5
        %v3472 = vand.u32 %v3470, 31
        %v3473 = vsub.s32 32, %v3472
        %v3474 = vshrl.u32 683565275, %v3473
        %v3475 = vshll.u32 683565275, %v3472
        %v3476 = vshrl.u32 2475754826, %v3473
        %v3477 = vor.u32 %v3475, %v3476
        %v3478 = vshll.u32 2475754826, %v3472
        %v3479 = vshrl.u32 2131351028, %v3473
        %v3480 = vor.u32 %v3478, %v3479
        %v3481 = vshll.u32 2131351028, %v3472
        %v3482 = vshrl.u32 2102212464, %v3473
        %v3483 = vor.u32 %v3481, %v3482
        %v3484 = vshll.u32 2102212464, %v3472
        %v3485 = vshrl.u32 920167782, %v3473
        %v3486 = vor.u32 %v3484, %v3485
        %v3487 = vshll.u32 920167782, %v3472
        %v3488 = vshrl.u32 1326507024, %v3473
        %v3489 = vor.u32 %v3487, %v3488
        %vm3490 = vcmp.lt.s32.totalorder %v3471, 1
        %vm3491 = vcmp.lt.s32.totalorder %v3471, 2
        %vm3492 = vcmp.lt.s32.totalorder %v3471, 3
        %vm3493 = vcmp.lt.s32.totalorder %v3471, 4
        %v3494 = vsel %vm3490, %v3474, %v3477
        %v3495 = vsel %vm3493, %v3483, 2102212464
        %v3496 = vsel %vm3492, %v3480, %v3495
        %v3497 = vsel %vm3491, %v3494, %v3496
        %v3498 = vsel %vm3490, %v3477, %v3480
        %v3499 = vsel %vm3493, %v3486, 920167782
        %v3500 = vsel %vm3492, %v3483, %v3499
        %v3501 = vsel %vm3491, %v3498, %v3500
        %v3502 = vsel %vm3490, %v3480, %v3483
        %v3503 = vsel %vm3493, %v3489, 1326507024
        %v3504 = vsel %vm3492, %v3486, %v3503
        %v3505 = vsel %vm3491, %v3502, %v3504
        %v3506 = vshll.u32 %v3466, 8
        %v3507 = vand.u32 %v3506, 65535
        %v3508 = vshrl.u32 %v3506, 16
        %v3509 = vand.u32 %v3505, 65535
        %v3510 = vshrl.u32 %v3505, 16
        %v3511 = vmul.u32 %v3507, %v3509
        %v3512 = vmul.u32 %v3507, %v3510
        %v3513 = vmul.u32 %v3508, %v3509
        %v3514 = vmul.u32 %v3508, %v3510
        %v3515 = vshll.u32 %v3512, 16
        %v3516 = vshrl.u32 %v3512, 16
        %v3517 = vshll.u32 %v3513, 16
        %v3518 = vshrl.u32 %v3513, 16
        %vm3519 = vc.u32 %v3511, %v3515
        %v3520 = vsel %vm3519, 1, 0
        %v3521 = vadd.s32 %v3511, %v3515
        %v3522 = vadd.s32 %v3514, %v3520
        %vm3523 = vc.u32 %v3521, %v3517
        %v3524 = vsel %vm3523, 1, 0
        %v3525 = vadd.s32 %v3521, %v3517
        %v3526 = vadd.s32 %v3522, %v3524
        %v3527 = vadd.s32 %v3526, %v3516
        %v3528 = vadd.s32 %v3527, %v3518
        %v3529 = vand.u32 %v3506, 65535
        %v3530 = vshrl.u32 %v3506, 16
        %v3531 = vand.u32 %v3501, 65535
        %v3532 = vshrl.u32 %v3501, 16
        %v3533 = vmul.u32 %v3529, %v3531
        %v3534 = vmul.u32 %v3529, %v3532
        %v3535 = vmul.u32 %v3530, %v3531
        %v3536 = vmul.u32 %v3530, %v3532
        %v3537 = vshll.u32 %v3534, 16
        %v3538 = vshrl.u32 %v3534, 16
        %v3539 = vshll.u32 %v3535, 16
        %v3540 = vshrl.u32 %v3535, 16
        %vm3541 = vc.u32 %v3533, %v3537
        %v3542 = vsel %vm3541, 1, 0
        %v3543 = vadd.s32 %v3533, %v3537
        %v3544 = vadd.s32 %v3536, %v3542
        %vm3545 = vc.u32 %v3543, %v3539
        %v3546 = vsel %vm3545, 1, 0
        %v3547 = vadd.s32 %v3543, %v3539
        %v3548 = vadd.s32 %v3544, %v3546
        %v3549 = vadd.s32 %v3548, %v3538
        %v3550 = vadd.s32 %v3549, %v3540
        %v3551 = vmul.u32 %v3506, %v3497
        %v3552 = vadd.s32 %v3528, %v3547
        %vm3553 = vc.u32 %v3528, %v3547
        %v3554 = vadd.s32 %v3550, 1
        %v3555 = vsel %vm3553, %v3554, %v3550
        %v3556 = vadd.s32 %v3551, %v3555
        %v3557 = vadd.s32 %v3556, 536870912
        %v3558 = vshrl.u32 %v3557, 30
        %v3559 = vshll.u32 %v3558, 30
        %v3560 = vsub.s32 %v3556, %v3559
        %vm3561 = vcmp.lt.s32.totalorder %v3560, 0
        %v3562 = vsub.s32 0, %v3560
        %v3563 = vsel %vm3561, %v3562, %v3560
        %v3564 = vclz %v3563
        %v3565 = vsub.s32 %v3564, 2
        %vm3566 = vcmp.gt.s32.totalorder 0, %v3565
        %v3567 = vsel %vm3566, 0, %v3565
        %v3568 = vsub.s32 32, %v3567
        %v3569 = vshll.u32 %v3560, %v3567
        %v3570 = vshrl.u32 %v3552, %v3568
        %v3571 = vor.u32 %v3569, %v3570
        %v3572 = vsub.s32 4294967266, %v3567
        %v3573 = vadd.s32 %v3572, 127
        %v3574 = vshll.u32 %v3573, 23
        %v3575 = vor.u32 4788187, %v3574
        %v3576 = vand.u32 2147483647, %v3575
        %v3578 = vcvt.s32.f32 %v3571
        %v3579 = vmul.f32 %v3578, %v3576
        %v3580 = vxor.u32 %v3579, 2147483648
        %v3581 = vsel %vm3460, %v3580, %v3579
        %v3582 = vsub.s32 4, %v3558
        %v3583 = vsel %vm3460, %v3582, %v3558
        %v3584 = vsel %vm3459, %v192, %v3581
        %v3585 = vsel %vm3459, 0, %v3583
        %v3586 = vmul.f32 %v3584, %v3584
        %v3587 = vmul.f32 %v3586, -0.001358992
        %v3588 = vadd.f32 %v3587, 0.041655596
        %v3589 = vmul.f32 %v3586, %v3588
        %v3590 = vadd.f32 %v3589, -0.4999988
        %v3591 = vmul.f32 %v3586, %v3590
        %v3592 = vadd.f32 1.0, %v3591
        %v3593 = vmul.f32 %v3584, %v3584
        %v3594 = vmul.f32 %v3593, -0.00019511016
        %v3595 = vadd.f32 %v3594, 0.008332121
        %v3596 = vmul.f32 %v3593, %v3595
        %v3597 = vadd.f32 %v3596, -0.16666654
        %v3598 = vmul.f32 %v3593, %v3597
        %v3599 = vadd.f32 %v3598, 1.0
        %v3600 = vmul.f32 %v3599, %v3584
        %vm3601 = vweird.f32 %v192
        %v3602 = vadd.s32 %v3585, 3
        %v3603 = vand.u32 %v3602, 3
        %vm3604 = vcmp.lt.s32.totalorder %v3603, 2
        %vm3605 = vcmp.eq.s32.totalorder %v3603, 0
        %v3606 = vxor.u32 %v3600, 2147483648
        %v3607 = vsel %vm3605, %v3592, %v3606
        %vm3608 = vcmp.eq.s32.totalorder %v3603, 2
        %v3609 = vxor.u32 %v3592, 2147483648
        %v3610 = vsel %vm3608, %v3609, %v3600
        %v3611 = vsel %vm3604, %v3607, %v3610
        %v3612 = vsel %vm3601, nan, %v3611
        %v3613 = vand.u32 2147483647, %v193
        %vm3614 = vcmp.le.f32.partialorder %v3613, 0.7853982
        %vm3615 = vcmp.lt.s32.totalorder %v193, 0
        %v3616 = vand.u32 %v193, 2139095040
        %v3617 = vshrl.u32 %v3616, 23
        %v3618 = vsub.s32 %v3617, 127
        %v3619 = vand.u32 2147483647, %v193
        %v3620 = vand.u32 %v3619, 8388607
        %v3621 = vor.u32 %v3620, 8388608
        %v3622 = vsub.s32 0, %v3621
        %v3623 = vadd.s32 %v3618, 1
        %vm3624 = vcmp.gt.s32.totalorder %v3623, 0
        %v3625 = vsel %vm3624, %v3623, 0
        %v3626 = vshrl.u32 %v3625, 5
        %v3627 = vand.u32 %v3625, 31
        %v3628 = vsub.s32 32, %v3627
        %v3629 = vshrl.u32 683565275, %v3628
        %v3630 = vshll.u32 683565275, %v3627
        %v3631 = vshrl.u32 2475754826, %v3628
        %v3632 = vor.u32 %v3630, %v3631
        %v3633 = vshll.u32 2475754826, %v3627
        %v3634 = vshrl.u32 2131351028, %v3628
        %v3635 = vor.u32 %v3633, %v3634
        %v3636 = vshll.u32 2131351028, %v3627
        %v3637 = vshrl.u32 2102212464, %v3628
        %v3638 = vor.u32 %v3636, %v3637
        %v3639 = vshll.u32 2102212464, %v3627
        %v3640 = vshrl.u32 920167782, %v3628
        %v3641 = vor.u32 %v3639, %v3640
        %v3642 = vshll.u32 920167782, %v3627
        %v3643 = vshrl.u32 1326507024, %v3628
        %v3644 = vor.u32 %v3642, %v3643
        %vm3645 = vcmp.lt.s32.totalorder %v3626, 1
        %vm3646 = vcmp.lt.s32.totalorder %v3626, 2
        %vm3647 = vcmp.lt.s32.totalorder %v3626, 3
        %vm3648 = vcmp.lt.s32.totalorder %v3626, 4
        %v3649 = vsel %vm3645, %v3629, %v3632
        %v3650 = vsel %vm3648, %v3638, 2102212464
        %v3651 = vsel %vm3647, %v3635, %v3650
        %v3652 = vsel %vm3646, %v3649, %v3651
        %v3653 = vsel %vm3645, %v3632, %v3635
        %v3654 = vsel %vm3648, %v3641, 920167782
        %v3655 = vsel %vm3647, %v3638, %v3654
        %v3656 = vsel %vm3646, %v3653, %v3655
        %v3657 = vsel %vm3645, %v3635, %v3638
        %v3658 = vsel %vm3648, %v3644, 1326507024
        %v3659 = vsel %vm3647, %v3641, %v3658
        %v3660 = vsel %vm3646, %v3657, %v3659
        %v3661 = vshll.u32 %v3621, 8
        %v3662 = vand.u32 %v3661, 65535
        %v3663 = vshrl.u32 %v3661, 16
        %v3664 = vand.u32 %v3660, 65535
        %v3665 = vshrl.u32 %v3660, 16
        %v3666 = vmul.u32 %v3662, %v3664
        %v3667 = vmul.u32 %v3662, %v3665
        %v3668 = vmul.u32 %v3663, %v3664
        %v3669 = vmul.u32 %v3663, %v3665
        %v3670 = vshll.u32 %v3667, 16
        %v3671 = vshrl.u32 %v3667, 16
        %v3672 = vshll.u32 %v3668, 16
        %v3673 = vshrl.u32 %v3668, 16
        %vm3674 = vc.u32 %v3666, %v3670
        %v3675 = vsel %vm3674, 1, 0
        %v3676 = vadd.s32 %v3666, %v3670
        %v3677 = vadd.s32 %v3669, %v3675
        %vm3678 = vc.u32 %v3676, %v3672
        %v3679 = vsel %vm3678, 1, 0
        %v3680 = vadd.s32 %v3676, %v3672
        %v3681 = vadd.s32 %v3677, %v3679
        %v3682 = vadd.s32 %v3681, %v3671
        %v3683 = vadd.s32 %v3682, %v3673
        %v3684 = vand.u32 %v3661, 65535
        %v3685 = vshrl.u32 %v3661, 16
        %v3686 = vand.u32 %v3656, 65535
        %v3687 = vshrl.u32 %v3656, 16
        %v3688 = vmul.u32 %v3684, %v3686
        %v3689 = vmul.u32 %v3684, %v3687
        %v3690 = vmul.u32 %v3685, %v3686
        %v3691 = vmul.u32 %v3685, %v3687
        %v3692 = vshll.u32 %v3689, 16
        %v3693 = vshrl.u32 %v3689, 16
        %v3694 = vshll.u32 %v3690, 16
        %v3695 = vshrl.u32 %v3690, 16
        %vm3696 = vc.u32 %v3688, %v3692
        %v3697 = vsel %vm3696, 1, 0
        %v3698 = vadd.s32 %v3688, %v3692
        %v3699 = vadd.s32 %v3691, %v3697
        %vm3700 = vc.u32 %v3698, %v3694
        %v3701 = vsel %vm3700, 1, 0
        %v3702 = vadd.s32 %v3698, %v3694
        %v3703 = vadd.s32 %v3699, %v3701
        %v3704 = vadd.s32 %v3703, %v3693
        %v3705 = vadd.s32 %v3704, %v3695
        %v3706 = vmul.u32 %v3661, %v3652
        %v3707 = vadd.s32 %v3683, %v3702
        %vm3708 = vc.u32 %v3683, %v3702
        %v3709 = vadd.s32 %v3705, 1
        %v3710 = vsel %vm3708, %v3709, %v3705
        %v3711 = vadd.s32 %v3706, %v3710
        %v3712 = vadd.s32 %v3711, 536870912
        %v3713 = vshrl.u32 %v3712, 30
        %v3714 = vshll.u32 %v3713, 30
        %v3715 = vsub.s32 %v3711, %v3714
        %vm3716 = vcmp.lt.s32.totalorder %v3715, 0
        %v3717 = vsub.s32 0, %v3715
        %v3718 = vsel %vm3716, %v3717, %v3715
        %v3719 = vclz %v3718
        %v3720 = vsub.s32 %v3719, 2
        %vm3721 = vcmp.gt.s32.totalorder 0, %v3720
        %v3722 = vsel %vm3721, 0, %v3720
        %v3723 = vsub.s32 32, %v3722
        %v3724 = vshll.u32 %v3715, %v3722
        %v3725 = vshrl.u32 %v3707, %v3723
        %v3726 = vor.u32 %v3724, %v3725
        %v3727 = vsub.s32 4294967266, %v3722
        %v3728 = vadd.s32 %v3727, 127
        %v3729 = vshll.u32 %v3728, 23
        %v3730 = vor.u32 4788187, %v3729
        %v3731 = vand.u32 2147483647, %v3730
        %v3733 = vcvt.s32.f32 %v3726
        %v3734 = vmul.f32 %v3733, %v3731
        %v3735 = vxor.u32 %v3734, 2147483648
        %v3736 = vsel %vm3615, %v3735, %v3734
        %v3737 = vsub.s32 4, %v3713
        %v3738 = vsel %vm3615, %v3737, %v3713
        %v3739 = vsel %vm3614, %v193, %v3736
        %v3740 = vsel %vm3614, 0, %v3738
        %v3741 = vmul.f32 %v3739, %v3739
        %v3742 = vmul.f32 %v3741, -0.001358992
        %v3743 = vadd.f32 %v3742, 0.041655596
        %v3744 = vmul.f32 %v3741, %v3743
        %v3745 = vadd.f32 %v3744, -0.4999988
        %v3746 = vmul.f32 %v3741, %v3745
        %v3747 = vadd.f32 1.0, %v3746
        %v3748 = vmul.f32 %v3739, %v3739
        %v3749 = vmul.f32 %v3748, -0.00019511016
        %v3750 = vadd.f32 %v3749, 0.008332121
        %v3751 = vmul.f32 %v3748, %v3750
        %v3752 = vadd.f32 %v3751, -0.16666654
        %v3753 = vmul.f32 %v3748, %v3752
        %v3754 = vadd.f32 %v3753, 1.0
        %v3755 = vmul.f32 %v3754, %v3739
        %vm3756 = vweird.f32 %v193
        %v3757 = vadd.s32 %v3740, 3
        %v3758 = vand.u32 %v3757, 3
        %vm3759 = vcmp.lt.s32.totalorder %v3758, 2
        %vm3760 = vcmp.eq.s32.totalorder %v3758, 0
        %v3761 = vxor.u32 %v3755, 2147483648
        %v3762 = vsel %vm3760, %v3747, %v3761
        %vm3763 = vcmp.eq.s32.totalorder %v3758, 2
        %v3764 = vxor.u32 %v3747, 2147483648
        %v3765 = vsel %vm3763, %v3764, %v3755
        %v3766 = vsel %vm3759, %v3762, %v3765
        %v3767 = vsel %vm3756, nan, %v3766
        %v3768 = vand.u32 2147483647, %v194
        %vm3769 = vcmp.le.f32.partialorder %v3768, 0.7853982
        %vm3770 = vcmp.lt.s32.totalorder %v194, 0
        %v3771 = vand.u32 %v194, 2139095040
        %v3772 = vshrl.u32 %v3771, 23
        %v3773 = vsub.s32 %v3772, 127
        %v3774 = vand.u32 2147483647, %v194
        %v3775 = vand.u32 %v3774, 8388607
        %v3776 = vor.u32 %v3775, 8388608
        %v3777 = vsub.s32 0, %v3776
        %v3778 = vadd.s32 %v3773, 1
        %vm3779 = vcmp.gt.s32.totalorder %v3778, 0
        %v3780 = vsel %vm3779, %v3778, 0
        %v3781 = vshrl.u32 %v3780, 5
        %v3782 = vand.u32 %v3780, 31
        %v3783 = vsub.s32 32, %v3782
        %v3784 = vshrl.u32 683565275, %v3783
        %v3785 = vshll.u32 683565275, %v3782
        %v3786 = vshrl.u32 2475754826, %v3783
        %v3787 = vor.u32 %v3785, %v3786
        %v3788 = vshll.u32 2475754826, %v3782
        %v3789 = vshrl.u32 2131351028, %v3783
        %v3790 = vor.u32 %v3788, %v3789
        %v3791 = vshll.u32 2131351028, %v3782
        %v3792 = vshrl.u32 2102212464, %v3783
        %v3793 = vor.u32 %v3791, %v3792
        %v3794 = vshll.u32 2102212464, %v3782
        %v3795 = vshrl.u32 920167782, %v3783
        %v3796 = vor.u32 %v3794, %v3795
        %v3797 = vshll.u32 920167782, %v3782
        %v3798 = vshrl.u32 1326507024, %v3783
        %v3799 = vor.u32 %v3797, %v3798
        %vm3800 = vcmp.lt.s32.totalorder %v3781, 1
        %vm3801 = vcmp.lt.s32.totalorder %v3781, 2
        %vm3802 = vcmp.lt.s32.totalorder %v3781, 3
        %vm3803 = vcmp.lt.s32.totalorder %v3781, 4
        %v3804 = vsel %vm3800, %v3784, %v3787
        %v3805 = vsel %vm3803, %v3793, 2102212464
        %v3806 = vsel %vm3802, %v3790, %v3805
        %v3807 = vsel %vm3801, %v3804, %v3806
        %v3808 = vsel %vm3800, %v3787, %v3790
        %v3809 = vsel %vm3803, %v3796, 920167782
        %v3810 = vsel %vm3802, %v3793, %v3809
        %v3811 = vsel %vm3801, %v3808, %v3810
        %v3812 = vsel %vm3800, %v3790, %v3793
        %v3813 = vsel %vm3803, %v3799, 1326507024
        %v3814 = vsel %vm3802, %v3796, %v3813
        %v3815 = vsel %vm3801, %v3812, %v3814
        %v3816 = vshll.u32 %v3776, 8
        %v3817 = vand.u32 %v3816, 65535
        %v3818 = vshrl.u32 %v3816, 16
        %v3819 = vand.u32 %v3815, 65535
        %v3820 = vshrl.u32 %v3815, 16
        %v3821 = vmul.u32 %v3817, %v3819
        %v3822 = vmul.u32 %v3817, %v3820
        %v3823 = vmul.u32 %v3818, %v3819
        %v3824 = vmul.u32 %v3818, %v3820
        %v3825 = vshll.u32 %v3822, 16
        %v3826 = vshrl.u32 %v3822, 16
        %v3827 = vshll.u32 %v3823, 16
        %v3828 = vshrl.u32 %v3823, 16
        %vm3829 = vc.u32 %v3821, %v3825
        %v3830 = vsel %vm3829, 1, 0
        %v3831 = vadd.s32 %v3821, %v3825
        %v3832 = vadd.s32 %v3824, %v3830
        %vm3833 = vc.u32 %v3831, %v3827
        %v3834 = vsel %vm3833, 1, 0
        %v3835 = vadd.s32 %v3831, %v3827
        %v3836 = vadd.s32 %v3832, %v3834
        %v3837 = vadd.s32 %v3836, %v3826
        %v3838 = vadd.s32 %v3837, %v3828
        %v3839 = vand.u32 %v3816, 65535
        %v3840 = vshrl.u32 %v3816, 16
        %v3841 = vand.u32 %v3811, 65535
        %v3842 = vshrl.u32 %v3811, 16
        %v3843 = vmul.u32 %v3839, %v3841
        %v3844 = vmul.u32 %v3839, %v3842
        %v3845 = vmul.u32 %v3840, %v3841
        %v3846 = vmul.u32 %v3840, %v3842
        %v3847 = vshll.u32 %v3844, 16
        %v3848 = vshrl.u32 %v3844, 16
        %v3849 = vshll.u32 %v3845, 16
        %v3850 = vshrl.u32 %v3845, 16
        %vm3851 = vc.u32 %v3843, %v3847
        %v3852 = vsel %vm3851, 1, 0
        %v3853 = vadd.s32 %v3843, %v3847
        %v3854 = vadd.s32 %v3846, %v3852
        %vm3855 = vc.u32 %v3853, %v3849
        %v3856 = vsel %vm3855, 1, 0
        %v3857 = vadd.s32 %v3853, %v3849
        %v3858 = vadd.s32 %v3854, %v3856
        %v3859 = vadd.s32 %v3858, %v3848
        %v3860 = vadd.s32 %v3859, %v3850
        %v3861 = vmul.u32 %v3816, %v3807
        %v3862 = vadd.s32 %v3838, %v3857
        %vm3863 = vc.u32 %v3838, %v3857
        %v3864 = vadd.s32 %v3860, 1
        %v3865 = vsel %vm3863, %v3864, %v3860
        %v3866 = vadd.s32 %v3861, %v3865
        %v3867 = vadd.s32 %v3866, 536870912
        %v3868 = vshrl.u32 %v3867, 30
        %v3869 = vshll.u32 %v3868, 30
        %v3870 = vsub.s32 %v3866, %v3869
        %vm3871 = vcmp.lt.s32.totalorder %v3870, 0
        %v3872 = vsub.s32 0, %v3870
        %v3873 = vsel %vm3871, %v3872, %v3870
        %v3874 = vclz %v3873
        %v3875 = vsub.s32 %v3874, 2
        %vm3876 = vcmp.gt.s32.totalorder 0, %v3875
        %v3877 = vsel %vm3876, 0, %v3875
        %v3878 = vsub.s32 32, %v3877
        %v3879 = vshll.u32 %v3870, %v3877
        %v3880 = vshrl.u32 %v3862, %v3878
        %v3881 = vor.u32 %v3879, %v3880
        %v3882 = vsub.s32 4294967266, %v3877
        %v3883 = vadd.s32 %v3882, 127
        %v3884 = vshll.u32 %v3883, 23
        %v3885 = vor.u32 4788187, %v3884
        %v3886 = vand.u32 2147483647, %v3885
        %v3888 = vcvt.s32.f32 %v3881
        %v3889 = vmul.f32 %v3888, %v3886
        %v3890 = vxor.u32 %v3889, 2147483648
        %v3891 = vsel %vm3770, %v3890, %v3889
        %v3892 = vsub.s32 4, %v3868
        %v3893 = vsel %vm3770, %v3892, %v3868
        %v3894 = vsel %vm3769, %v194, %v3891
        %v3895 = vsel %vm3769, 0, %v3893
        %v3896 = vmul.f32 %v3894, %v3894
        %v3897 = vmul.f32 %v3896, -0.001358992
        %v3898 = vadd.f32 %v3897, 0.041655596
        %v3899 = vmul.f32 %v3896, %v3898
        %v3900 = vadd.f32 %v3899, -0.4999988
        %v3901 = vmul.f32 %v3896, %v3900
        %v3902 = vadd.f32 1.0, %v3901
        %v3903 = vmul.f32 %v3894, %v3894
        %v3904 = vmul.f32 %v3903, -0.00019511016
        %v3905 = vadd.f32 %v3904, 0.008332121
        %v3906 = vmul.f32 %v3903, %v3905
        %v3907 = vadd.f32 %v3906, -0.16666654
        %v3908 = vmul.f32 %v3903, %v3907
        %v3909 = vadd.f32 %v3908, 1.0
        %v3910 = vmul.f32 %v3909, %v3894
        %vm3911 = vweird.f32 %v194
        %v3912 = vadd.s32 %v3895, 3
        %v3913 = vand.u32 %v3912, 3
        %vm3914 = vcmp.lt.s32.totalorder %v3913, 2
        %vm3915 = vcmp.eq.s32.totalorder %v3913, 0
        %v3916 = vxor.u32 %v3910, 2147483648
        %v3917 = vsel %vm3915, %v3902, %v3916
        %vm3918 = vcmp.eq.s32.totalorder %v3913, 2
        %v3919 = vxor.u32 %v3902, 2147483648
        %v3920 = vsel %vm3918, %v3919, %v3910
        %v3921 = vsel %vm3914, %v3917, %v3920
        %v3922 = vsel %vm3911, nan, %v3921
        %v3923 = vand.u32 2147483647, %v195
        %vm3924 = vcmp.le.f32.partialorder %v3923, 0.7853982
        %vm3925 = vcmp.lt.s32.totalorder %v195, 0
        %v3926 = vand.u32 %v195, 2139095040
        %v3927 = vshrl.u32 %v3926, 23
        %v3928 = vsub.s32 %v3927, 127
        %v3929 = vand.u32 2147483647, %v195
        %v3930 = vand.u32 %v3929, 8388607
        %v3931 = vor.u32 %v3930, 8388608
        %v3932 = vsub.s32 0, %v3931
        %v3933 = vadd.s32 %v3928, 1
        %vm3934 = vcmp.gt.s32.totalorder %v3933, 0
        %v3935 = vsel %vm3934, %v3933, 0
        %v3936 = vshrl.u32 %v3935, 5
        %v3937 = vand.u32 %v3935, 31
        %v3938 = vsub.s32 32, %v3937
        %v3939 = vshrl.u32 683565275, %v3938
        %v3940 = vshll.u32 683565275, %v3937
        %v3941 = vshrl.u32 2475754826, %v3938
        %v3942 = vor.u32 %v3940, %v3941
        %v3943 = vshll.u32 2475754826, %v3937
        %v3944 = vshrl.u32 2131351028, %v3938
        %v3945 = vor.u32 %v3943, %v3944
        %v3946 = vshll.u32 2131351028, %v3937
        %v3947 = vshrl.u32 2102212464, %v3938
        %v3948 = vor.u32 %v3946, %v3947
        %v3949 = vshll.u32 2102212464, %v3937
        %v3950 = vshrl.u32 920167782, %v3938
        %v3951 = vor.u32 %v3949, %v3950
        %v3952 = vshll.u32 920167782, %v3937
        %v3953 = vshrl.u32 1326507024, %v3938
        %v3954 = vor.u32 %v3952, %v3953
        %vm3955 = vcmp.lt.s32.totalorder %v3936, 1
        %vm3956 = vcmp.lt.s32.totalorder %v3936, 2
        %vm3957 = vcmp.lt.s32.totalorder %v3936, 3
        %vm3958 = vcmp.lt.s32.totalorder %v3936, 4
        %v3959 = vsel %vm3955, %v3939, %v3942
        %v3960 = vsel %vm3958, %v3948, 2102212464
        %v3961 = vsel %vm3957, %v3945, %v3960
        %v3962 = vsel %vm3956, %v3959, %v3961
        %v3963 = vsel %vm3955, %v3942, %v3945
        %v3964 = vsel %vm3958, %v3951, 920167782
        %v3965 = vsel %vm3957, %v3948, %v3964
        %v3966 = vsel %vm3956, %v3963, %v3965
        %v3967 = vsel %vm3955, %v3945, %v3948
        %v3968 = vsel %vm3958, %v3954, 1326507024
        %v3969 = vsel %vm3957, %v3951, %v3968
        %v3970 = vsel %vm3956, %v3967, %v3969
        %v3971 = vshll.u32 %v3931, 8
        %v3972 = vand.u32 %v3971, 65535
        %v3973 = vshrl.u32 %v3971, 16
        %v3974 = vand.u32 %v3970, 65535
        %v3975 = vshrl.u32 %v3970, 16
        %v3976 = vmul.u32 %v3972, %v3974
        %v3977 = vmul.u32 %v3972, %v3975
        %v3978 = vmul.u32 %v3973, %v3974
        %v3979 = vmul.u32 %v3973, %v3975
        %v3980 = vshll.u32 %v3977, 16
        %v3981 = vshrl.u32 %v3977, 16
        %v3982 = vshll.u32 %v3978, 16
        %v3983 = vshrl.u32 %v3978, 16
        %vm3984 = vc.u32 %v3976, %v3980
        %v3985 = vsel %vm3984, 1, 0
        %v3986 = vadd.s32 %v3976, %v3980
        %v3987 = vadd.s32 %v3979, %v3985
        %vm3988 = vc.u32 %v3986, %v3982
        %v3989 = vsel %vm3988, 1, 0
        %v3990 = vadd.s32 %v3986, %v3982
        %v3991 = vadd.s32 %v3987, %v3989
        %v3992 = vadd.s32 %v3991, %v3981
        %v3993 = vadd.s32 %v3992, %v3983
        %v3994 = vand.u32 %v3971, 65535
        %v3995 = vshrl.u32 %v3971, 16
        %v3996 = vand.u32 %v3966, 65535
        %v3997 = vshrl.u32 %v3966, 16
        %v3998 = vmul.u32 %v3994, %v3996
        %v3999 = vmul.u32 %v3994, %v3997
        %v4000 = vmul.u32 %v3995, %v3996
        %v4001 = vmul.u32 %v3995, %v3997
        %v4002 = vshll.u32 %v3999, 16
        %v4003 = vshrl.u32 %v3999, 16
        %v4004 = vshll.u32 %v4000, 16
        %v4005 = vshrl.u32 %v4000, 16
        %vm4006 = vc.u32 %v3998, %v4002
        %v4007 = vsel %vm4006, 1, 0
        %v4008 = vadd.s32 %v3998, %v4002
        %v4009 = vadd.s32 %v4001, %v4007
        %vm4010 = vc.u32 %v4008, %v4004
        %v4011 = vsel %vm4010, 1, 0
        %v4012 = vadd.s32 %v4008, %v4004
        %v4013 = vadd.s32 %v4009, %v4011
        %v4014 = vadd.s32 %v4013, %v4003
        %v4015 = vadd.s32 %v4014, %v4005
        %v4016 = vmul.u32 %v3971, %v3962
        %v4017 = vadd.s32 %v3993, %v4012
        %vm4018 = vc.u32 %v3993, %v4012
        %v4019 = vadd.s32 %v4015, 1
        %v4020 = vsel %vm4018, %v4019, %v4015
        %v4021 = vadd.s32 %v4016, %v4020
        %v4022 = vadd.s32 %v4021, 536870912
        %v4023 = vshrl.u32 %v4022, 30
        %v4024 = vshll.u32 %v4023, 30
        %v4025 = vsub.s32 %v4021, %v4024
        %vm4026 = vcmp.lt.s32.totalorder %v4025, 0
        %v4027 = vsub.s32 0, %v4025
        %v4028 = vsel %vm4026, %v4027, %v4025
        %v4029 = vclz %v4028
        %v4030 = vsub.s32 %v4029, 2
        %vm4031 = vcmp.gt.s32.totalorder 0, %v4030
        %v4032 = vsel %vm4031, 0, %v4030
        %v4033 = vsub.s32 32, %v4032
        %v4034 = vshll.u32 %v4025, %v4032
        %v4035 = vshrl.u32 %v4017, %v4033
        %v4036 = vor.u32 %v4034, %v4035
        %v4037 = vsub.s32 4294967266, %v4032
        %v4038 = vadd.s32 %v4037, 127
        %v4039 = vshll.u32 %v4038, 23
        %v4040 = vor.u32 4788187, %v4039
        %v4041 = vand.u32 2147483647, %v4040
        %v4043 = vcvt.s32.f32 %v4036
        %v4044 = vmul.f32 %v4043, %v4041
        %v4045 = vxor.u32 %v4044, 2147483648
        %v4046 = vsel %vm3925, %v4045, %v4044
        %v4047 = vsub.s32 4, %v4023
        %v4048 = vsel %vm3925, %v4047, %v4023
        %v4049 = vsel %vm3924, %v195, %v4046
        %v4050 = vsel %vm3924, 0, %v4048
        %v4051 = vmul.f32 %v4049, %v4049
        %v4052 = vmul.f32 %v4051, -0.001358992
        %v4053 = vadd.f32 %v4052, 0.041655596
        %v4054 = vmul.f32 %v4051, %v4053
        %v4055 = vadd.f32 %v4054, -0.4999988
        %v4056 = vmul.f32 %v4051, %v4055
        %v4057 = vadd.f32 1.0, %v4056
        %v4058 = vmul.f32 %v4049, %v4049
        %v4059 = vmul.f32 %v4058, -0.00019511016
        %v4060 = vadd.f32 %v4059, 0.008332121
        %v4061 = vmul.f32 %v4058, %v4060
        %v4062 = vadd.f32 %v4061, -0.16666654
        %v4063 = vmul.f32 %v4058, %v4062
        %v4064 = vadd.f32 %v4063, 1.0
        %v4065 = vmul.f32 %v4064, %v4049
        %vm4066 = vweird.f32 %v195
        %v4067 = vadd.s32 %v4050, 3
        %v4068 = vand.u32 %v4067, 3
        %vm4069 = vcmp.lt.s32.totalorder %v4068, 2
        %vm4070 = vcmp.eq.s32.totalorder %v4068, 0
        %v4071 = vxor.u32 %v4065, 2147483648
        %v4072 = vsel %vm4070, %v4057, %v4071
        %vm4073 = vcmp.eq.s32.totalorder %v4068, 2
        %v4074 = vxor.u32 %v4057, 2147483648
        %v4075 = vsel %vm4073, %v4074, %v4065
        %v4076 = vsel %vm4069, %v4072, %v4075
        %v4077 = vsel %vm4066, nan, %v4076
        %v4078 = vand.u32 2147483647, %v196
        %vm4079 = vcmp.le.f32.partialorder %v4078, 0.7853982
        %vm4080 = vcmp.lt.s32.totalorder %v196, 0
        %v4081 = vand.u32 %v196, 2139095040
        %v4082 = vshrl.u32 %v4081, 23
        %v4083 = vsub.s32 %v4082, 127
        %v4084 = vand.u32 2147483647, %v196
        %v4085 = vand.u32 %v4084, 8388607
        %v4086 = vor.u32 %v4085, 8388608
        %v4087 = vsub.s32 0, %v4086
        %v4088 = vadd.s32 %v4083, 1
        %vm4089 = vcmp.gt.s32.totalorder %v4088, 0
        %v4090 = vsel %vm4089, %v4088, 0
        %v4091 = vshrl.u32 %v4090, 5
        %v4092 = vand.u32 %v4090, 31
        %v4093 = vsub.s32 32, %v4092
        %v4094 = vshrl.u32 683565275, %v4093
        %v4095 = vshll.u32 683565275, %v4092
        %v4096 = vshrl.u32 2475754826, %v4093
        %v4097 = vor.u32 %v4095, %v4096
        %v4098 = vshll.u32 2475754826, %v4092
        %v4099 = vshrl.u32 2131351028, %v4093
        %v4100 = vor.u32 %v4098, %v4099
        %v4101 = vshll.u32 2131351028, %v4092
        %v4102 = vshrl.u32 2102212464, %v4093
        %v4103 = vor.u32 %v4101, %v4102
        %v4104 = vshll.u32 2102212464, %v4092
        %v4105 = vshrl.u32 920167782, %v4093
        %v4106 = vor.u32 %v4104, %v4105
        %v4107 = vshll.u32 920167782, %v4092
        %v4108 = vshrl.u32 1326507024, %v4093
        %v4109 = vor.u32 %v4107, %v4108
        %vm4110 = vcmp.lt.s32.totalorder %v4091, 1
        %vm4111 = vcmp.lt.s32.totalorder %v4091, 2
        %vm4112 = vcmp.lt.s32.totalorder %v4091, 3
        %vm4113 = vcmp.lt.s32.totalorder %v4091, 4
        %v4114 = vsel %vm4110, %v4094, %v4097
        %v4115 = vsel %vm4113, %v4103, 2102212464
        %v4116 = vsel %vm4112, %v4100, %v4115
        %v4117 = vsel %vm4111, %v4114, %v4116
        %v4118 = vsel %vm4110, %v4097, %v4100
        %v4119 = vsel %vm4113, %v4106, 920167782
        %v4120 = vsel %vm4112, %v4103, %v4119
        %v4121 = vsel %vm4111, %v4118, %v4120
        %v4122 = vsel %vm4110, %v4100, %v4103
        %v4123 = vsel %vm4113, %v4109, 1326507024
        %v4124 = vsel %vm4112, %v4106, %v4123
        %v4125 = vsel %vm4111, %v4122, %v4124
        %v4126 = vshll.u32 %v4086, 8
        %v4127 = vand.u32 %v4126, 65535
        %v4128 = vshrl.u32 %v4126, 16
        %v4129 = vand.u32 %v4125, 65535
        %v4130 = vshrl.u32 %v4125, 16
        %v4131 = vmul.u32 %v4127, %v4129
        %v4132 = vmul.u32 %v4127, %v4130
        %v4133 = vmul.u32 %v4128, %v4129
        %v4134 = vmul.u32 %v4128, %v4130
        %v4135 = vshll.u32 %v4132, 16
        %v4136 = vshrl.u32 %v4132, 16
        %v4137 = vshll.u32 %v4133, 16
        %v4138 = vshrl.u32 %v4133, 16
        %vm4139 = vc.u32 %v4131, %v4135
        %v4140 = vsel %vm4139, 1, 0
        %v4141 = vadd.s32 %v4131, %v4135
        %v4142 = vadd.s32 %v4134, %v4140
        %vm4143 = vc.u32 %v4141, %v4137
        %v4144 = vsel %vm4143, 1, 0
        %v4145 = vadd.s32 %v4141, %v4137
        %v4146 = vadd.s32 %v4142, %v4144
        %v4147 = vadd.s32 %v4146, %v4136
        %v4148 = vadd.s32 %v4147, %v4138
        %v4149 = vand.u32 %v4126, 65535
        %v4150 = vshrl.u32 %v4126, 16
        %v4151 = vand.u32 %v4121, 65535
        %v4152 = vshrl.u32 %v4121, 16
        %v4153 = vmul.u32 %v4149, %v4151
        %v4154 = vmul.u32 %v4149, %v4152
        %v4155 = vmul.u32 %v4150, %v4151
        %v4156 = vmul.u32 %v4150, %v4152
        %v4157 = vshll.u32 %v4154, 16
        %v4158 = vshrl.u32 %v4154, 16
        %v4159 = vshll.u32 %v4155, 16
        %v4160 = vshrl.u32 %v4155, 16
        %vm4161 = vc.u32 %v4153, %v4157
        %v4162 = vsel %vm4161, 1, 0
        %v4163 = vadd.s32 %v4153, %v4157
        %v4164 = vadd.s32 %v4156, %v4162
        %vm4165 = vc.u32 %v4163, %v4159
        %v4166 = vsel %vm4165, 1, 0
        %v4167 = vadd.s32 %v4163, %v4159
        %v4168 = vadd.s32 %v4164, %v4166
        %v4169 = vadd.s32 %v4168, %v4158
        %v4170 = vadd.s32 %v4169, %v4160
        %v4171 = vmul.u32 %v4126, %v4117
        %v4172 = vadd.s32 %v4148, %v4167
        %vm4173 = vc.u32 %v4148, %v4167
        %v4174 = vadd.s32 %v4170, 1
        %v4175 = vsel %vm4173, %v4174, %v4170
        %v4176 = vadd.s32 %v4171, %v4175
        %v4177 = vadd.s32 %v4176, 536870912
        %v4178 = vshrl.u32 %v4177, 30
        %v4179 = vshll.u32 %v4178, 30
        %v4180 = vsub.s32 %v4176, %v4179
        %vm4181 = vcmp.lt.s32.totalorder %v4180, 0
        %v4182 = vsub.s32 0, %v4180
        %v4183 = vsel %vm4181, %v4182, %v4180
        %v4184 = vclz %v4183
        %v4185 = vsub.s32 %v4184, 2
        %vm4186 = vcmp.gt.s32.totalorder 0, %v4185
        %v4187 = vsel %vm4186, 0, %v4185
        %v4188 = vsub.s32 32, %v4187
        %v4189 = vshll.u32 %v4180, %v4187
        %v4190 = vshrl.u32 %v4172, %v4188
        %v4191 = vor.u32 %v4189, %v4190
        %v4192 = vsub.s32 4294967266, %v4187
        %v4193 = vadd.s32 %v4192, 127
        %v4194 = vshll.u32 %v4193, 23
        %v4195 = vor.u32 4788187, %v4194
        %v4196 = vand.u32 2147483647, %v4195
        %v4198 = vcvt.s32.f32 %v4191
        %v4199 = vmul.f32 %v4198, %v4196
        %v4200 = vxor.u32 %v4199, 2147483648
        %v4201 = vsel %vm4080, %v4200, %v4199
        %v4202 = vsub.s32 4, %v4178
        %v4203 = vsel %vm4080, %v4202, %v4178
        %v4204 = vsel %vm4079, %v196, %v4201
        %v4205 = vsel %vm4079, 0, %v4203
        %v4206 = vmul.f32 %v4204, %v4204
        %v4207 = vmul.f32 %v4206, -0.001358992
        %v4208 = vadd.f32 %v4207, 0.041655596
        %v4209 = vmul.f32 %v4206, %v4208
        %v4210 = vadd.f32 %v4209, -0.4999988
        %v4211 = vmul.f32 %v4206, %v4210
        %v4212 = vadd.f32 1.0, %v4211
        %v4213 = vmul.f32 %v4204, %v4204
        %v4214 = vmul.f32 %v4213, -0.00019511016
        %v4215 = vadd.f32 %v4214, 0.008332121
        %v4216 = vmul.f32 %v4213, %v4215
        %v4217 = vadd.f32 %v4216, -0.16666654
        %v4218 = vmul.f32 %v4213, %v4217
        %v4219 = vadd.f32 %v4218, 1.0
        %v4220 = vmul.f32 %v4219, %v4204
        %vm4221 = vweird.f32 %v196
        %v4222 = vadd.s32 %v4205, 3
        %v4223 = vand.u32 %v4222, 3
        %vm4224 = vcmp.lt.s32.totalorder %v4223, 2
        %vm4225 = vcmp.eq.s32.totalorder %v4223, 0
        %v4226 = vxor.u32 %v4220, 2147483648
        %v4227 = vsel %vm4225, %v4212, %v4226
        %vm4228 = vcmp.eq.s32.totalorder %v4223, 2
        %v4229 = vxor.u32 %v4212, 2147483648
        %v4230 = vsel %vm4228, %v4229, %v4220
        %v4231 = vsel %vm4224, %v4227, %v4230
        %v4232 = vsel %vm4221, nan, %v4231
        %v4233 = vand.u32 2147483647, %v197
        %vm4234 = vcmp.le.f32.partialorder %v4233, 0.7853982
        %vm4235 = vcmp.lt.s32.totalorder %v197, 0
        %v4236 = vand.u32 %v197, 2139095040
        %v4237 = vshrl.u32 %v4236, 23
        %v4238 = vsub.s32 %v4237, 127
        %v4239 = vand.u32 2147483647, %v197
        %v4240 = vand.u32 %v4239, 8388607
        %v4241 = vor.u32 %v4240, 8388608
        %v4242 = vsub.s32 0, %v4241
        %v4243 = vadd.s32 %v4238, 1
        %vm4244 = vcmp.gt.s32.totalorder %v4243, 0
        %v4245 = vsel %vm4244, %v4243, 0
        %v4246 = vshrl.u32 %v4245, 5
        %v4247 = vand.u32 %v4245, 31
        %v4248 = vsub.s32 32, %v4247
        %v4249 = vshrl.u32 683565275, %v4248
        %v4250 = vshll.u32 683565275, %v4247
        %v4251 = vshrl.u32 2475754826, %v4248
        %v4252 = vor.u32 %v4250, %v4251
        %v4253 = vshll.u32 2475754826, %v4247
        %v4254 = vshrl.u32 2131351028, %v4248
        %v4255 = vor.u32 %v4253, %v4254
        %v4256 = vshll.u32 2131351028, %v4247
        %v4257 = vshrl.u32 2102212464, %v4248
        %v4258 = vor.u32 %v4256, %v4257
        %v4259 = vshll.u32 2102212464, %v4247
        %v4260 = vshrl.u32 920167782, %v4248
        %v4261 = vor.u32 %v4259, %v4260
        %v4262 = vshll.u32 920167782, %v4247
        %v4263 = vshrl.u32 1326507024, %v4248
        %v4264 = vor.u32 %v4262, %v4263
        %vm4265 = vcmp.lt.s32.totalorder %v4246, 1
        %vm4266 = vcmp.lt.s32.totalorder %v4246, 2
        %vm4267 = vcmp.lt.s32.totalorder %v4246, 3
        %vm4268 = vcmp.lt.s32.totalorder %v4246, 4
        %v4269 = vsel %vm4265, %v4249, %v4252
        %v4270 = vsel %vm4268, %v4258, 2102212464
        %v4271 = vsel %vm4267, %v4255, %v4270
        %v4272 = vsel %vm4266, %v4269, %v4271
        %v4273 = vsel %vm4265, %v4252, %v4255
        %v4274 = vsel %vm4268, %v4261, 920167782
        %v4275 = vsel %vm4267, %v4258, %v4274
        %v4276 = vsel %vm4266, %v4273, %v4275
        %v4277 = vsel %vm4265, %v4255, %v4258
        %v4278 = vsel %vm4268, %v4264, 1326507024
        %v4279 = vsel %vm4267, %v4261, %v4278
        %v4280 = vsel %vm4266, %v4277, %v4279
        %v4281 = vshll.u32 %v4241, 8
        %v4282 = vand.u32 %v4281, 65535
        %v4283 = vshrl.u32 %v4281, 16
        %v4284 = vand.u32 %v4280, 65535
        %v4285 = vshrl.u32 %v4280, 16
        %v4286 = vmul.u32 %v4282, %v4284
        %v4287 = vmul.u32 %v4282, %v4285
        %v4288 = vmul.u32 %v4283, %v4284
        %v4289 = vmul.u32 %v4283, %v4285
        %v4290 = vshll.u32 %v4287, 16
        %v4291 = vshrl.u32 %v4287, 16
        %v4292 = vshll.u32 %v4288, 16
        %v4293 = vshrl.u32 %v4288, 16
        %vm4294 = vc.u32 %v4286, %v4290
        %v4295 = vsel %vm4294, 1, 0
        %v4296 = vadd.s32 %v4286, %v4290
        %v4297 = vadd.s32 %v4289, %v4295
        %vm4298 = vc.u32 %v4296, %v4292
        %v4299 = vsel %vm4298, 1, 0
        %v4300 = vadd.s32 %v4296, %v4292
        %v4301 = vadd.s32 %v4297, %v4299
        %v4302 = vadd.s32 %v4301, %v4291
        %v4303 = vadd.s32 %v4302, %v4293
        %v4304 = vand.u32 %v4281, 65535
        %v4305 = vshrl.u32 %v4281, 16
        %v4306 = vand.u32 %v4276, 65535
        %v4307 = vshrl.u32 %v4276, 16
        %v4308 = vmul.u32 %v4304, %v4306
        %v4309 = vmul.u32 %v4304, %v4307
        %v4310 = vmul.u32 %v4305, %v4306
        %v4311 = vmul.u32 %v4305, %v4307
        %v4312 = vshll.u32 %v4309, 16
        %v4313 = vshrl.u32 %v4309, 16
        %v4314 = vshll.u32 %v4310, 16
        %v4315 = vshrl.u32 %v4310, 16
        %vm4316 = vc.u32 %v4308, %v4312
        %v4317 = vsel %vm4316, 1, 0
        %v4318 = vadd.s32 %v4308, %v4312
        %v4319 = vadd.s32 %v4311, %v4317
        %vm4320 = vc.u32 %v4318, %v4314
        %v4321 = vsel %vm4320, 1, 0
        %v4322 = vadd.s32 %v4318, %v4314
        %v4323 = vadd.s32 %v4319, %v4321
        %v4324 = vadd.s32 %v4323, %v4313
        %v4325 = vadd.s32 %v4324, %v4315
        %v4326 = vmul.u32 %v4281, %v4272
        %v4327 = vadd.s32 %v4303, %v4322
        %vm4328 = vc.u32 %v4303, %v4322
        %v4329 = vadd.s32 %v4325, 1
        %v4330 = vsel %vm4328, %v4329, %v4325
        %v4331 = vadd.s32 %v4326, %v4330
        %v4332 = vadd.s32 %v4331, 536870912
        %v4333 = vshrl.u32 %v4332, 30
        %v4334 = vshll.u32 %v4333, 30
        %v4335 = vsub.s32 %v4331, %v4334
        %vm4336 = vcmp.lt.s32.totalorder %v4335, 0
        %v4337 = vsub.s32 0, %v4335
        %v4338 = vsel %vm4336, %v4337, %v4335
        %v4339 = vclz %v4338
        %v4340 = vsub.s32 %v4339, 2
        %vm4341 = vcmp.gt.s32.totalorder 0, %v4340
        %v4342 = vsel %vm4341, 0, %v4340
        %v4343 = vsub.s32 32, %v4342
        %v4344 = vshll.u32 %v4335, %v4342
        %v4345 = vshrl.u32 %v4327, %v4343
        %v4346 = vor.u32 %v4344, %v4345
        %v4347 = vsub.s32 4294967266, %v4342
        %v4348 = vadd.s32 %v4347, 127
        %v4349 = vshll.u32 %v4348, 23
        %v4350 = vor.u32 4788187, %v4349
        %v4351 = vand.u32 2147483647, %v4350
        %v4353 = vcvt.s32.f32 %v4346
        %v4354 = vmul.f32 %v4353, %v4351
        %v4355 = vxor.u32 %v4354, 2147483648
        %v4356 = vsel %vm4235, %v4355, %v4354
        %v4357 = vsub.s32 4, %v4333
        %v4358 = vsel %vm4235, %v4357, %v4333
        %v4359 = vsel %vm4234, %v197, %v4356
        %v4360 = vsel %vm4234, 0, %v4358
        %v4361 = vmul.f32 %v4359, %v4359
        %v4362 = vmul.f32 %v4361, -0.001358992
        %v4363 = vadd.f32 %v4362, 0.041655596
        %v4364 = vmul.f32 %v4361, %v4363
        %v4365 = vadd.f32 %v4364, -0.4999988
        %v4366 = vmul.f32 %v4361, %v4365
        %v4367 = vadd.f32 1.0, %v4366
        %v4368 = vmul.f32 %v4359, %v4359
        %v4369 = vmul.f32 %v4368, -0.00019511016
        %v4370 = vadd.f32 %v4369, 0.008332121
        %v4371 = vmul.f32 %v4368, %v4370
        %v4372 = vadd.f32 %v4371, -0.16666654
        %v4373 = vmul.f32 %v4368, %v4372
        %v4374 = vadd.f32 %v4373, 1.0
        %v4375 = vmul.f32 %v4374, %v4359
        %vm4376 = vweird.f32 %v197
        %v4377 = vadd.s32 %v4360, 3
        %v4378 = vand.u32 %v4377, 3
        %vm4379 = vcmp.lt.s32.totalorder %v4378, 2
        %vm4380 = vcmp.eq.s32.totalorder %v4378, 0
        %v4381 = vxor.u32 %v4375, 2147483648
        %v4382 = vsel %vm4380, %v4367, %v4381
        %vm4383 = vcmp.eq.s32.totalorder %v4378, 2
        %v4384 = vxor.u32 %v4367, 2147483648
        %v4385 = vsel %vm4383, %v4384, %v4375
        %v4386 = vsel %vm4379, %v4382, %v4385
        %v4387 = vsel %vm4376, nan, %v4386
        %v4388 = vand.u32 2147483647, %v198
        %vm4389 = vcmp.le.f32.partialorder %v4388, 0.7853982
        %vm4390 = vcmp.lt.s32.totalorder %v198, 0
        %v4391 = vand.u32 %v198, 2139095040
        %v4392 = vshrl.u32 %v4391, 23
        %v4393 = vsub.s32 %v4392, 127
        %v4394 = vand.u32 2147483647, %v198
        %v4395 = vand.u32 %v4394, 8388607
        %v4396 = vor.u32 %v4395, 8388608
        %v4397 = vsub.s32 0, %v4396
        %v4398 = vadd.s32 %v4393, 1
        %vm4399 = vcmp.gt.s32.totalorder %v4398, 0
        %v4400 = vsel %vm4399, %v4398, 0
        %v4401 = vshrl.u32 %v4400, 5
        %v4402 = vand.u32 %v4400, 31
        %v4403 = vsub.s32 32, %v4402
        %v4404 = vshrl.u32 683565275, %v4403
        %v4405 = vshll.u32 683565275, %v4402
        %v4406 = vshrl.u32 2475754826, %v4403
        %v4407 = vor.u32 %v4405, %v4406
        %v4408 = vshll.u32 2475754826, %v4402
        %v4409 = vshrl.u32 2131351028, %v4403
        %v4410 = vor.u32 %v4408, %v4409
        %v4411 = vshll.u32 2131351028, %v4402
        %v4412 = vshrl.u32 2102212464, %v4403
        %v4413 = vor.u32 %v4411, %v4412
        %v4414 = vshll.u32 2102212464, %v4402
        %v4415 = vshrl.u32 920167782, %v4403
        %v4416 = vor.u32 %v4414, %v4415
        %v4417 = vshll.u32 920167782, %v4402
        %v4418 = vshrl.u32 1326507024, %v4403
        %v4419 = vor.u32 %v4417, %v4418
        %vm4420 = vcmp.lt.s32.totalorder %v4401, 1
        %vm4421 = vcmp.lt.s32.totalorder %v4401, 2
        %vm4422 = vcmp.lt.s32.totalorder %v4401, 3
        %vm4423 = vcmp.lt.s32.totalorder %v4401, 4
        %v4424 = vsel %vm4420, %v4404, %v4407
        %v4425 = vsel %vm4423, %v4413, 2102212464
        %v4426 = vsel %vm4422, %v4410, %v4425
        %v4427 = vsel %vm4421, %v4424, %v4426
        %v4428 = vsel %vm4420, %v4407, %v4410
        %v4429 = vsel %vm4423, %v4416, 920167782
        %v4430 = vsel %vm4422, %v4413, %v4429
        %v4431 = vsel %vm4421, %v4428, %v4430
        %v4432 = vsel %vm4420, %v4410, %v4413
        %v4433 = vsel %vm4423, %v4419, 1326507024
        %v4434 = vsel %vm4422, %v4416, %v4433
        %v4435 = vsel %vm4421, %v4432, %v4434
        %v4436 = vshll.u32 %v4396, 8
        %v4437 = vand.u32 %v4436, 65535
        %v4438 = vshrl.u32 %v4436, 16
        %v4439 = vand.u32 %v4435, 65535
        %v4440 = vshrl.u32 %v4435, 16
        %v4441 = vmul.u32 %v4437, %v4439
        %v4442 = vmul.u32 %v4437, %v4440
        %v4443 = vmul.u32 %v4438, %v4439
        %v4444 = vmul.u32 %v4438, %v4440
        %v4445 = vshll.u32 %v4442, 16
        %v4446 = vshrl.u32 %v4442, 16
        %v4447 = vshll.u32 %v4443, 16
        %v4448 = vshrl.u32 %v4443, 16
        %vm4449 = vc.u32 %v4441, %v4445
        %v4450 = vsel %vm4449, 1, 0
        %v4451 = vadd.s32 %v4441, %v4445
        %v4452 = vadd.s32 %v4444, %v4450
        %vm4453 = vc.u32 %v4451, %v4447
        %v4454 = vsel %vm4453, 1, 0
        %v4455 = vadd.s32 %v4451, %v4447
        %v4456 = vadd.s32 %v4452, %v4454
        %v4457 = vadd.s32 %v4456, %v4446
        %v4458 = vadd.s32 %v4457, %v4448
        %v4459 = vand.u32 %v4436, 65535
        %v4460 = vshrl.u32 %v4436, 16
        %v4461 = vand.u32 %v4431, 65535
        %v4462 = vshrl.u32 %v4431, 16
        %v4463 = vmul.u32 %v4459, %v4461
        %v4464 = vmul.u32 %v4459, %v4462
        %v4465 = vmul.u32 %v4460, %v4461
        %v4466 = vmul.u32 %v4460, %v4462
        %v4467 = vshll.u32 %v4464, 16
        %v4468 = vshrl.u32 %v4464, 16
        %v4469 = vshll.u32 %v4465, 16
        %v4470 = vshrl.u32 %v4465, 16
        %vm4471 = vc.u32 %v4463, %v4467
        %v4472 = vsel %vm4471, 1, 0
        %v4473 = vadd.s32 %v4463, %v4467
        %v4474 = vadd.s32 %v4466, %v4472
        %vm4475 = vc.u32 %v4473, %v4469
        %v4476 = vsel %vm4475, 1, 0
        %v4477 = vadd.s32 %v4473, %v4469
        %v4478 = vadd.s32 %v4474, %v4476
        %v4479 = vadd.s32 %v4478, %v4468
        %v4480 = vadd.s32 %v4479, %v4470
        %v4481 = vmul.u32 %v4436, %v4427
        %v4482 = vadd.s32 %v4458, %v4477
        %vm4483 = vc.u32 %v4458, %v4477
        %v4484 = vadd.s32 %v4480, 1
        %v4485 = vsel %vm4483, %v4484, %v4480
        %v4486 = vadd.s32 %v4481, %v4485
        %v4487 = vadd.s32 %v4486, 536870912
        %v4488 = vshrl.u32 %v4487, 30
        %v4489 = vshll.u32 %v4488, 30
        %v4490 = vsub.s32 %v4486, %v4489
        %vm4491 = vcmp.lt.s32.totalorder %v4490, 0
        %v4492 = vsub.s32 0, %v4490
        %v4493 = vsel %vm4491, %v4492, %v4490
        %v4494 = vclz %v4493
        %v4495 = vsub.s32 %v4494, 2
        %vm4496 = vcmp.gt.s32.totalorder 0, %v4495
        %v4497 = vsel %vm4496, 0, %v4495
        %v4498 = vsub.s32 32, %v4497
        %v4499 = vshll.u32 %v4490, %v4497
        %v4500 = vshrl.u32 %v4482, %v4498
        %v4501 = vor.u32 %v4499, %v4500
        %v4502 = vsub.s32 4294967266, %v4497
        %v4503 = vadd.s32 %v4502, 127
        %v4504 = vshll.u32 %v4503, 23
        %v4505 = vor.u32 4788187, %v4504
        %v4506 = vand.u32 2147483647, %v4505
        %v4508 = vcvt.s32.f32 %v4501
        %v4509 = vmul.f32 %v4508, %v4506
        %v4510 = vxor.u32 %v4509, 2147483648
        %v4511 = vsel %vm4390, %v4510, %v4509
        %v4512 = vsub.s32 4, %v4488
        %v4513 = vsel %vm4390, %v4512, %v4488
        %v4514 = vsel %vm4389, %v198, %v4511
        %v4515 = vsel %vm4389, 0, %v4513
        %v4516 = vmul.f32 %v4514, %v4514
        %v4517 = vmul.f32 %v4516, -0.001358992
        %v4518 = vadd.f32 %v4517, 0.041655596
        %v4519 = vmul.f32 %v4516, %v4518
        %v4520 = vadd.f32 %v4519, -0.4999988
        %v4521 = vmul.f32 %v4516, %v4520
        %v4522 = vadd.f32 1.0, %v4521
        %v4523 = vmul.f32 %v4514, %v4514
        %v4524 = vmul.f32 %v4523, -0.00019511016
        %v4525 = vadd.f32 %v4524, 0.008332121
        %v4526 = vmul.f32 %v4523, %v4525
        %v4527 = vadd.f32 %v4526, -0.16666654
        %v4528 = vmul.f32 %v4523, %v4527
        %v4529 = vadd.f32 %v4528, 1.0
        %v4530 = vmul.f32 %v4529, %v4514
        %vm4531 = vweird.f32 %v198
        %v4532 = vadd.s32 %v4515, 3
        %v4533 = vand.u32 %v4532, 3
        %vm4534 = vcmp.lt.s32.totalorder %v4533, 2
        %vm4535 = vcmp.eq.s32.totalorder %v4533, 0
        %v4536 = vxor.u32 %v4530, 2147483648
        %v4537 = vsel %vm4535, %v4522, %v4536
        %vm4538 = vcmp.eq.s32.totalorder %v4533, 2
        %v4539 = vxor.u32 %v4522, 2147483648
        %v4540 = vsel %vm4538, %v4539, %v4530
        %v4541 = vsel %vm4534, %v4537, %v4540
        %v4542 = vsel %vm4531, nan, %v4541
        %v4543 = vand.u32 2147483647, %v199
        %vm4544 = vcmp.le.f32.partialorder %v4543, 0.7853982
        %vm4545 = vcmp.lt.s32.totalorder %v199, 0
        %v4546 = vand.u32 %v199, 2139095040
        %v4547 = vshrl.u32 %v4546, 23
        %v4548 = vsub.s32 %v4547, 127
        %v4549 = vand.u32 2147483647, %v199
        %v4550 = vand.u32 %v4549, 8388607
        %v4551 = vor.u32 %v4550, 8388608
        %v4552 = vsub.s32 0, %v4551
        %v4553 = vadd.s32 %v4548, 1
        %vm4554 = vcmp.gt.s32.totalorder %v4553, 0
        %v4555 = vsel %vm4554, %v4553, 0
        %v4556 = vshrl.u32 %v4555, 5
        %v4557 = vand.u32 %v4555, 31
        %v4558 = vsub.s32 32, %v4557
        %v4559 = vshrl.u32 683565275, %v4558
        %v4560 = vshll.u32 683565275, %v4557
        %v4561 = vshrl.u32 2475754826, %v4558
        %v4562 = vor.u32 %v4560, %v4561
        %v4563 = vshll.u32 2475754826, %v4557
        %v4564 = vshrl.u32 2131351028, %v4558
        %v4565 = vor.u32 %v4563, %v4564
        %v4566 = vshll.u32 2131351028, %v4557
        %v4567 = vshrl.u32 2102212464, %v4558
        %v4568 = vor.u32 %v4566, %v4567
        %v4569 = vshll.u32 2102212464, %v4557
        %v4570 = vshrl.u32 920167782, %v4558
        %v4571 = vor.u32 %v4569, %v4570
        %v4572 = vshll.u32 920167782, %v4557
        %v4573 = vshrl.u32 1326507024, %v4558
        %v4574 = vor.u32 %v4572, %v4573
        %vm4575 = vcmp.lt.s32.totalorder %v4556, 1
        %vm4576 = vcmp.lt.s32.totalorder %v4556, 2
        %vm4577 = vcmp.lt.s32.totalorder %v4556, 3
        %vm4578 = vcmp.lt.s32.totalorder %v4556, 4
        %v4579 = vsel %vm4575, %v4559, %v4562
        %v4580 = vsel %vm4578, %v4568, 2102212464
        %v4581 = vsel %vm4577, %v4565, %v4580
        %v4582 = vsel %vm4576, %v4579, %v4581
        %v4583 = vsel %vm4575, %v4562, %v4565
        %v4584 = vsel %vm4578, %v4571, 920167782
        %v4585 = vsel %vm4577, %v4568, %v4584
        %v4586 = vsel %vm4576, %v4583, %v4585
        %v4587 = vsel %vm4575, %v4565, %v4568
        %v4588 = vsel %vm4578, %v4574, 1326507024
        %v4589 = vsel %vm4577, %v4571, %v4588
        %v4590 = vsel %vm4576, %v4587, %v4589
        %v4591 = vshll.u32 %v4551, 8
        %v4592 = vand.u32 %v4591, 65535
        %v4593 = vshrl.u32 %v4591, 16
        %v4594 = vand.u32 %v4590, 65535
        %v4595 = vshrl.u32 %v4590, 16
        %v4596 = vmul.u32 %v4592, %v4594
        %v4597 = vmul.u32 %v4592, %v4595
        %v4598 = vmul.u32 %v4593, %v4594
        %v4599 = vmul.u32 %v4593, %v4595
        %v4600 = vshll.u32 %v4597, 16
        %v4601 = vshrl.u32 %v4597, 16
        %v4602 = vshll.u32 %v4598, 16
        %v4603 = vshrl.u32 %v4598, 16
        %vm4604 = vc.u32 %v4596, %v4600
        %v4605 = vsel %vm4604, 1, 0
        %v4606 = vadd.s32 %v4596, %v4600
        %v4607 = vadd.s32 %v4599, %v4605
        %vm4608 = vc.u32 %v4606, %v4602
        %v4609 = vsel %vm4608, 1, 0
        %v4610 = vadd.s32 %v4606, %v4602
        %v4611 = vadd.s32 %v4607, %v4609
        %v4612 = vadd.s32 %v4611, %v4601
        %v4613 = vadd.s32 %v4612, %v4603
        %v4614 = vand.u32 %v4591, 65535
        %v4615 = vshrl.u32 %v4591, 16
        %v4616 = vand.u32 %v4586, 65535
        %v4617 = vshrl.u32 %v4586, 16
        %v4618 = vmul.u32 %v4614, %v4616
        %v4619 = vmul.u32 %v4614, %v4617
        %v4620 = vmul.u32 %v4615, %v4616
        %v4621 = vmul.u32 %v4615, %v4617
        %v4622 = vshll.u32 %v4619, 16
        %v4623 = vshrl.u32 %v4619, 16
        %v4624 = vshll.u32 %v4620, 16
        %v4625 = vshrl.u32 %v4620, 16
        %vm4626 = vc.u32 %v4618, %v4622
        %v4627 = vsel %vm4626, 1, 0
        %v4628 = vadd.s32 %v4618, %v4622
        %v4629 = vadd.s32 %v4621, %v4627
        %vm4630 = vc.u32 %v4628, %v4624
        %v4631 = vsel %vm4630, 1, 0
        %v4632 = vadd.s32 %v4628, %v4624
        %v4633 = vadd.s32 %v4629, %v4631
        %v4634 = vadd.s32 %v4633, %v4623
        %v4635 = vadd.s32 %v4634, %v4625
        %v4636 = vmul.u32 %v4591, %v4582
        %v4637 = vadd.s32 %v4613, %v4632
        %vm4638 = vc.u32 %v4613, %v4632
        %v4639 = vadd.s32 %v4635, 1
        %v4640 = vsel %vm4638, %v4639, %v4635
        %v4641 = vadd.s32 %v4636, %v4640
        %v4642 = vadd.s32 %v4641, 536870912
        %v4643 = vshrl.u32 %v4642, 30
        %v4644 = vshll.u32 %v4643, 30
        %v4645 = vsub.s32 %v4641, %v4644
        %vm4646 = vcmp.lt.s32.totalorder %v4645, 0
        %v4647 = vsub.s32 0, %v4645
        %v4648 = vsel %vm4646, %v4647, %v4645
        %v4649 = vclz %v4648
        %v4650 = vsub.s32 %v4649, 2
        %vm4651 = vcmp.gt.s32.totalorder 0, %v4650
        %v4652 = vsel %vm4651, 0, %v4650
        %v4653 = vsub.s32 32, %v4652
        %v4654 = vshll.u32 %v4645, %v4652
        %v4655 = vshrl.u32 %v4637, %v4653
        %v4656 = vor.u32 %v4654, %v4655
        %v4657 = vsub.s32 4294967266, %v4652
        %v4658 = vadd.s32 %v4657, 127
        %v4659 = vshll.u32 %v4658, 23
        %v4660 = vor.u32 4788187, %v4659
        %v4661 = vand.u32 2147483647, %v4660
        %v4663 = vcvt.s32.f32 %v4656
        %v4664 = vmul.f32 %v4663, %v4661
        %v4665 = vxor.u32 %v4664, 2147483648
        %v4666 = vsel %vm4545, %v4665, %v4664
        %v4667 = vsub.s32 4, %v4643
        %v4668 = vsel %vm4545, %v4667, %v4643
        %v4669 = vsel %vm4544, %v199, %v4666
        %v4670 = vsel %vm4544, 0, %v4668
        %v4671 = vmul.f32 %v4669, %v4669
        %v4672 = vmul.f32 %v4671, -0.001358992
        %v4673 = vadd.f32 %v4672, 0.041655596
        %v4674 = vmul.f32 %v4671, %v4673
        %v4675 = vadd.f32 %v4674, -0.4999988
        %v4676 = vmul.f32 %v4671, %v4675
        %v4677 = vadd.f32 1.0, %v4676
        %v4678 = vmul.f32 %v4669, %v4669
        %v4679 = vmul.f32 %v4678, -0.00019511016
        %v4680 = vadd.f32 %v4679, 0.008332121
        %v4681 = vmul.f32 %v4678, %v4680
        %v4682 = vadd.f32 %v4681, -0.16666654
        %v4683 = vmul.f32 %v4678, %v4682
        %v4684 = vadd.f32 %v4683, 1.0
        %v4685 = vmul.f32 %v4684, %v4669
        %vm4686 = vweird.f32 %v199
        %v4687 = vadd.s32 %v4670, 3
        %v4688 = vand.u32 %v4687, 3
        %vm4689 = vcmp.lt.s32.totalorder %v4688, 2
        %vm4690 = vcmp.eq.s32.totalorder %v4688, 0
        %v4691 = vxor.u32 %v4685, 2147483648
        %v4692 = vsel %vm4690, %v4677, %v4691
        %vm4693 = vcmp.eq.s32.totalorder %v4688, 2
        %v4694 = vxor.u32 %v4677, 2147483648
        %v4695 = vsel %vm4693, %v4694, %v4685
        %v4696 = vsel %vm4689, %v4692, %v4695
        %v4697 = vsel %vm4686, nan, %v4696
        %v4698 = vand.u32 2147483647, %v200
        %vm4699 = vcmp.le.f32.partialorder %v4698, 0.7853982
        %vm4700 = vcmp.lt.s32.totalorder %v200, 0
        %v4701 = vand.u32 %v200, 2139095040
        %v4702 = vshrl.u32 %v4701, 23
        %v4703 = vsub.s32 %v4702, 127
        %v4704 = vand.u32 2147483647, %v200
        %v4705 = vand.u32 %v4704, 8388607
        %v4706 = vor.u32 %v4705, 8388608
        %v4707 = vsub.s32 0, %v4706
        %v4708 = vadd.s32 %v4703, 1
        %vm4709 = vcmp.gt.s32.totalorder %v4708, 0
        %v4710 = vsel %vm4709, %v4708, 0
        %v4711 = vshrl.u32 %v4710, 5
        %v4712 = vand.u32 %v4710, 31
        %v4713 = vsub.s32 32, %v4712
        %v4714 = vshrl.u32 683565275, %v4713
        %v4715 = vshll.u32 683565275, %v4712
        %v4716 = vshrl.u32 2475754826, %v4713
        %v4717 = vor.u32 %v4715, %v4716
        %v4718 = vshll.u32 2475754826, %v4712
        %v4719 = vshrl.u32 2131351028, %v4713
        %v4720 = vor.u32 %v4718, %v4719
        %v4721 = vshll.u32 2131351028, %v4712
        %v4722 = vshrl.u32 2102212464, %v4713
        %v4723 = vor.u32 %v4721, %v4722
        %v4724 = vshll.u32 2102212464, %v4712
        %v4725 = vshrl.u32 920167782, %v4713
        %v4726 = vor.u32 %v4724, %v4725
        %v4727 = vshll.u32 920167782, %v4712
        %v4728 = vshrl.u32 1326507024, %v4713
        %v4729 = vor.u32 %v4727, %v4728
        %vm4730 = vcmp.lt.s32.totalorder %v4711, 1
        %vm4731 = vcmp.lt.s32.totalorder %v4711, 2
        %vm4732 = vcmp.lt.s32.totalorder %v4711, 3
        %vm4733 = vcmp.lt.s32.totalorder %v4711, 4
        %v4734 = vsel %vm4730, %v4714, %v4717
        %v4735 = vsel %vm4733, %v4723, 2102212464
        %v4736 = vsel %vm4732, %v4720, %v4735
        %v4737 = vsel %vm4731, %v4734, %v4736
        %v4738 = vsel %vm4730, %v4717, %v4720
        %v4739 = vsel %vm4733, %v4726, 920167782
        %v4740 = vsel %vm4732, %v4723, %v4739
        %v4741 = vsel %vm4731, %v4738, %v4740
        %v4742 = vsel %vm4730, %v4720, %v4723
        %v4743 = vsel %vm4733, %v4729, 1326507024
        %v4744 = vsel %vm4732, %v4726, %v4743
        %v4745 = vsel %vm4731, %v4742, %v4744
        %v4746 = vshll.u32 %v4706, 8
        %v4747 = vand.u32 %v4746, 65535
        %v4748 = vshrl.u32 %v4746, 16
        %v4749 = vand.u32 %v4745, 65535
        %v4750 = vshrl.u32 %v4745, 16
        %v4751 = vmul.u32 %v4747, %v4749
        %v4752 = vmul.u32 %v4747, %v4750
        %v4753 = vmul.u32 %v4748, %v4749
        %v4754 = vmul.u32 %v4748, %v4750
        %v4755 = vshll.u32 %v4752, 16
        %v4756 = vshrl.u32 %v4752, 16
        %v4757 = vshll.u32 %v4753, 16
        %v4758 = vshrl.u32 %v4753, 16
        %vm4759 = vc.u32 %v4751, %v4755
        %v4760 = vsel %vm4759, 1, 0
        %v4761 = vadd.s32 %v4751, %v4755
        %v4762 = vadd.s32 %v4754, %v4760
        %vm4763 = vc.u32 %v4761, %v4757
        %v4764 = vsel %vm4763, 1, 0
        %v4765 = vadd.s32 %v4761, %v4757
        %v4766 = vadd.s32 %v4762, %v4764
        %v4767 = vadd.s32 %v4766, %v4756
        %v4768 = vadd.s32 %v4767, %v4758
        %v4769 = vand.u32 %v4746, 65535
        %v4770 = vshrl.u32 %v4746, 16
        %v4771 = vand.u32 %v4741, 65535
        %v4772 = vshrl.u32 %v4741, 16
        %v4773 = vmul.u32 %v4769, %v4771
        %v4774 = vmul.u32 %v4769, %v4772
        %v4775 = vmul.u32 %v4770, %v4771
        %v4776 = vmul.u32 %v4770, %v4772
        %v4777 = vshll.u32 %v4774, 16
        %v4778 = vshrl.u32 %v4774, 16
        %v4779 = vshll.u32 %v4775, 16
        %v4780 = vshrl.u32 %v4775, 16
        %vm4781 = vc.u32 %v4773, %v4777
        %v4782 = vsel %vm4781, 1, 0
        %v4783 = vadd.s32 %v4773, %v4777
        %v4784 = vadd.s32 %v4776, %v4782
        %vm4785 = vc.u32 %v4783, %v4779
        %v4786 = vsel %vm4785, 1, 0
        %v4787 = vadd.s32 %v4783, %v4779
        %v4788 = vadd.s32 %v4784, %v4786
        %v4789 = vadd.s32 %v4788, %v4778
        %v4790 = vadd.s32 %v4789, %v4780
        %v4791 = vmul.u32 %v4746, %v4737
        %v4792 = vadd.s32 %v4768, %v4787
        %vm4793 = vc.u32 %v4768, %v4787
        %v4794 = vadd.s32 %v4790, 1
        %v4795 = vsel %vm4793, %v4794, %v4790
        %v4796 = vadd.s32 %v4791, %v4795
        %v4797 = vadd.s32 %v4796, 536870912
        %v4798 = vshrl.u32 %v4797, 30
        %v4799 = vshll.u32 %v4798, 30
        %v4800 = vsub.s32 %v4796, %v4799
        %vm4801 = vcmp.lt.s32.totalorder %v4800, 0
        %v4802 = vsub.s32 0, %v4800
        %v4803 = vsel %vm4801, %v4802, %v4800
        %v4804 = vclz %v4803
        %v4805 = vsub.s32 %v4804, 2
        %vm4806 = vcmp.gt.s32.totalorder 0, %v4805
        %v4807 = vsel %vm4806, 0, %v4805
        %v4808 = vsub.s32 32, %v4807
        %v4809 = vshll.u32 %v4800, %v4807
        %v4810 = vshrl.u32 %v4792, %v4808
        %v4811 = vor.u32 %v4809, %v4810
        %v4812 = vsub.s32 4294967266, %v4807
        %v4813 = vadd.s32 %v4812, 127
        %v4814 = vshll.u32 %v4813, 23
        %v4815 = vor.u32 4788187, %v4814
        %v4816 = vand.u32 2147483647, %v4815
        %v4818 = vcvt.s32.f32 %v4811
        %v4819 = vmul.f32 %v4818, %v4816
        %v4820 = vxor.u32 %v4819, 2147483648
        %v4821 = vsel %vm4700, %v4820, %v4819
        %v4822 = vsub.s32 4, %v4798
        %v4823 = vsel %vm4700, %v4822, %v4798
        %v4824 = vsel %vm4699, %v200, %v4821
        %v4825 = vsel %vm4699, 0, %v4823
        %v4826 = vmul.f32 %v4824, %v4824
        %v4827 = vmul.f32 %v4826, -0.001358992
        %v4828 = vadd.f32 %v4827, 0.041655596
        %v4829 = vmul.f32 %v4826, %v4828
        %v4830 = vadd.f32 %v4829, -0.4999988
        %v4831 = vmul.f32 %v4826, %v4830
        %v4832 = vadd.f32 1.0, %v4831
        %v4833 = vmul.f32 %v4824, %v4824
        %v4834 = vmul.f32 %v4833, -0.00019511016
        %v4835 = vadd.f32 %v4834, 0.008332121
        %v4836 = vmul.f32 %v4833, %v4835
        %v4837 = vadd.f32 %v4836, -0.16666654
        %v4838 = vmul.f32 %v4833, %v4837
        %v4839 = vadd.f32 %v4838, 1.0
        %v4840 = vmul.f32 %v4839, %v4824
        %vm4841 = vweird.f32 %v200
        %v4842 = vadd.s32 %v4825, 3
        %v4843 = vand.u32 %v4842, 3
        %vm4844 = vcmp.lt.s32.totalorder %v4843, 2
        %vm4845 = vcmp.eq.s32.totalorder %v4843, 0
        %v4846 = vxor.u32 %v4840, 2147483648
        %v4847 = vsel %vm4845, %v4832, %v4846
        %vm4848 = vcmp.eq.s32.totalorder %v4843, 2
        %v4849 = vxor.u32 %v4832, 2147483648
        %v4850 = vsel %vm4848, %v4849, %v4840
        %v4851 = vsel %vm4844, %v4847, %v4850
        %v4852 = vsel %vm4841, nan, %v4851
        %v4853 = vand.u32 2147483647, %v201
        %vm4854 = vcmp.le.f32.partialorder %v4853, 0.7853982
        %vm4855 = vcmp.lt.s32.totalorder %v201, 0
        %v4856 = vand.u32 %v201, 2139095040
        %v4857 = vshrl.u32 %v4856, 23
        %v4858 = vsub.s32 %v4857, 127
        %v4859 = vand.u32 2147483647, %v201
        %v4860 = vand.u32 %v4859, 8388607
        %v4861 = vor.u32 %v4860, 8388608
        %v4862 = vsub.s32 0, %v4861
        %v4863 = vadd.s32 %v4858, 1
        %vm4864 = vcmp.gt.s32.totalorder %v4863, 0
        %v4865 = vsel %vm4864, %v4863, 0
        %v4866 = vshrl.u32 %v4865, 5
        %v4867 = vand.u32 %v4865, 31
        %v4868 = vsub.s32 32, %v4867
        %v4869 = vshrl.u32 683565275, %v4868
        %v4870 = vshll.u32 683565275, %v4867
        %v4871 = vshrl.u32 2475754826, %v4868
        %v4872 = vor.u32 %v4870, %v4871
        %v4873 = vshll.u32 2475754826, %v4867
        %v4874 = vshrl.u32 2131351028, %v4868
        %v4875 = vor.u32 %v4873, %v4874
        %v4876 = vshll.u32 2131351028, %v4867
        %v4877 = vshrl.u32 2102212464, %v4868
        %v4878 = vor.u32 %v4876, %v4877
        %v4879 = vshll.u32 2102212464, %v4867
        %v4880 = vshrl.u32 920167782, %v4868
        %v4881 = vor.u32 %v4879, %v4880
        %v4882 = vshll.u32 920167782, %v4867
        %v4883 = vshrl.u32 1326507024, %v4868
        %v4884 = vor.u32 %v4882, %v4883
        %vm4885 = vcmp.lt.s32.totalorder %v4866, 1
        %vm4886 = vcmp.lt.s32.totalorder %v4866, 2
        %vm4887 = vcmp.lt.s32.totalorder %v4866, 3
        %vm4888 = vcmp.lt.s32.totalorder %v4866, 4
        %v4889 = vsel %vm4885, %v4869, %v4872
        %v4890 = vsel %vm4888, %v4878, 2102212464
        %v4891 = vsel %vm4887, %v4875, %v4890
        %v4892 = vsel %vm4886, %v4889, %v4891
        %v4893 = vsel %vm4885, %v4872, %v4875
        %v4894 = vsel %vm4888, %v4881, 920167782
        %v4895 = vsel %vm4887, %v4878, %v4894
        %v4896 = vsel %vm4886, %v4893, %v4895
        %v4897 = vsel %vm4885, %v4875, %v4878
        %v4898 = vsel %vm4888, %v4884, 1326507024
        %v4899 = vsel %vm4887, %v4881, %v4898
        %v4900 = vsel %vm4886, %v4897, %v4899
        %v4901 = vshll.u32 %v4861, 8
        %v4902 = vand.u32 %v4901, 65535
        %v4903 = vshrl.u32 %v4901, 16
        %v4904 = vand.u32 %v4900, 65535
        %v4905 = vshrl.u32 %v4900, 16
        %v4906 = vmul.u32 %v4902, %v4904
        %v4907 = vmul.u32 %v4902, %v4905
        %v4908 = vmul.u32 %v4903, %v4904
        %v4909 = vmul.u32 %v4903, %v4905
        %v4910 = vshll.u32 %v4907, 16
        %v4911 = vshrl.u32 %v4907, 16
        %v4912 = vshll.u32 %v4908, 16
        %v4913 = vshrl.u32 %v4908, 16
        %vm4914 = vc.u32 %v4906, %v4910
        %v4915 = vsel %vm4914, 1, 0
        %v4916 = vadd.s32 %v4906, %v4910
        %v4917 = vadd.s32 %v4909, %v4915
        %vm4918 = vc.u32 %v4916, %v4912
        %v4919 = vsel %vm4918, 1, 0
        %v4920 = vadd.s32 %v4916, %v4912
        %v4921 = vadd.s32 %v4917, %v4919
        %v4922 = vadd.s32 %v4921, %v4911
        %v4923 = vadd.s32 %v4922, %v4913
        %v4924 = vand.u32 %v4901, 65535
        %v4925 = vshrl.u32 %v4901, 16
        %v4926 = vand.u32 %v4896, 65535
        %v4927 = vshrl.u32 %v4896, 16
        %v4928 = vmul.u32 %v4924, %v4926
        %v4929 = vmul.u32 %v4924, %v4927
        %v4930 = vmul.u32 %v4925, %v4926
        %v4931 = vmul.u32 %v4925, %v4927
        %v4932 = vshll.u32 %v4929, 16
        %v4933 = vshrl.u32 %v4929, 16
        %v4934 = vshll.u32 %v4930, 16
        %v4935 = vshrl.u32 %v4930, 16
        %vm4936 = vc.u32 %v4928, %v4932
        %v4937 = vsel %vm4936, 1, 0
        %v4938 = vadd.s32 %v4928, %v4932
        %v4939 = vadd.s32 %v4931, %v4937
        %vm4940 = vc.u32 %v4938, %v4934
        %v4941 = vsel %vm4940, 1, 0
        %v4942 = vadd.s32 %v4938, %v4934
        %v4943 = vadd.s32 %v4939, %v4941
        %v4944 = vadd.s32 %v4943, %v4933
        %v4945 = vadd.s32 %v4944, %v4935
        %v4946 = vmul.u32 %v4901, %v4892
        %v4947 = vadd.s32 %v4923, %v4942
        %vm4948 = vc.u32 %v4923, %v4942
        %v4949 = vadd.s32 %v4945, 1
        %v4950 = vsel %vm4948, %v4949, %v4945
        %v4951 = vadd.s32 %v4946, %v4950
        %v4952 = vadd.s32 %v4951, 536870912
        %v4953 = vshrl.u32 %v4952, 30
        %v4954 = vshll.u32 %v4953, 30
        %v4955 = vsub.s32 %v4951, %v4954
        %vm4956 = vcmp.lt.s32.totalorder %v4955, 0
        %v4957 = vsub.s32 0, %v4955
        %v4958 = vsel %vm4956, %v4957, %v4955
        %v4959 = vclz %v4958
        %v4960 = vsub.s32 %v4959, 2
        %vm4961 = vcmp.gt.s32.totalorder 0, %v4960
        %v4962 = vsel %vm4961, 0, %v4960
        %v4963 = vsub.s32 32, %v4962
        %v4964 = vshll.u32 %v4955, %v4962
        %v4965 = vshrl.u32 %v4947, %v4963
        %v4966 = vor.u32 %v4964, %v4965
        %v4967 = vsub.s32 4294967266, %v4962
        %v4968 = vadd.s32 %v4967, 127
        %v4969 = vshll.u32 %v4968, 23
        %v4970 = vor.u32 4788187, %v4969
        %v4971 = vand.u32 2147483647, %v4970
        %v4973 = vcvt.s32.f32 %v4966
        %v4974 = vmul.f32 %v4973, %v4971
        %v4975 = vxor.u32 %v4974, 2147483648
        %v4976 = vsel %vm4855, %v4975, %v4974
        %v4977 = vsub.s32 4, %v4953
        %v4978 = vsel %vm4855, %v4977, %v4953
        %v4979 = vsel %vm4854, %v201, %v4976
        %v4980 = vsel %vm4854, 0, %v4978
        %v4981 = vmul.f32 %v4979, %v4979
        %v4982 = vmul.f32 %v4981, -0.001358992
        %v4983 = vadd.f32 %v4982, 0.041655596
        %v4984 = vmul.f32 %v4981, %v4983
        %v4985 = vadd.f32 %v4984, -0.4999988
        %v4986 = vmul.f32 %v4981, %v4985
        %v4987 = vadd.f32 1.0, %v4986
        %v4988 = vmul.f32 %v4979, %v4979
        %v4989 = vmul.f32 %v4988, -0.00019511016
        %v4990 = vadd.f32 %v4989, 0.008332121
        %v4991 = vmul.f32 %v4988, %v4990
        %v4992 = vadd.f32 %v4991, -0.16666654
        %v4993 = vmul.f32 %v4988, %v4992
        %v4994 = vadd.f32 %v4993, 1.0
        %v4995 = vmul.f32 %v4994, %v4979
        %vm4996 = vweird.f32 %v201
        %v4997 = vadd.s32 %v4980, 3
        %v4998 = vand.u32 %v4997, 3
        %vm4999 = vcmp.lt.s32.totalorder %v4998, 2
        %vm5000 = vcmp.eq.s32.totalorder %v4998, 0
        %v5001 = vxor.u32 %v4995, 2147483648
        %v5002 = vsel %vm5000, %v4987, %v5001
        %vm5003 = vcmp.eq.s32.totalorder %v4998, 2
        %v5004 = vxor.u32 %v4987, 2147483648
        %v5005 = vsel %vm5003, %v5004, %v4995
        %v5006 = vsel %vm4999, %v5002, %v5005
        %v5007 = vsel %vm4996, nan, %v5006
        %v5008 = vand.u32 2147483647, %v202
        %vm5009 = vcmp.le.f32.partialorder %v5008, 0.7853982
        %vm5010 = vcmp.lt.s32.totalorder %v202, 0
        %v5011 = vand.u32 %v202, 2139095040
        %v5012 = vshrl.u32 %v5011, 23
        %v5013 = vsub.s32 %v5012, 127
        %v5014 = vand.u32 2147483647, %v202
        %v5015 = vand.u32 %v5014, 8388607
        %v5016 = vor.u32 %v5015, 8388608
        %v5017 = vsub.s32 0, %v5016
        %v5018 = vadd.s32 %v5013, 1
        %vm5019 = vcmp.gt.s32.totalorder %v5018, 0
        %v5020 = vsel %vm5019, %v5018, 0
        %v5021 = vshrl.u32 %v5020, 5
        %v5022 = vand.u32 %v5020, 31
        %v5023 = vsub.s32 32, %v5022
        %v5024 = vshrl.u32 683565275, %v5023
        %v5025 = vshll.u32 683565275, %v5022
        %v5026 = vshrl.u32 2475754826, %v5023
        %v5027 = vor.u32 %v5025, %v5026
        %v5028 = vshll.u32 2475754826, %v5022
        %v5029 = vshrl.u32 2131351028, %v5023
        %v5030 = vor.u32 %v5028, %v5029
        %v5031 = vshll.u32 2131351028, %v5022
        %v5032 = vshrl.u32 2102212464, %v5023
        %v5033 = vor.u32 %v5031, %v5032
        %v5034 = vshll.u32 2102212464, %v5022
        %v5035 = vshrl.u32 920167782, %v5023
        %v5036 = vor.u32 %v5034, %v5035
        %v5037 = vshll.u32 920167782, %v5022
        %v5038 = vshrl.u32 1326507024, %v5023
        %v5039 = vor.u32 %v5037, %v5038
        %vm5040 = vcmp.lt.s32.totalorder %v5021, 1
        %vm5041 = vcmp.lt.s32.totalorder %v5021, 2
        %vm5042 = vcmp.lt.s32.totalorder %v5021, 3
        %vm5043 = vcmp.lt.s32.totalorder %v5021, 4
        %v5044 = vsel %vm5040, %v5024, %v5027
        %v5045 = vsel %vm5043, %v5033, 2102212464
        %v5046 = vsel %vm5042, %v5030, %v5045
        %v5047 = vsel %vm5041, %v5044, %v5046
        %v5048 = vsel %vm5040, %v5027, %v5030
        %v5049 = vsel %vm5043, %v5036, 920167782
        %v5050 = vsel %vm5042, %v5033, %v5049
        %v5051 = vsel %vm5041, %v5048, %v5050
        %v5052 = vsel %vm5040, %v5030, %v5033
        %v5053 = vsel %vm5043, %v5039, 1326507024
        %v5054 = vsel %vm5042, %v5036, %v5053
        %v5055 = vsel %vm5041, %v5052, %v5054
        %v5056 = vshll.u32 %v5016, 8
        %v5057 = vand.u32 %v5056, 65535
        %v5058 = vshrl.u32 %v5056, 16
        %v5059 = vand.u32 %v5055, 65535
        %v5060 = vshrl.u32 %v5055, 16
        %v5061 = vmul.u32 %v5057, %v5059
        %v5062 = vmul.u32 %v5057, %v5060
        %v5063 = vmul.u32 %v5058, %v5059
        %v5064 = vmul.u32 %v5058, %v5060
        %v5065 = vshll.u32 %v5062, 16
        %v5066 = vshrl.u32 %v5062, 16
        %v5067 = vshll.u32 %v5063, 16
        %v5068 = vshrl.u32 %v5063, 16
        %vm5069 = vc.u32 %v5061, %v5065
        %v5070 = vsel %vm5069, 1, 0
        %v5071 = vadd.s32 %v5061, %v5065
        %v5072 = vadd.s32 %v5064, %v5070
        %vm5073 = vc.u32 %v5071, %v5067
        %v5074 = vsel %vm5073, 1, 0
        %v5075 = vadd.s32 %v5071, %v5067
        %v5076 = vadd.s32 %v5072, %v5074
        %v5077 = vadd.s32 %v5076, %v5066
        %v5078 = vadd.s32 %v5077, %v5068
        %v5079 = vand.u32 %v5056, 65535
        %v5080 = vshrl.u32 %v5056, 16
        %v5081 = vand.u32 %v5051, 65535
        %v5082 = vshrl.u32 %v5051, 16
        %v5083 = vmul.u32 %v5079, %v5081
        %v5084 = vmul.u32 %v5079, %v5082
        %v5085 = vmul.u32 %v5080, %v5081
        %v5086 = vmul.u32 %v5080, %v5082
        %v5087 = vshll.u32 %v5084, 16
        %v5088 = vshrl.u32 %v5084, 16
        %v5089 = vshll.u32 %v5085, 16
        %v5090 = vshrl.u32 %v5085, 16
        %vm5091 = vc.u32 %v5083, %v5087
        %v5092 = vsel %vm5091, 1, 0
        %v5093 = vadd.s32 %v5083, %v5087
        %v5094 = vadd.s32 %v5086, %v5092
        %vm5095 = vc.u32 %v5093, %v5089
        %v5096 = vsel %vm5095, 1, 0
        %v5097 = vadd.s32 %v5093, %v5089
        %v5098 = vadd.s32 %v5094, %v5096
        %v5099 = vadd.s32 %v5098, %v5088
        %v5100 = vadd.s32 %v5099, %v5090
        %v5101 = vmul.u32 %v5056, %v5047
        %v5102 = vadd.s32 %v5078, %v5097
        %vm5103 = vc.u32 %v5078, %v5097
        %v5104 = vadd.s32 %v5100, 1
        %v5105 = vsel %vm5103, %v5104, %v5100
        %v5106 = vadd.s32 %v5101, %v5105
        %v5107 = vadd.s32 %v5106, 536870912
        %v5108 = vshrl.u32 %v5107, 30
        %v5109 = vshll.u32 %v5108, 30
        %v5110 = vsub.s32 %v5106, %v5109
        %vm5111 = vcmp.lt.s32.totalorder %v5110, 0
        %v5112 = vsub.s32 0, %v5110
        %v5113 = vsel %vm5111, %v5112, %v5110
        %v5114 = vclz %v5113
        %v5115 = vsub.s32 %v5114, 2
        %vm5116 = vcmp.gt.s32.totalorder 0, %v5115
        %v5117 = vsel %vm5116, 0, %v5115
        %v5118 = vsub.s32 32, %v5117
        %v5119 = vshll.u32 %v5110, %v5117
        %v5120 = vshrl.u32 %v5102, %v5118
        %v5121 = vor.u32 %v5119, %v5120
        %v5122 = vsub.s32 4294967266, %v5117
        %v5123 = vadd.s32 %v5122, 127
        %v5124 = vshll.u32 %v5123, 23
        %v5125 = vor.u32 4788187, %v5124
        %v5126 = vand.u32 2147483647, %v5125
        %v5128 = vcvt.s32.f32 %v5121
        %v5129 = vmul.f32 %v5128, %v5126
        %v5130 = vxor.u32 %v5129, 2147483648
        %v5131 = vsel %vm5010, %v5130, %v5129
        %v5132 = vsub.s32 4, %v5108
        %v5133 = vsel %vm5010, %v5132, %v5108
        %v5134 = vsel %vm5009, %v202, %v5131
        %v5135 = vsel %vm5009, 0, %v5133
        %v5136 = vmul.f32 %v5134, %v5134
        %v5137 = vmul.f32 %v5136, -0.001358992
        %v5138 = vadd.f32 %v5137, 0.041655596
        %v5139 = vmul.f32 %v5136, %v5138
        %v5140 = vadd.f32 %v5139, -0.4999988
        %v5141 = vmul.f32 %v5136, %v5140
        %v5142 = vadd.f32 1.0, %v5141
        %v5143 = vmul.f32 %v5134, %v5134
        %v5144 = vmul.f32 %v5143, -0.00019511016
        %v5145 = vadd.f32 %v5144, 0.008332121
        %v5146 = vmul.f32 %v5143, %v5145
        %v5147 = vadd.f32 %v5146, -0.16666654
        %v5148 = vmul.f32 %v5143, %v5147
        %v5149 = vadd.f32 %v5148, 1.0
        %v5150 = vmul.f32 %v5149, %v5134
        %vm5151 = vweird.f32 %v202
        %v5152 = vadd.s32 %v5135, 3
        %v5153 = vand.u32 %v5152, 3
        %vm5154 = vcmp.lt.s32.totalorder %v5153, 2
        %vm5155 = vcmp.eq.s32.totalorder %v5153, 0
        %v5156 = vxor.u32 %v5150, 2147483648
        %v5157 = vsel %vm5155, %v5142, %v5156
        %vm5158 = vcmp.eq.s32.totalorder %v5153, 2
        %v5159 = vxor.u32 %v5142, 2147483648
        %v5160 = vsel %vm5158, %v5159, %v5150
        %v5161 = vsel %vm5154, %v5157, %v5160
        %v5162 = vsel %vm5151, nan, %v5161
        %5163 = vst [vmem:[%s136] sm:$0xff] %v357
        %5164 = vst [vmem:[%s136 + $0x8] sm:$0xff] %v512
        %5165 = vst [vmem:[%s136 + $0x10] sm:$0xff] %v667
        %5166 = vst [vmem:[%s136 + $0x18] sm:$0xff] %v822
        %5167 = vst [vmem:[%s136 + $0x20] sm:$0xff] %v977
        %5168 = vst [vmem:[%s136 + $0x28] sm:$0xff] %v1132
        %5169 = vst [vmem:[%s136 + $0x30] sm:$0xff] %v1287
        %5170 = vst [vmem:[%s136 + $0x38] sm:$0xff] %v1442
        %5171 = vst [vmem:[%s136 + $0x40] sm:$0xff] %v1597
        %5172 = vst [vmem:[%s136 + $0x48] sm:$0xff] %v1752
        %5173 = vst [vmem:[%s136 + $0x50] sm:$0xff] %v1907
        %5174 = vst [vmem:[%s136 + $0x58] sm:$0xff] %v2062
        %5175 = vst [vmem:[%s136 + $0x60] sm:$0xff] %v2217
        %5176 = vst [vmem:[%s136 + $0x68] sm:$0xff] %v2372
        %5177 = vst [vmem:[%s136 + $0x70] sm:$0xff] %v2527
        %5178 = vst [vmem:[%s136 + $0x78] sm:$0xff] %v2682
        %5179 = vst [vmem:[%s136 + $0x80] sm:$0xff] %v2837
        %5180 = vst [vmem:[%s136 + $0x88] sm:$0xff] %v2992
        %5181 = vst [vmem:[%s136 + $0x90] sm:$0xff] %v3147
        %5182 = vst [vmem:[%s136 + $0x98] sm:$0xff] %v3302
        %5183 = vst [vmem:[%s136 + $0xa0] sm:$0xff] %v3457
        %5184 = vst [vmem:[%s136 + $0xa8] sm:$0xff] %v3612
        %5185 = vst [vmem:[%s136 + $0xb0] sm:$0xff] %v3767
        %5186 = vst [vmem:[%s136 + $0xb8] sm:$0xff] %v3922
        %5187 = vst [vmem:[%s136 + $0xc0] sm:$0xff] %v4077
        %5188 = vst [vmem:[%s136 + $0xc8] sm:$0xff] %v4232
        %5189 = vst [vmem:[%s136 + $0xd0] sm:$0xff] %v4387
        %5190 = vst [vmem:[%s136 + $0xd8] sm:$0xff] %v4542
        %5191 = vst [vmem:[%s136 + $0xe0] sm:$0xff] %v4697
        %5192 = vst [vmem:[%s136 + $0xe8] sm:$0xff] %v4852
        %5193 = vst [vmem:[%s136 + $0xf0] sm:$0xff] %v5007
        %5194 = vst [vmem:[%s136 + $0xf8] sm:$0xff] %v5162
        %s5195 = sand.u32 %s52, 1
        %s5196 = scalar_lea.sflag [#allocation4], %s5195
        %s5197 = sand.u32 %s52, 1
        %s5198 = smul.addr %s5197, 256
        %s5199 = scalar_lea.vmem [#allocation5], %s5198
        // Predicated region
        $region29: #{tpu_custom_call.1} parent=23 // pred_check
          %p5200 = pneg %p62
        $region30: #{tpu_custom_call.1} parent=23 // pred_check_branch
          %5202 = sbr.rel (%p5200) target = $region32
        $region31: #{tpu_custom_call.1} parent=23 // pred_region
          %s5203 = smul.u32 32, %s18
          %5205 = vsyncadd %s5196, 0
          %s5206 = smul.addr %s5203, 8
          %s5207 = scalar_lea.hbm %s1, %s5206
          %s5208 = sshll.u32 %s5199, 4
          %s5209 = int_to_ptr.vmem [resolvable:$true] %s5208
          %s5210 = sshll.u32 %s5207, 4
          %s5211 = int_to_ptr.hbm [resolvable:$true] %s5210
          %5216 = dma.vmem_to_hbm [thread:$0]  %s5209, 4096, %s5211, %s5196, 128, 128, 8
        $region32: #{tpu_custom_call.1} parent=23 // pred_fallthru
          _
      $region24: #{tpu_custom_call.1} parent=5 // pred_fallthru
        _
      %p5217 = scmp.le.s32.totalorder 2, %s13
      // Predicated region
      $region33: #{tpu_custom_call.1} parent=5 // pred_check
        %p5218 = pneg %p5217
      $region34: #{tpu_custom_call.1} parent=5 // pred_check_branch
        %5220 = sbr.rel (%p5218) target = $region36
      $region35: #{tpu_custom_call.1} parent=5 // pred_region
        %s5221 = ssub.s32 %s13, 2
        // Predicated region
        $region37: #{tpu_custom_call.1} parent=35 // pred_check
          %p5222 = pneg %p68
        $region38: #{tpu_custom_call.1} parent=35 // pred_check_branch
          %5224 = sbr.rel (%p5222) target = $region40
        $region39: #{tpu_custom_call.1} parent=35 // pred_region
          %s5225 = sand.u32 %s53, 1
          %s5226 = scalar_lea.sflag [#allocation4], %s5225
          %s5227 = sand.u32 %s53, 1
          %s5228 = smul.addr %s5227, 256
          %s5229 = scalar_lea.vmem [#allocation5], %s5228
          %5231 = dma.done %s5226, 4096
        $region40: #{tpu_custom_call.1} parent=35 // pred_fallthru
          _
      $region36: #{tpu_custom_call.1} parent=5 // pred_fallthru
        _
    $region6: #{tpu_custom_call.1} parent=1 // loop_footer
      %s17 = sadd.s32 1, %s13
    $region7: #{tpu_custom_call.1} parent=1 // loop_footer_branch
      %12 = sbr.rel target = $region3
    $region8: #{tpu_custom_call.1} parent=1 // loop_exit
      _
    %5232 = vsyncpa [#allocation3], 1
    %s5233 = scalar_lea.sflag [#allocation3], 1
    %5234 = vsyncpa %s5233, 1
    %5235 = vsyncpa [#allocation4], 1
    %s5236 = scalar_lea.sflag [#allocation4], 1
    %5237 = vsyncpa %s5236, 1

</llo_original>
